<compile_context>
chip_gen: v5e
topology: v5e:2x2
jax: 0.10.0
libtpu: 0.0.40
codegen_flags: <defaults>
</compile_context>

<pallas_src>
import functools

import jax
import jax.numpy as jnp
import numpy as np
from jax.experimental import pallas as pl
from jax.experimental.pallas import tpu as pltpu


# ---------------------------------------------------------------------------
# Fused Pallas kernel: conv1 -> ReLU -> conv2 -> ReLU -> conv3 -> Q head
# ---------------------------------------------------------------------------
def _critic_fused_kernel(xb_ref, act_ref,
                         s1_ref, w1b_ref, b1_ref,
                         s2_ref, w2t_ref, b2_ref,
                         s3_ref, w3t_ref, b3_ref,
                         sq_ref, wq1f_ref, wq1a_ref, bq1_ref,
                         wq2_ref, bq2_ref,
                         wq3_ref, bq3_ref,
                         out_ref, *, feat_identity):
    f32 = jnp.float32

    # ---- conv1 (k=8, s=4): 2x2 block-taps on the 4x4 space-to-depth input.
    #      contribution_b = S1[b] @ (xb @ W1[b])  -- pure 2-D GEMMs.
    xb = xb_ref[...]                                               # (N*9*9, 256)
    h1 = None
    for b in range(s1_ref.shape[0]):                               # 4 block-taps
        y = jnp.dot(xb, w1b_ref[b], preferred_element_type=f32)    # (R1, 32)
        y = jnp.dot(s1_ref[b], y, preferred_element_type=f32)      # (M1, 32)
        h1 = y if h1 is None else h1 + y
    h1 = jnp.maximum(h1 + b1_ref[...], 0.0)                        # (N*8*8, 32)

    # ---- conv2 (k=4, s=2): 16 taps, each (row-select) @ (tap weight).
    h2 = None
    for t in range(s2_ref.shape[0]):                               # 16 taps
        g = jnp.dot(s2_ref[t], h1, preferred_element_type=f32)     # (M2, 32)
        y = jnp.dot(g, w2t_ref[t], preferred_element_type=f32)     # (M2, 64)
        h2 = y if h2 is None else h2 + y
    h2 = jnp.maximum(h2 + b2_ref[...], 0.0)                        # (N*3*3, 64)

    # ---- conv3 (k=3, s=1): 9 taps, NO ReLU (matches the torch body).
    h3 = None
    for t in range(s3_ref.shape[0]):                               # 9 taps
        g = jnp.dot(s3_ref[t], h2, preferred_element_type=f32)     # (M3, 64)
        y = jnp.dot(g, w3t_ref[t], preferred_element_type=f32)     # (M3, 64)
        h3 = y if h3 is None else h3 + y
    h3 = h3 + b3_ref[...]                                          # (N*Ho3*Wo3, 64)

    # ---- Q head: concat(feat, act) @ Wq1 done as feat@Wf + act@Wa + b.
    z = jnp.dot(act_ref[...], wq1a_ref[...], preferred_element_type=f32)
    if feat_identity:                                              # conv out is 1x1
        z = z + jnp.dot(h3, wq1f_ref[0], preferred_element_type=f32)
    else:                                                          # general spatial
        for o in range(sq_ref.shape[0]):
            g = jnp.dot(sq_ref[o], h3, preferred_element_type=f32)
            z = z + jnp.dot(g, wq1f_ref[o], preferred_element_type=f32)
    z = jnp.maximum(z + bq1_ref[...], 0.0)
    z = jnp.dot(z, wq2_ref[...], preferred_element_type=f32)
    z = jnp.maximum(z + bq2_ref[...], 0.0)
    z = jnp.dot(z, wq3_ref[...], preferred_element_type=f32) + bq3_ref[...]
    out_ref[...] = z.astype(out_ref.dtype)                         # (N, 1)


# ---------------------------------------------------------------------------
# Host-side plumbing
# ---------------------------------------------------------------------------
def _full_spec(shape):
    # Whole-array block (grid = ()), resident in VMEM.
    return pl.BlockSpec(shape, lambda: (0,) * len(shape),
                        memory_space=pltpu.MemorySpace.VMEM)


def _conv_out(x, k, s):
    return (x - k) // s + 1


def _one_hot_conv_select(n, h_in, w_in, h_out, w_out, k, stride):
    """(k*k, n*h_out*w_out, n*h_in*w_in) one-hot row-selection matrices."""
    sel = np.zeros((k * k, n * h_out * w_out, n * h_in * w_in), np.float32)
    for kh in range(k):
        for kw in range(k):
            t = kh * k + kw
            for b in range(n):
                for oh in range(h_out):
                    for ow in range(w_out):
                        r = (b * h_out + oh) * w_out + ow
                        c = (b * h_in + oh * stride + kh) * w_in + ow * stride + kw
                        sel[t, r, c] = 1.0
    return sel


def _build_plan(n, c, h, w):
    """Static (trace-time) shapes + one-hot selection matrices for batch n."""
    assert c == 16, "standart encoder expects 16 input channels"
    ho1, wo1 = _conv_out(h, 8, 4), _conv_out(w, 8, 4)
    ho2, wo2 = _conv_out(ho1, 4, 2), _conv_out(wo1, 4, 2)
    ho3, wo3 = _conv_out(ho2, 3, 1), _conv_out(wo2, 3, 1)
    assert ho3 >= 1 and wo3 >= 1, "input spatially too small for the conv stack"
    hb, wb = ho1 + 1, wo1 + 1                 # 4x4 block-grid actually used
    n_o3 = ho3 * wo3

    s1 = _one_hot_conv_select(n, hb, wb, ho1, wo1, 2, 1)   # conv1 in block space
    s2 = _one_hot_conv_select(n, ho1, wo1, ho2, wo2, 4, 2)
    s3 = _one_hot_conv_select(n, ho2, wo2, ho3, wo3, 3, 1)
    sq = np.zeros((n_o3, n, n * n_o3), np.float32)          # flatten row-select
    for o in range(n_o3):
        for b in range(n):
            sq[o, b, b * n_o3 + o] = 1.0

    return dict(Hc=4 * hb, Wc=4 * wb, n_o3=n_o3,
                S1=jnp.asarray(s1), S2=jnp.asarray(s2),
                S3=jnp.asarray(s3), Sq=jnp.asarray(sq))


def init_raw_params(key, state_dim, action_dim, n_latent_var):
    """Synthetic weights in 'source' layouts.  Mapping from real torch weights:
         Conv2d.weight (Cout,Cin,KH,KW) -> (KH,KW,Cin,Cout) via permute(2,3,1,0)
         Linear.weight (out,in)         -> (in,out) via .T
       q1 feature rows follow torch's NCHW flatten order."""
    c, h, w = state_dim
    ho3 = _conv_out(_conv_out(_conv_out(h, 8, 4), 4, 2), 3, 1)
    wo3 = _conv_out(_conv_out(_conv_out(w, 8, 4), 4, 2), 3, 1)
    body_out = 64 * ho3 * wo3
    keys = jax.random.split(key, 12)
    s = 0.1
    return {
        "c1_w": jax.random.normal(keys[0], (8, 8, 16, 32), jnp.float32) * s,
        "c1_b": jax.random.normal(keys[1], (32,), jnp.float32) * s,
        "c2_w": jax.random.normal(keys[2], (4, 4, 32, 64), jnp.float32) * s,
        "c2_b": jax.random.normal(keys[3], (64,), jnp.float32) * s,
        "c3_w": jax.random.normal(keys[4], (3, 3, 64, 64), jnp.float32) * s,
        "c3_b": jax.random.normal(keys[5], (64,), jnp.float32) * s,
        "q1_w": jax.random.normal(keys[6], (body_out + action_dim, n_latent_var),
                                  jnp.float32) * s,
        "q1_b": jax.random.normal(keys[7], (n_latent_var,), jnp.float32) * s,
        "q2_w": jax.random.normal(keys[8], (n_latent_var, n_latent_var),
                                  jnp.float32) * s,
        "q2_b": jax.random.normal(keys[9], (n_latent_var,), jnp.float32) * s,
        "q3_w": jax.random.normal(keys[10], (n_latent_var, 1), jnp.float32) * s,
        "q3_b": jax.random.normal(keys[11], (1,), jnp.float32) * s,
    }


def pack_params(raw, n_o3):
    """One-time repack into the layouts the fused kernel consumes."""
    # conv1: (8,8,16,32) -> 2x2 blocks of (4*4*16, 32); block index = bi*2+bj,
    # row index = (hb*4+wb)*16 + cin (matches the space-to-depth column order).
    w1 = raw["c1_w"].reshape(2, 4, 2, 4, 16, 32)        # (bi,hb,bj,wb,cin,cout)
    w1b = jnp.transpose(w1, (0, 2, 1, 3, 4, 5)).reshape(4, 256, 32)
    w2t = raw["c2_w"].reshape(16, 32, 64)               # tap = kh*4+kw
    w3t = raw["c3_w"].reshape(9, 64, 64)                # tap = kh*3+kw

    body_out = 64 * n_o3
    wfeat = raw["q1_w"][:body_out]                      # rows: c3*n_o3 + o3 (NCHW flatten)
    wq1f = jnp.transpose(wfeat.reshape(64, n_o3, -1), (1, 0, 2))  # (n_o3, 64, latent)
    wq1a = raw["q1_w"][body_out:]

    return {
        "w1b": w1b, "b1": raw["c1_b"].reshape(1, -1),
        "w2t": w2t, "b2": raw["c2_b"].reshape(1, -1),
        "w3t": w3t, "b3": raw["c3_b"].reshape(1, -1),
        "wq1f": wq1f, "wq1a": wq1a, "bq1": raw["q1_b"].reshape(1, -1),
        "wq2": raw["q2_w"], "bq2": raw["q2_b"].reshape(1, -1),
        "wq3": raw["q3_w"], "bq3": raw["q3_b"].reshape(1, -1),
    }


def critic_forward(params, obs_nchw, act):
    """obs: (N, 16, H, W) float32 NCHW (PyTorch layout), act: (N, action_dim)."""
    obs = obs_nchw.astype(jnp.float32)
    n, c, h, w = obs.shape
    plan = _build_plan(n, c, h, w)
    hc, wc = plan["Hc"], plan["Wc"]
    hb, wb = hc // 4, wc // 4

    # Cheap one-shot layout prep on the raw observation (same byte count as the
    # input, no im2col inflation): NCHW -> NHWC -> 4x4 space-to-depth rows.
    x = jnp.transpose(obs, (0, 2, 3, 1))[:, :hc, :wc, :]
    x = x.reshape(n, hb, 4, wb, 4, c)
    x = jnp.transpose(x, (0, 1, 3, 2, 4, 5))
    xb = x.reshape(n * hb * wb, 16 * c)                         # (N*9*9, 256)

    inputs = (xb, act.astype(jnp.float32),
              plan["S1"], params["w1b"], params["b1"],
              plan["S2"], params["w2t"], params["b2"],
              plan["S3"], params["w3t"], params["b3"],
              plan["Sq"], params["wq1f"], params["wq1a"], params["bq1"],
              params["wq2"], params["bq2"],
              params["wq3"], params["bq3"])

    kernel = functools.partial(_critic_fused_kernel,
                               feat_identity=(plan["n_o3"] == 1))
    return pl.pallas_call(
        kernel,
        out_shape=jax.ShapeDtypeStruct((n, 1), jnp.float32),
        in_specs=[_full_spec(v.shape) for v in inputs],
        out_specs=_full_spec((n, 1)),
    )(*inputs)


def critic_forward_reference(raw, obs_nchw, act):
    """Plain-JAX/XLA reference with identical semantics (verification only)."""
    x = jnp.transpose(obs_nchw.astype(jnp.float32), (0, 2, 3, 1))

    def conv(x, wname, bname, stride):
        y = jax.lax.conv_general_dilated(
            x, raw[wname], (stride, stride), "VALID",
            dimension_numbers=("NHWC", "HWIO", "NHWC"))
        return y + raw[bname].reshape(1, 1, 1, -1)

    x = jax.nn.relu(conv(x, "c1_w", "c1_b", 4))
    x = jax.nn.relu(conv(x, "c2_w", "c2_b", 2))
    x = conv(x, "c3_w", "c3_b", 1)
    n = x.shape[0]
    feat = jnp.transpose(x, (0, 3, 1, 2)).reshape(n, -1)   # torch NCHW flatten
    h = jnp.concatenate([feat, act.astype(jnp.float32)], axis=-1)
    h = jax.nn.relu(h @ raw["q1_w"] + raw["q1_b"])
    h = jax.nn.relu(h @ raw["q2_w"] + raw["q2_b"])
    return h @ raw["q3_w"] + raw["q3_b"]


# ---------------------------------------------------------------------------
if __name__ == "__main__":
    key = jax.random.PRNGKey(0)
    k_params, k_obs, k_act = jax.random.split(key, 3)

    # Smallest spatial size the conv stack accepts: 36x36 -> conv body out 1x1x64.
    state_dim = (16, 36, 36)
    action_dim = 4
    n_latent_var = 32
    batch = 2

    raw = init_raw_params(k_params, state_dim, action_dim, n_latent_var)
    n_o3 = (_conv_out(_conv_out(_conv_out(state_dim[1], 8, 4), 4, 2), 3, 1)
            * _conv_out(_conv_out(_conv_out(state_dim[2], 8, 4), 4, 2), 3, 1))
    params = pack_params(raw, n_o3)

    obs = jax.random.normal(k_obs, (batch,) + state_dim, jnp.float32)
    act = jax.random.normal(k_act, (batch, action_dim), jnp.float32)

    value = jax.block_until_ready(jax.jit(critic_forward)(params, obs, act))
    assert value.shape == (batch, 1), value.shape
    assert value.dtype == jnp.float32

    # Verify the fused kernel against a plain-XLA reference of the same module.
    ref = jax.block_until_ready(jax.jit(critic_forward_reference)(raw, obs, act))
    np.testing.assert_allclose(np.asarray(value), np.asarray(ref),
                               rtol=3e-2, atol=3e-2)

    print("KERNEL_OK")
</pallas_src>

<mosaic_0001>
module attributes {stable_mosaic.version = 11 : i64} {
  func.func @_critic_fused_kernel(%arg0: memref<162x256xf32, #tpu.memory_space<vmem>>, %arg1: memref<2x4xf32, #tpu.memory_space<vmem>>, %arg2: memref<4x128x162xf32, #tpu.memory_space<vmem>>, %arg3: memref<4x256x32xf32, #tpu.memory_space<vmem>>, %arg4: memref<1x32xf32, #tpu.memory_space<vmem>>, %arg5: memref<16x18x128xf32, #tpu.memory_space<vmem>>, %arg6: memref<16x32x64xf32, #tpu.memory_space<vmem>>, %arg7: memref<1x64xf32, #tpu.memory_space<vmem>>, %arg8: memref<9x2x18xf32, #tpu.memory_space<vmem>>, %arg9: memref<9x64x64xf32, #tpu.memory_space<vmem>>, %arg10: memref<1x64xf32, #tpu.memory_space<vmem>>, %arg11: memref<1x2x2xf32, #tpu.memory_space<vmem>>, %arg12: memref<1x64x32xf32, #tpu.memory_space<vmem>>, %arg13: memref<4x32xf32, #tpu.memory_space<vmem>>, %arg14: memref<1x32xf32, #tpu.memory_space<vmem>>, %arg15: memref<32x32xf32, #tpu.memory_space<vmem>>, %arg16: memref<1x32xf32, #tpu.memory_space<vmem>>, %arg17: memref<32x1xf32, #tpu.memory_space<vmem>>, %arg18: memref<1x1xf32, #tpu.memory_space<vmem>>, %arg19: memref<2x1xf32, #tpu.memory_space<vmem>>) attributes {dimension_semantics = [], scalar_prefetch = 0 : i64, scratch_operands = 0 : i64, tpu.core_type = #tpu.core_type<tc>} {
    %c0 = arith.constant 0 : index
    %c0_0 = arith.constant 0 : index
    %0 = vector.load %arg0[%c0, %c0_0] : memref<162x256xf32, #tpu.memory_space<vmem>>, vector<162x256xf32>
    %c0_1 = arith.constant 0 : index
    %c0_2 = arith.constant 0 : index
    %c0_3 = arith.constant 0 : index
    %1 = vector.load %arg3[%c0_1, %c0_2, %c0_3] : memref<4x256x32xf32, #tpu.memory_space<vmem>>, vector<1x256x32xf32>
    %2 = vector.shape_cast %1 : vector<1x256x32xf32> to vector<256x32xf32>
    %cst = arith.constant dense<0.000000e+00> : vector<162x32xf32>
    %3 = tpu.matmul %0, %2, %cst {dimension_numbers = #tpu.dot_dimension_numbers<[1], [0], [0], [1], [0, 0, 1, 1], [], []>} : vector<162x256xf32>, vector<256x32xf32>, vector<162x32xf32> -> vector<162x32xf32>
    %c0_4 = arith.constant 0 : index
    %c0_5 = arith.constant 0 : index
    %c0_6 = arith.constant 0 : index
    %4 = vector.load %arg2[%c0_4, %c0_5, %c0_6] : memref<4x128x162xf32, #tpu.memory_space<vmem>>, vector<1x128x162xf32>
    %5 = vector.shape_cast %4 : vector<1x128x162xf32> to vector<128x162xf32>
    %cst_7 = arith.constant dense<0.000000e+00> : vector<128x32xf32>
    %6 = tpu.matmul %5, %3, %cst_7 {dimension_numbers = #tpu.dot_dimension_numbers<[1], [0], [0], [1], [0, 0, 1, 1], [], []>} : vector<128x162xf32>, vector<162x32xf32>, vector<128x32xf32> -> vector<128x32xf32>
    %c1 = arith.constant 1 : index
    %c0_8 = arith.constant 0 : index
    %c0_9 = arith.constant 0 : index
    %7 = vector.load %arg3[%c1, %c0_8, %c0_9] : memref<4x256x32xf32, #tpu.memory_space<vmem>>, vector<1x256x32xf32>
    %8 = vector.shape_cast %7 : vector<1x256x32xf32> to vector<256x32xf32>
    %cst_10 = arith.constant dense<0.000000e+00> : vector<162x32xf32>
    %9 = tpu.matmul %0, %8, %cst_10 {dimension_numbers = #tpu.dot_dimension_numbers<[1], [0], [0], [1], [0, 0, 1, 1], [], []>} : vector<162x256xf32>, vector<256x32xf32>, vector<162x32xf32> -> vector<162x32xf32>
    %c1_11 = arith.constant 1 : index
    %c0_12 = arith.constant 0 : index
    %c0_13 = arith.constant 0 : index
    %10 = vector.load %arg2[%c1_11, %c0_12, %c0_13] : memref<4x128x162xf32, #tpu.memory_space<vmem>>, vector<1x128x162xf32>
    %11 = vector.shape_cast %10 : vector<1x128x162xf32> to vector<128x162xf32>
    %cst_14 = arith.constant dense<0.000000e+00> : vector<128x32xf32>
    %12 = tpu.matmul %11, %9, %cst_14 {dimension_numbers = #tpu.dot_dimension_numbers<[1], [0], [0], [1], [0, 0, 1, 1], [], []>} : vector<128x162xf32>, vector<162x32xf32>, vector<128x32xf32> -> vector<128x32xf32>
    %13 = arith.addf %6, %12 : vector<128x32xf32>
    %c2 = arith.constant 2 : index
    %c0_15 = arith.constant 0 : index
    %c0_16 = arith.constant 0 : index
    %14 = vector.load %arg3[%c2, %c0_15, %c0_16] : memref<4x256x32xf32, #tpu.memory_space<vmem>>, vector<1x256x32xf32>
    %15 = vector.shape_cast %14 : vector<1x256x32xf32> to vector<256x32xf32>
    %cst_17 = arith.constant dense<0.000000e+00> : vector<162x32xf32>
    %16 = tpu.matmul %0, %15, %cst_17 {dimension_numbers = #tpu.dot_dimension_numbers<[1], [0], [0], [1], [0, 0, 1, 1], [], []>} : vector<162x256xf32>, vector<256x32xf32>, vector<162x32xf32> -> vector<162x32xf32>
    %c2_18 = arith.constant 2 : index
    %c0_19 = arith.constant 0 : index
    %c0_20 = arith.constant 0 : index
    %17 = vector.load %arg2[%c2_18, %c0_19, %c0_20] : memref<4x128x162xf32, #tpu.memory_space<vmem>>, vector<1x128x162xf32>
    %18 = vector.shape_cast %17 : vector<1x128x162xf32> to vector<128x162xf32>
    %cst_21 = arith.constant dense<0.000000e+00> : vector<128x32xf32>
    %19 = tpu.matmul %18, %16, %cst_21 {dimension_numbers = #tpu.dot_dimension_numbers<[1], [0], [0], [1], [0, 0, 1, 1], [], []>} : vector<128x162xf32>, vector<162x32xf32>, vector<128x32xf32> -> vector<128x32xf32>
    %20 = arith.addf %13, %19 : vector<128x32xf32>
    %c3 = arith.constant 3 : index
    %c0_22 = arith.constant 0 : index
    %c0_23 = arith.constant 0 : index
    %21 = vector.load %arg3[%c3, %c0_22, %c0_23] : memref<4x256x32xf32, #tpu.memory_space<vmem>>, vector<1x256x32xf32>
    %22 = vector.shape_cast %21 : vector<1x256x32xf32> to vector<256x32xf32>
    %cst_24 = arith.constant dense<0.000000e+00> : vector<162x32xf32>
    %23 = tpu.matmul %0, %22, %cst_24 {dimension_numbers = #tpu.dot_dimension_numbers<[1], [0], [0], [1], [0, 0, 1, 1], [], []>} : vector<162x256xf32>, vector<256x32xf32>, vector<162x32xf32> -> vector<162x32xf32>
    %c3_25 = arith.constant 3 : index
    %c0_26 = arith.constant 0 : index
    %c0_27 = arith.constant 0 : index
    %24 = vector.load %arg2[%c3_25, %c0_26, %c0_27] : memref<4x128x162xf32, #tpu.memory_space<vmem>>, vector<1x128x162xf32>
    %25 = vector.shape_cast %24 : vector<1x128x162xf32> to vector<128x162xf32>
    %cst_28 = arith.constant dense<0.000000e+00> : vector<128x32xf32>
    %26 = tpu.matmul %25, %23, %cst_28 {dimension_numbers = #tpu.dot_dimension_numbers<[1], [0], [0], [1], [0, 0, 1, 1], [], []>} : vector<128x162xf32>, vector<162x32xf32>, vector<128x32xf32> -> vector<128x32xf32>
    %27 = arith.addf %20, %26 : vector<128x32xf32>
    %c0_29 = arith.constant 0 : index
    %c0_30 = arith.constant 0 : index
    %28 = vector.load %arg4[%c0_29, %c0_30] : memref<1x32xf32, #tpu.memory_space<vmem>>, vector<1x32xf32>
    %29 = vector.broadcast %28 : vector<1x32xf32> to vector<128x32xf32>
    %30 = arith.addf %27, %29 : vector<128x32xf32>
    %cst_31 = arith.constant 0.000000e+00 : f32
    %31 = vector.broadcast %cst_31 : f32 to vector<128x32xf32>
    %32 = arith.maximumf %30, %31 : vector<128x32xf32>
    %c0_32 = arith.constant 0 : index
    %c0_33 = arith.constant 0 : index
    %c0_34 = arith.constant 0 : index
    %33 = vector.load %arg5[%c0_32, %c0_33, %c0_34] : memref<16x18x128xf32, #tpu.memory_space<vmem>>, vector<1x18x128xf32>
    %34 = vector.shape_cast %33 : vector<1x18x128xf32> to vector<18x128xf32>
    %cst_35 = arith.constant dense<0.000000e+00> : vector<18x32xf32>
    %35 = tpu.matmul %34, %32, %cst_35 {dimension_numbers = #tpu.dot_dimension_numbers<[1], [0], [0], [1], [0, 0, 1, 1], [], []>} : vector<18x128xf32>, vector<128x32xf32>, vector<18x32xf32> -> vector<18x32xf32>
    %c0_36 = arith.constant 0 : index
    %c0_37 = arith.constant 0 : index
    %c0_38 = arith.constant 0 : index
    %36 = vector.load %arg6[%c0_36, %c0_37, %c0_38] : memref<16x32x64xf32, #tpu.memory_space<vmem>>, vector<1x32x64xf32>
    %37 = vector.shape_cast %36 : vector<1x32x64xf32> to vector<32x64xf32>
    %cst_39 = arith.constant dense<0.000000e+00> : vector<18x64xf32>
    %38 = tpu.matmul %35, %37, %cst_39 {dimension_numbers = #tpu.dot_dimension_numbers<[1], [0], [0], [1], [0, 0, 1, 1], [], []>} : vector<18x32xf32>, vector<32x64xf32>, vector<18x64xf32> -> vector<18x64xf32>
    %c1_40 = arith.constant 1 : index
    %c0_41 = arith.constant 0 : index
    %c0_42 = arith.constant 0 : index
    %39 = vector.load %arg5[%c1_40, %c0_41, %c0_42] : memref<16x18x128xf32, #tpu.memory_space<vmem>>, vector<1x18x128xf32>
    %40 = vector.shape_cast %39 : vector<1x18x128xf32> to vector<18x128xf32>
    %cst_43 = arith.constant dense<0.000000e+00> : vector<18x32xf32>
    %41 = tpu.matmul %40, %32, %cst_43 {dimension_numbers = #tpu.dot_dimension_numbers<[1], [0], [0], [1], [0, 0, 1, 1], [], []>} : vector<18x128xf32>, vector<128x32xf32>, vector<18x32xf32> -> vector<18x32xf32>
    %c1_44 = arith.constant 1 : index
    %c0_45 = arith.constant 0 : index
    %c0_46 = arith.constant 0 : index
    %42 = vector.load %arg6[%c1_44, %c0_45, %c0_46] : memref<16x32x64xf32, #tpu.memory_space<vmem>>, vector<1x32x64xf32>
    %43 = vector.shape_cast %42 : vector<1x32x64xf32> to vector<32x64xf32>
    %cst_47 = arith.constant dense<0.000000e+00> : vector<18x64xf32>
    %44 = tpu.matmul %41, %43, %cst_47 {dimension_numbers = #tpu.dot_dimension_numbers<[1], [0], [0], [1], [0, 0, 1, 1], [], []>} : vector<18x32xf32>, vector<32x64xf32>, vector<18x64xf32> -> vector<18x64xf32>
    %45 = arith.addf %38, %44 : vector<18x64xf32>
    %c2_48 = arith.constant 2 : index
    %c0_49 = arith.constant 0 : index
    %c0_50 = arith.constant 0 : index
    %46 = vector.load %arg5[%c2_48, %c0_49, %c0_50] : memref<16x18x128xf32, #tpu.memory_space<vmem>>, vector<1x18x128xf32>
    %47 = vector.shape_cast %46 : vector<1x18x128xf32> to vector<18x128xf32>
    %cst_51 = arith.constant dense<0.000000e+00> : vector<18x32xf32>
    %48 = tpu.matmul %47, %32, %cst_51 {dimension_numbers = #tpu.dot_dimension_numbers<[1], [0], [0], [1], [0, 0, 1, 1], [], []>} : vector<18x128xf32>, vector<128x32xf32>, vector<18x32xf32> -> vector<18x32xf32>
    %c2_52 = arith.constant 2 : index
    %c0_53 = arith.constant 0 : index
    %c0_54 = arith.constant 0 : index
    %49 = vector.load %arg6[%c2_52, %c0_53, %c0_54] : memref<16x32x64xf32, #tpu.memory_space<vmem>>, vector<1x32x64xf32>
    %50 = vector.shape_cast %49 : vector<1x32x64xf32> to vector<32x64xf32>
    %cst_55 = arith.constant dense<0.000000e+00> : vector<18x64xf32>
    %51 = tpu.matmul %48, %50, %cst_55 {dimension_numbers = #tpu.dot_dimension_numbers<[1], [0], [0], [1], [0, 0, 1, 1], [], []>} : vector<18x32xf32>, vector<32x64xf32>, vector<18x64xf32> -> vector<18x64xf32>
    %52 = arith.addf %45, %51 : vector<18x64xf32>
    %c3_56 = arith.constant 3 : index
    %c0_57 = arith.constant 0 : index
    %c0_58 = arith.constant 0 : index
    %53 = vector.load %arg5[%c3_56, %c0_57, %c0_58] : memref<16x18x128xf32, #tpu.memory_space<vmem>>, vector<1x18x128xf32>
    %54 = vector.shape_cast %53 : vector<1x18x128xf32> to vector<18x128xf32>
    %cst_59 = arith.constant dense<0.000000e+00> : vector<18x32xf32>
    %55 = tpu.matmul %54, %32, %cst_59 {dimension_numbers = #tpu.dot_dimension_numbers<[1], [0], [0], [1], [0, 0, 1, 1], [], []>} : vector<18x128xf32>, vector<128x32xf32>, vector<18x32xf32> -> vector<18x32xf32>
    %c3_60 = arith.constant 3 : index
    %c0_61 = arith.constant 0 : index
    %c0_62 = arith.constant 0 : index
    %56 = vector.load %arg6[%c3_60, %c0_61, %c0_62] : memref<16x32x64xf32, #tpu.memory_space<vmem>>, vector<1x32x64xf32>
    %57 = vector.shape_cast %56 : vector<1x32x64xf32> to vector<32x64xf32>
    %cst_63 = arith.constant dense<0.000000e+00> : vector<18x64xf32>
    %58 = tpu.matmul %55, %57, %cst_63 {dimension_numbers = #tpu.dot_dimension_numbers<[1], [0], [0], [1], [0, 0, 1, 1], [], []>} : vector<18x32xf32>, vector<32x64xf32>, vector<18x64xf32> -> vector<18x64xf32>
    %59 = arith.addf %52, %58 : vector<18x64xf32>
    %c4 = arith.constant 4 : index
    %c0_64 = arith.constant 0 : index
    %c0_65 = arith.constant 0 : index
    %60 = vector.load %arg5[%c4, %c0_64, %c0_65] : memref<16x18x128xf32, #tpu.memory_space<vmem>>, vector<1x18x128xf32>
    %61 = vector.shape_cast %60 : vector<1x18x128xf32> to vector<18x128xf32>
    %cst_66 = arith.constant dense<0.000000e+00> : vector<18x32xf32>
    %62 = tpu.matmul %61, %32, %cst_66 {dimension_numbers = #tpu.dot_dimension_numbers<[1], [0], [0], [1], [0, 0, 1, 1], [], []>} : vector<18x128xf32>, vector<128x32xf32>, vector<18x32xf32> -> vector<18x32xf32>
    %c4_67 = arith.constant 4 : index
    %c0_68 = arith.constant 0 : index
    %c0_69 = arith.constant 0 : index
    %63 = vector.load %arg6[%c4_67, %c0_68, %c0_69] : memref<16x32x64xf32, #tpu.memory_space<vmem>>, vector<1x32x64xf32>
    %64 = vector.shape_cast %63 : vector<1x32x64xf32> to vector<32x64xf32>
    %cst_70 = arith.constant dense<0.000000e+00> : vector<18x64xf32>
    %65 = tpu.matmul %62, %64, %cst_70 {dimension_numbers = #tpu.dot_dimension_numbers<[1], [0], [0], [1], [0, 0, 1, 1], [], []>} : vector<18x32xf32>, vector<32x64xf32>, vector<18x64xf32> -> vector<18x64xf32>
    %66 = arith.addf %59, %65 : vector<18x64xf32>
    %c5 = arith.constant 5 : index
    %c0_71 = arith.constant 0 : index
    %c0_72 = arith.constant 0 : index
    %67 = vector.load %arg5[%c5, %c0_71, %c0_72] : memref<16x18x128xf32, #tpu.memory_space<vmem>>, vector<1x18x128xf32>
    %68 = vector.shape_cast %67 : vector<1x18x128xf32> to vector<18x128xf32>
    %cst_73 = arith.constant dense<0.000000e+00> : vector<18x32xf32>
    %69 = tpu.matmul %68, %32, %cst_73 {dimension_numbers = #tpu.dot_dimension_numbers<[1], [0], [0], [1], [0, 0, 1, 1], [], []>} : vector<18x128xf32>, vector<128x32xf32>, vector<18x32xf32> -> vector<18x32xf32>
    %c5_74 = arith.constant 5 : index
    %c0_75 = arith.constant 0 : index
    %c0_76 = arith.constant 0 : index
    %70 = vector.load %arg6[%c5_74, %c0_75, %c0_76] : memref<16x32x64xf32, #tpu.memory_space<vmem>>, vector<1x32x64xf32>
    %71 = vector.shape_cast %70 : vector<1x32x64xf32> to vector<32x64xf32>
    %cst_77 = arith.constant dense<0.000000e+00> : vector<18x64xf32>
    %72 = tpu.matmul %69, %71, %cst_77 {dimension_numbers = #tpu.dot_dimension_numbers<[1], [0], [0], [1], [0, 0, 1, 1], [], []>} : vector<18x32xf32>, vector<32x64xf32>, vector<18x64xf32> -> vector<18x64xf32>
    %73 = arith.addf %66, %72 : vector<18x64xf32>
    %c6 = arith.constant 6 : index
    %c0_78 = arith.constant 0 : index
    %c0_79 = arith.constant 0 : index
    %74 = vector.load %arg5[%c6, %c0_78, %c0_79] : memref<16x18x128xf32, #tpu.memory_space<vmem>>, vector<1x18x128xf32>
    %75 = vector.shape_cast %74 : vector<1x18x128xf32> to vector<18x128xf32>
    %cst_80 = arith.constant dense<0.000000e+00> : vector<18x32xf32>
    %76 = tpu.matmul %75, %32, %cst_80 {dimension_numbers = #tpu.dot_dimension_numbers<[1], [0], [0], [1], [0, 0, 1, 1], [], []>} : vector<18x128xf32>, vector<128x32xf32>, vector<18x32xf32> -> vector<18x32xf32>
    %c6_81 = arith.constant 6 : index
    %c0_82 = arith.constant 0 : index
    %c0_83 = arith.constant 0 : index
    %77 = vector.load %arg6[%c6_81, %c0_82, %c0_83] : memref<16x32x64xf32, #tpu.memory_space<vmem>>, vector<1x32x64xf32>
    %78 = vector.shape_cast %77 : vector<1x32x64xf32> to vector<32x64xf32>
    %cst_84 = arith.constant dense<0.000000e+00> : vector<18x64xf32>
    %79 = tpu.matmul %76, %78, %cst_84 {dimension_numbers = #tpu.dot_dimension_numbers<[1], [0], [0], [1], [0, 0, 1, 1], [], []>} : vector<18x32xf32>, vector<32x64xf32>, vector<18x64xf32> -> vector<18x64xf32>
    %80 = arith.addf %73, %79 : vector<18x64xf32>
    %c7 = arith.constant 7 : index
    %c0_85 = arith.constant 0 : index
    %c0_86 = arith.constant 0 : index
    %81 = vector.load %arg5[%c7, %c0_85, %c0_86] : memref<16x18x128xf32, #tpu.memory_space<vmem>>, vector<1x18x128xf32>
    %82 = vector.shape_cast %81 : vector<1x18x128xf32> to vector<18x128xf32>
    %cst_87 = arith.constant dense<0.000000e+00> : vector<18x32xf32>
    %83 = tpu.matmul %82, %32, %cst_87 {dimension_numbers = #tpu.dot_dimension_numbers<[1], [0], [0], [1], [0, 0, 1, 1], [], []>} : vector<18x128xf32>, vector<128x32xf32>, vector<18x32xf32> -> vector<18x32xf32>
    %c7_88 = arith.constant 7 : index
    %c0_89 = arith.constant 0 : index
    %c0_90 = arith.constant 0 : index
    %84 = vector.load %arg6[%c7_88, %c0_89, %c0_90] : memref<16x32x64xf32, #tpu.memory_space<vmem>>, vector<1x32x64xf32>
    %85 = vector.shape_cast %84 : vector<1x32x64xf32> to vector<32x64xf32>
    %cst_91 = arith.constant dense<0.000000e+00> : vector<18x64xf32>
    %86 = tpu.matmul %83, %85, %cst_91 {dimension_numbers = #tpu.dot_dimension_numbers<[1], [0], [0], [1], [0, 0, 1, 1], [], []>} : vector<18x32xf32>, vector<32x64xf32>, vector<18x64xf32> -> vector<18x64xf32>
    %87 = arith.addf %80, %86 : vector<18x64xf32>
    %c8 = arith.constant 8 : index
    %c0_92 = arith.constant 0 : index
    %c0_93 = arith.constant 0 : index
    %88 = vector.load %arg5[%c8, %c0_92, %c0_93] : memref<16x18x128xf32, #tpu.memory_space<vmem>>, vector<1x18x128xf32>
    %89 = vector.shape_cast %88 : vector<1x18x128xf32> to vector<18x128xf32>
    %cst_94 = arith.constant dense<0.000000e+00> : vector<18x32xf32>
    %90 = tpu.matmul %89, %32, %cst_94 {dimension_numbers = #tpu.dot_dimension_numbers<[1], [0], [0], [1], [0, 0, 1, 1], [], []>} : vector<18x128xf32>, vector<128x32xf32>, vector<18x32xf32> -> vector<18x32xf32>
    %c8_95 = arith.constant 8 : index
    %c0_96 = arith.constant 0 : index
    %c0_97 = arith.constant 0 : index
    %91 = vector.load %arg6[%c8_95, %c0_96, %c0_97] : memref<16x32x64xf32, #tpu.memory_space<vmem>>, vector<1x32x64xf32>
    %92 = vector.shape_cast %91 : vector<1x32x64xf32> to vector<32x64xf32>
    %cst_98 = arith.constant dense<0.000000e+00> : vector<18x64xf32>
    %93 = tpu.matmul %90, %92, %cst_98 {dimension_numbers = #tpu.dot_dimension_numbers<[1], [0], [0], [1], [0, 0, 1, 1], [], []>} : vector<18x32xf32>, vector<32x64xf32>, vector<18x64xf32> -> vector<18x64xf32>
    %94 = arith.addf %87, %93 : vector<18x64xf32>
    %c9 = arith.constant 9 : index
    %c0_99 = arith.constant 0 : index
    %c0_100 = arith.constant 0 : index
    %95 = vector.load %arg5[%c9, %c0_99, %c0_100] : memref<16x18x128xf32, #tpu.memory_space<vmem>>, vector<1x18x128xf32>
    %96 = vector.shape_cast %95 : vector<1x18x128xf32> to vector<18x128xf32>
    %cst_101 = arith.constant dense<0.000000e+00> : vector<18x32xf32>
    %97 = tpu.matmul %96, %32, %cst_101 {dimension_numbers = #tpu.dot_dimension_numbers<[1], [0], [0], [1], [0, 0, 1, 1], [], []>} : vector<18x128xf32>, vector<128x32xf32>, vector<18x32xf32> -> vector<18x32xf32>
    %c9_102 = arith.constant 9 : index
    %c0_103 = arith.constant 0 : index
    %c0_104 = arith.constant 0 : index
    %98 = vector.load %arg6[%c9_102, %c0_103, %c0_104] : memref<16x32x64xf32, #tpu.memory_space<vmem>>, vector<1x32x64xf32>
    %99 = vector.shape_cast %98 : vector<1x32x64xf32> to vector<32x64xf32>
    %cst_105 = arith.constant dense<0.000000e+00> : vector<18x64xf32>
    %100 = tpu.matmul %97, %99, %cst_105 {dimension_numbers = #tpu.dot_dimension_numbers<[1], [0], [0], [1], [0, 0, 1, 1], [], []>} : vector<18x32xf32>, vector<32x64xf32>, vector<18x64xf32> -> vector<18x64xf32>
    %101 = arith.addf %94, %100 : vector<18x64xf32>
    %c10 = arith.constant 10 : index
    %c0_106 = arith.constant 0 : index
    %c0_107 = arith.constant 0 : index
    %102 = vector.load %arg5[%c10, %c0_106, %c0_107] : memref<16x18x128xf32, #tpu.memory_space<vmem>>, vector<1x18x128xf32>
    %103 = vector.shape_cast %102 : vector<1x18x128xf32> to vector<18x128xf32>
    %cst_108 = arith.constant dense<0.000000e+00> : vector<18x32xf32>
    %104 = tpu.matmul %103, %32, %cst_108 {dimension_numbers = #tpu.dot_dimension_numbers<[1], [0], [0], [1], [0, 0, 1, 1], [], []>} : vector<18x128xf32>, vector<128x32xf32>, vector<18x32xf32> -> vector<18x32xf32>
    %c10_109 = arith.constant 10 : index
    %c0_110 = arith.constant 0 : index
    %c0_111 = arith.constant 0 : index
    %105 = vector.load %arg6[%c10_109, %c0_110, %c0_111] : memref<16x32x64xf32, #tpu.memory_space<vmem>>, vector<1x32x64xf32>
    %106 = vector.shape_cast %105 : vector<1x32x64xf32> to vector<32x64xf32>
    %cst_112 = arith.constant dense<0.000000e+00> : vector<18x64xf32>
    %107 = tpu.matmul %104, %106, %cst_112 {dimension_numbers = #tpu.dot_dimension_numbers<[1], [0], [0], [1], [0, 0, 1, 1], [], []>} : vector<18x32xf32>, vector<32x64xf32>, vector<18x64xf32> -> vector<18x64xf32>
    %108 = arith.addf %101, %107 : vector<18x64xf32>
    %c11 = arith.constant 11 : index
    %c0_113 = arith.constant 0 : index
    %c0_114 = arith.constant 0 : index
    %109 = vector.load %arg5[%c11, %c0_113, %c0_114] : memref<16x18x128xf32, #tpu.memory_space<vmem>>, vector<1x18x128xf32>
    %110 = vector.shape_cast %109 : vector<1x18x128xf32> to vector<18x128xf32>
    %cst_115 = arith.constant dense<0.000000e+00> : vector<18x32xf32>
    %111 = tpu.matmul %110, %32, %cst_115 {dimension_numbers = #tpu.dot_dimension_numbers<[1], [0], [0], [1], [0, 0, 1, 1], [], []>} : vector<18x128xf32>, vector<128x32xf32>, vector<18x32xf32> -> vector<18x32xf32>
    %c11_116 = arith.constant 11 : index
    %c0_117 = arith.constant 0 : index
    %c0_118 = arith.constant 0 : index
    %112 = vector.load %arg6[%c11_116, %c0_117, %c0_118] : memref<16x32x64xf32, #tpu.memory_space<vmem>>, vector<1x32x64xf32>
    %113 = vector.shape_cast %112 : vector<1x32x64xf32> to vector<32x64xf32>
    %cst_119 = arith.constant dense<0.000000e+00> : vector<18x64xf32>
    %114 = tpu.matmul %111, %113, %cst_119 {dimension_numbers = #tpu.dot_dimension_numbers<[1], [0], [0], [1], [0, 0, 1, 1], [], []>} : vector<18x32xf32>, vector<32x64xf32>, vector<18x64xf32> -> vector<18x64xf32>
    %115 = arith.addf %108, %114 : vector<18x64xf32>
    %c12 = arith.constant 12 : index
    %c0_120 = arith.constant 0 : index
    %c0_121 = arith.constant 0 : index
    %116 = vector.load %arg5[%c12, %c0_120, %c0_121] : memref<16x18x128xf32, #tpu.memory_space<vmem>>, vector<1x18x128xf32>
    %117 = vector.shape_cast %116 : vector<1x18x128xf32> to vector<18x128xf32>
    %cst_122 = arith.constant dense<0.000000e+00> : vector<18x32xf32>
    %118 = tpu.matmul %117, %32, %cst_122 {dimension_numbers = #tpu.dot_dimension_numbers<[1], [0], [0], [1], [0, 0, 1, 1], [], []>} : vector<18x128xf32>, vector<128x32xf32>, vector<18x32xf32> -> vector<18x32xf32>
    %c12_123 = arith.constant 12 : index
    %c0_124 = arith.constant 0 : index
    %c0_125 = arith.constant 0 : index
    %119 = vector.load %arg6[%c12_123, %c0_124, %c0_125] : memref<16x32x64xf32, #tpu.memory_space<vmem>>, vector<1x32x64xf32>
    %120 = vector.shape_cast %119 : vector<1x32x64xf32> to vector<32x64xf32>
    %cst_126 = arith.constant dense<0.000000e+00> : vector<18x64xf32>
    %121 = tpu.matmul %118, %120, %cst_126 {dimension_numbers = #tpu.dot_dimension_numbers<[1], [0], [0], [1], [0, 0, 1, 1], [], []>} : vector<18x32xf32>, vector<32x64xf32>, vector<18x64xf32> -> vector<18x64xf32>
    %122 = arith.addf %115, %121 : vector<18x64xf32>
    %c13 = arith.constant 13 : index
    %c0_127 = arith.constant 0 : index
    %c0_128 = arith.constant 0 : index
    %123 = vector.load %arg5[%c13, %c0_127, %c0_128] : memref<16x18x128xf32, #tpu.memory_space<vmem>>, vector<1x18x128xf32>
    %124 = vector.shape_cast %123 : vector<1x18x128xf32> to vector<18x128xf32>
    %cst_129 = arith.constant dense<0.000000e+00> : vector<18x32xf32>
    %125 = tpu.matmul %124, %32, %cst_129 {dimension_numbers = #tpu.dot_dimension_numbers<[1], [0], [0], [1], [0, 0, 1, 1], [], []>} : vector<18x128xf32>, vector<128x32xf32>, vector<18x32xf32> -> vector<18x32xf32>
    %c13_130 = arith.constant 13 : index
    %c0_131 = arith.constant 0 : index
    %c0_132 = arith.constant 0 : index
    %126 = vector.load %arg6[%c13_130, %c0_131, %c0_132] : memref<16x32x64xf32, #tpu.memory_space<vmem>>, vector<1x32x64xf32>
    %127 = vector.shape_cast %126 : vector<1x32x64xf32> to vector<32x64xf32>
    %cst_133 = arith.constant dense<0.000000e+00> : vector<18x64xf32>
    %128 = tpu.matmul %125, %127, %cst_133 {dimension_numbers = #tpu.dot_dimension_numbers<[1], [0], [0], [1], [0, 0, 1, 1], [], []>} : vector<18x32xf32>, vector<32x64xf32>, vector<18x64xf32> -> vector<18x64xf32>
    %129 = arith.addf %122, %128 : vector<18x64xf32>
    %c14 = arith.constant 14 : index
    %c0_134 = arith.constant 0 : index
    %c0_135 = arith.constant 0 : index
    %130 = vector.load %arg5[%c14, %c0_134, %c0_135] : memref<16x18x128xf32, #tpu.memory_space<vmem>>, vector<1x18x128xf32>
    %131 = vector.shape_cast %130 : vector<1x18x128xf32> to vector<18x128xf32>
    %cst_136 = arith.constant dense<0.000000e+00> : vector<18x32xf32>
    %132 = tpu.matmul %131, %32, %cst_136 {dimension_numbers = #tpu.dot_dimension_numbers<[1], [0], [0], [1], [0, 0, 1, 1], [], []>} : vector<18x128xf32>, vector<128x32xf32>, vector<18x32xf32> -> vector<18x32xf32>
    %c14_137 = arith.constant 14 : index
    %c0_138 = arith.constant 0 : index
    %c0_139 = arith.constant 0 : index
    %133 = vector.load %arg6[%c14_137, %c0_138, %c0_139] : memref<16x32x64xf32, #tpu.memory_space<vmem>>, vector<1x32x64xf32>
    %134 = vector.shape_cast %133 : vector<1x32x64xf32> to vector<32x64xf32>
    %cst_140 = arith.constant dense<0.000000e+00> : vector<18x64xf32>
    %135 = tpu.matmul %132, %134, %cst_140 {dimension_numbers = #tpu.dot_dimension_numbers<[1], [0], [0], [1], [0, 0, 1, 1], [], []>} : vector<18x32xf32>, vector<32x64xf32>, vector<18x64xf32> -> vector<18x64xf32>
    %136 = arith.addf %129, %135 : vector<18x64xf32>
    %c15 = arith.constant 15 : index
    %c0_141 = arith.constant 0 : index
    %c0_142 = arith.constant 0 : index
    %137 = vector.load %arg5[%c15, %c0_141, %c0_142] : memref<16x18x128xf32, #tpu.memory_space<vmem>>, vector<1x18x128xf32>
    %138 = vector.shape_cast %137 : vector<1x18x128xf32> to vector<18x128xf32>
    %cst_143 = arith.constant dense<0.000000e+00> : vector<18x32xf32>
    %139 = tpu.matmul %138, %32, %cst_143 {dimension_numbers = #tpu.dot_dimension_numbers<[1], [0], [0], [1], [0, 0, 1, 1], [], []>} : vector<18x128xf32>, vector<128x32xf32>, vector<18x32xf32> -> vector<18x32xf32>
    %c15_144 = arith.constant 15 : index
    %c0_145 = arith.constant 0 : index
    %c0_146 = arith.constant 0 : index
    %140 = vector.load %arg6[%c15_144, %c0_145, %c0_146] : memref<16x32x64xf32, #tpu.memory_space<vmem>>, vector<1x32x64xf32>
    %141 = vector.shape_cast %140 : vector<1x32x64xf32> to vector<32x64xf32>
    %cst_147 = arith.constant dense<0.000000e+00> : vector<18x64xf32>
    %142 = tpu.matmul %139, %141, %cst_147 {dimension_numbers = #tpu.dot_dimension_numbers<[1], [0], [0], [1], [0, 0, 1, 1], [], []>} : vector<18x32xf32>, vector<32x64xf32>, vector<18x64xf32> -> vector<18x64xf32>
    %143 = arith.addf %136, %142 : vector<18x64xf32>
    %c0_148 = arith.constant 0 : index
    %c0_149 = arith.constant 0 : index
    %144 = vector.load %arg7[%c0_148, %c0_149] : memref<1x64xf32, #tpu.memory_space<vmem>>, vector<1x64xf32>
    %145 = vector.broadcast %144 : vector<1x64xf32> to vector<18x64xf32>
    %146 = arith.addf %143, %145 : vector<18x64xf32>
    %cst_150 = arith.constant 0.000000e+00 : f32
    %147 = vector.broadcast %cst_150 : f32 to vector<18x64xf32>
    %148 = arith.maximumf %146, %147 : vector<18x64xf32>
    %c0_151 = arith.constant 0 : index
    %c0_152 = arith.constant 0 : index
    %c0_153 = arith.constant 0 : index
    %149 = vector.load %arg8[%c0_151, %c0_152, %c0_153] : memref<9x2x18xf32, #tpu.memory_space<vmem>>, vector<1x2x18xf32>
    %150 = vector.shape_cast %149 : vector<1x2x18xf32> to vector<2x18xf32>
    %cst_154 = arith.constant dense<0.000000e+00> : vector<2x64xf32>
    %151 = tpu.matmul %150, %148, %cst_154 {dimension_numbers = #tpu.dot_dimension_numbers<[1], [0], [0], [1], [0, 0, 1, 1], [], []>} : vector<2x18xf32>, vector<18x64xf32>, vector<2x64xf32> -> vector<2x64xf32>
    %c0_155 = arith.constant 0 : index
    %c0_156 = arith.constant 0 : index
    %c0_157 = arith.constant 0 : index
    %152 = vector.load %arg9[%c0_155, %c0_156, %c0_157] : memref<9x64x64xf32, #tpu.memory_space<vmem>>, vector<1x64x64xf32>
    %153 = vector.shape_cast %152 : vector<1x64x64xf32> to vector<64x64xf32>
    %cst_158 = arith.constant dense<0.000000e+00> : vector<2x64xf32>
    %154 = tpu.matmul %151, %153, %cst_158 {dimension_numbers = #tpu.dot_dimension_numbers<[1], [0], [0], [1], [0, 0, 1, 1], [], []>} : vector<2x64xf32>, vector<64x64xf32>, vector<2x64xf32> -> vector<2x64xf32>
    %c1_159 = arith.constant 1 : index
    %c0_160 = arith.constant 0 : index
    %c0_161 = arith.constant 0 : index
    %155 = vector.load %arg8[%c1_159, %c0_160, %c0_161] : memref<9x2x18xf32, #tpu.memory_space<vmem>>, vector<1x2x18xf32>
    %156 = vector.shape_cast %155 : vector<1x2x18xf32> to vector<2x18xf32>
    %cst_162 = arith.constant dense<0.000000e+00> : vector<2x64xf32>
    %157 = tpu.matmul %156, %148, %cst_162 {dimension_numbers = #tpu.dot_dimension_numbers<[1], [0], [0], [1], [0, 0, 1, 1], [], []>} : vector<2x18xf32>, vector<18x64xf32>, vector<2x64xf32> -> vector<2x64xf32>
    %c1_163 = arith.constant 1 : index
    %c0_164 = arith.constant 0 : index
    %c0_165 = arith.constant 0 : index
    %158 = vector.load %arg9[%c1_163, %c0_164, %c0_165] : memref<9x64x64xf32, #tpu.memory_space<vmem>>, vector<1x64x64xf32>
    %159 = vector.shape_cast %158 : vector<1x64x64xf32> to vector<64x64xf32>
    %cst_166 = arith.constant dense<0.000000e+00> : vector<2x64xf32>
    %160 = tpu.matmul %157, %159, %cst_166 {dimension_numbers = #tpu.dot_dimension_numbers<[1], [0], [0], [1], [0, 0, 1, 1], [], []>} : vector<2x64xf32>, vector<64x64xf32>, vector<2x64xf32> -> vector<2x64xf32>
    %161 = arith.addf %154, %160 : vector<2x64xf32>
    %c2_167 = arith.constant 2 : index
    %c0_168 = arith.constant 0 : index
    %c0_169 = arith.constant 0 : index
    %162 = vector.load %arg8[%c2_167, %c0_168, %c0_169] : memref<9x2x18xf32, #tpu.memory_space<vmem>>, vector<1x2x18xf32>
    %163 = vector.shape_cast %162 : vector<1x2x18xf32> to vector<2x18xf32>
    %cst_170 = arith.constant dense<0.000000e+00> : vector<2x64xf32>
    %164 = tpu.matmul %163, %148, %cst_170 {dimension_numbers = #tpu.dot_dimension_numbers<[1], [0], [0], [1], [0, 0, 1, 1], [], []>} : vector<2x18xf32>, vector<18x64xf32>, vector<2x64xf32> -> vector<2x64xf32>
    %c2_171 = arith.constant 2 : index
    %c0_172 = arith.constant 0 : index
    %c0_173 = arith.constant 0 : index
    %165 = vector.load %arg9[%c2_171, %c0_172, %c0_173] : memref<9x64x64xf32, #tpu.memory_space<vmem>>, vector<1x64x64xf32>
    %166 = vector.shape_cast %165 : vector<1x64x64xf32> to vector<64x64xf32>
    %cst_174 = arith.constant dense<0.000000e+00> : vector<2x64xf32>
    %167 = tpu.matmul %164, %166, %cst_174 {dimension_numbers = #tpu.dot_dimension_numbers<[1], [0], [0], [1], [0, 0, 1, 1], [], []>} : vector<2x64xf32>, vector<64x64xf32>, vector<2x64xf32> -> vector<2x64xf32>
    %168 = arith.addf %161, %167 : vector<2x64xf32>
    %c3_175 = arith.constant 3 : index
    %c0_176 = arith.constant 0 : index
    %c0_177 = arith.constant 0 : index
    %169 = vector.load %arg8[%c3_175, %c0_176, %c0_177] : memref<9x2x18xf32, #tpu.memory_space<vmem>>, vector<1x2x18xf32>
    %170 = vector.shape_cast %169 : vector<1x2x18xf32> to vector<2x18xf32>
    %cst_178 = arith.constant dense<0.000000e+00> : vector<2x64xf32>
    %171 = tpu.matmul %170, %148, %cst_178 {dimension_numbers = #tpu.dot_dimension_numbers<[1], [0], [0], [1], [0, 0, 1, 1], [], []>} : vector<2x18xf32>, vector<18x64xf32>, vector<2x64xf32> -> vector<2x64xf32>
    %c3_179 = arith.constant 3 : index
    %c0_180 = arith.constant 0 : index
    %c0_181 = arith.constant 0 : index
    %172 = vector.load %arg9[%c3_179, %c0_180, %c0_181] : memref<9x64x64xf32, #tpu.memory_space<vmem>>, vector<1x64x64xf32>
    %173 = vector.shape_cast %172 : vector<1x64x64xf32> to vector<64x64xf32>
    %cst_182 = arith.constant dense<0.000000e+00> : vector<2x64xf32>
    %174 = tpu.matmul %171, %173, %cst_182 {dimension_numbers = #tpu.dot_dimension_numbers<[1], [0], [0], [1], [0, 0, 1, 1], [], []>} : vector<2x64xf32>, vector<64x64xf32>, vector<2x64xf32> -> vector<2x64xf32>
    %175 = arith.addf %168, %174 : vector<2x64xf32>
    %c4_183 = arith.constant 4 : index
    %c0_184 = arith.constant 0 : index
    %c0_185 = arith.constant 0 : index
    %176 = vector.load %arg8[%c4_183, %c0_184, %c0_185] : memref<9x2x18xf32, #tpu.memory_space<vmem>>, vector<1x2x18xf32>
    %177 = vector.shape_cast %176 : vector<1x2x18xf32> to vector<2x18xf32>
    %cst_186 = arith.constant dense<0.000000e+00> : vector<2x64xf32>
    %178 = tpu.matmul %177, %148, %cst_186 {dimension_numbers = #tpu.dot_dimension_numbers<[1], [0], [0], [1], [0, 0, 1, 1], [], []>} : vector<2x18xf32>, vector<18x64xf32>, vector<2x64xf32> -> vector<2x64xf32>
    %c4_187 = arith.constant 4 : index
    %c0_188 = arith.constant 0 : index
    %c0_189 = arith.constant 0 : index
    %179 = vector.load %arg9[%c4_187, %c0_188, %c0_189] : memref<9x64x64xf32, #tpu.memory_space<vmem>>, vector<1x64x64xf32>
    %180 = vector.shape_cast %179 : vector<1x64x64xf32> to vector<64x64xf32>
    %cst_190 = arith.constant dense<0.000000e+00> : vector<2x64xf32>
    %181 = tpu.matmul %178, %180, %cst_190 {dimension_numbers = #tpu.dot_dimension_numbers<[1], [0], [0], [1], [0, 0, 1, 1], [], []>} : vector<2x64xf32>, vector<64x64xf32>, vector<2x64xf32> -> vector<2x64xf32>
    %182 = arith.addf %175, %181 : vector<2x64xf32>
    %c5_191 = arith.constant 5 : index
    %c0_192 = arith.constant 0 : index
    %c0_193 = arith.constant 0 : index
    %183 = vector.load %arg8[%c5_191, %c0_192, %c0_193] : memref<9x2x18xf32, #tpu.memory_space<vmem>>, vector<1x2x18xf32>
    %184 = vector.shape_cast %183 : vector<1x2x18xf32> to vector<2x18xf32>
    %cst_194 = arith.constant dense<0.000000e+00> : vector<2x64xf32>
    %185 = tpu.matmul %184, %148, %cst_194 {dimension_numbers = #tpu.dot_dimension_numbers<[1], [0], [0], [1], [0, 0, 1, 1], [], []>} : vector<2x18xf32>, vector<18x64xf32>, vector<2x64xf32> -> vector<2x64xf32>
    %c5_195 = arith.constant 5 : index
    %c0_196 = arith.constant 0 : index
    %c0_197 = arith.constant 0 : index
    %186 = vector.load %arg9[%c5_195, %c0_196, %c0_197] : memref<9x64x64xf32, #tpu.memory_space<vmem>>, vector<1x64x64xf32>
    %187 = vector.shape_cast %186 : vector<1x64x64xf32> to vector<64x64xf32>
    %cst_198 = arith.constant dense<0.000000e+00> : vector<2x64xf32>
    %188 = tpu.matmul %185, %187, %cst_198 {dimension_numbers = #tpu.dot_dimension_numbers<[1], [0], [0], [1], [0, 0, 1, 1], [], []>} : vector<2x64xf32>, vector<64x64xf32>, vector<2x64xf32> -> vector<2x64xf32>
    %189 = arith.addf %182, %188 : vector<2x64xf32>
    %c6_199 = arith.constant 6 : index
    %c0_200 = arith.constant 0 : index
    %c0_201 = arith.constant 0 : index
    %190 = vector.load %arg8[%c6_199, %c0_200, %c0_201] : memref<9x2x18xf32, #tpu.memory_space<vmem>>, vector<1x2x18xf32>
    %191 = vector.shape_cast %190 : vector<1x2x18xf32> to vector<2x18xf32>
    %cst_202 = arith.constant dense<0.000000e+00> : vector<2x64xf32>
    %192 = tpu.matmul %191, %148, %cst_202 {dimension_numbers = #tpu.dot_dimension_numbers<[1], [0], [0], [1], [0, 0, 1, 1], [], []>} : vector<2x18xf32>, vector<18x64xf32>, vector<2x64xf32> -> vector<2x64xf32>
    %c6_203 = arith.constant 6 : index
    %c0_204 = arith.constant 0 : index
    %c0_205 = arith.constant 0 : index
    %193 = vector.load %arg9[%c6_203, %c0_204, %c0_205] : memref<9x64x64xf32, #tpu.memory_space<vmem>>, vector<1x64x64xf32>
    %194 = vector.shape_cast %193 : vector<1x64x64xf32> to vector<64x64xf32>
    %cst_206 = arith.constant dense<0.000000e+00> : vector<2x64xf32>
    %195 = tpu.matmul %192, %194, %cst_206 {dimension_numbers = #tpu.dot_dimension_numbers<[1], [0], [0], [1], [0, 0, 1, 1], [], []>} : vector<2x64xf32>, vector<64x64xf32>, vector<2x64xf32> -> vector<2x64xf32>
    %196 = arith.addf %189, %195 : vector<2x64xf32>
    %c7_207 = arith.constant 7 : index
    %c0_208 = arith.constant 0 : index
    %c0_209 = arith.constant 0 : index
    %197 = vector.load %arg8[%c7_207, %c0_208, %c0_209] : memref<9x2x18xf32, #tpu.memory_space<vmem>>, vector<1x2x18xf32>
    %198 = vector.shape_cast %197 : vector<1x2x18xf32> to vector<2x18xf32>
    %cst_210 = arith.constant dense<0.000000e+00> : vector<2x64xf32>
    %199 = tpu.matmul %198, %148, %cst_210 {dimension_numbers = #tpu.dot_dimension_numbers<[1], [0], [0], [1], [0, 0, 1, 1], [], []>} : vector<2x18xf32>, vector<18x64xf32>, vector<2x64xf32> -> vector<2x64xf32>
    %c7_211 = arith.constant 7 : index
    %c0_212 = arith.constant 0 : index
    %c0_213 = arith.constant 0 : index
    %200 = vector.load %arg9[%c7_211, %c0_212, %c0_213] : memref<9x64x64xf32, #tpu.memory_space<vmem>>, vector<1x64x64xf32>
    %201 = vector.shape_cast %200 : vector<1x64x64xf32> to vector<64x64xf32>
    %cst_214 = arith.constant dense<0.000000e+00> : vector<2x64xf32>
    %202 = tpu.matmul %199, %201, %cst_214 {dimension_numbers = #tpu.dot_dimension_numbers<[1], [0], [0], [1], [0, 0, 1, 1], [], []>} : vector<2x64xf32>, vector<64x64xf32>, vector<2x64xf32> -> vector<2x64xf32>
    %203 = arith.addf %196, %202 : vector<2x64xf32>
    %c8_215 = arith.constant 8 : index
    %c0_216 = arith.constant 0 : index
    %c0_217 = arith.constant 0 : index
    %204 = vector.load %arg8[%c8_215, %c0_216, %c0_217] : memref<9x2x18xf32, #tpu.memory_space<vmem>>, vector<1x2x18xf32>
    %205 = vector.shape_cast %204 : vector<1x2x18xf32> to vector<2x18xf32>
    %cst_218 = arith.constant dense<0.000000e+00> : vector<2x64xf32>
    %206 = tpu.matmul %205, %148, %cst_218 {dimension_numbers = #tpu.dot_dimension_numbers<[1], [0], [0], [1], [0, 0, 1, 1], [], []>} : vector<2x18xf32>, vector<18x64xf32>, vector<2x64xf32> -> vector<2x64xf32>
    %c8_219 = arith.constant 8 : index
    %c0_220 = arith.constant 0 : index
    %c0_221 = arith.constant 0 : index
    %207 = vector.load %arg9[%c8_219, %c0_220, %c0_221] : memref<9x64x64xf32, #tpu.memory_space<vmem>>, vector<1x64x64xf32>
    %208 = vector.shape_cast %207 : vector<1x64x64xf32> to vector<64x64xf32>
    %cst_222 = arith.constant dense<0.000000e+00> : vector<2x64xf32>
    %209 = tpu.matmul %206, %208, %cst_222 {dimension_numbers = #tpu.dot_dimension_numbers<[1], [0], [0], [1], [0, 0, 1, 1], [], []>} : vector<2x64xf32>, vector<64x64xf32>, vector<2x64xf32> -> vector<2x64xf32>
    %210 = arith.addf %203, %209 : vector<2x64xf32>
    %c0_223 = arith.constant 0 : index
    %c0_224 = arith.constant 0 : index
    %211 = vector.load %arg10[%c0_223, %c0_224] : memref<1x64xf32, #tpu.memory_space<vmem>>, vector<1x64xf32>
    %212 = vector.broadcast %211 : vector<1x64xf32> to vector<2x64xf32>
    %213 = arith.addf %210, %212 : vector<2x64xf32>
    %c0_225 = arith.constant 0 : index
    %c0_226 = arith.constant 0 : index
    %214 = vector.load %arg1[%c0_225, %c0_226] : memref<2x4xf32, #tpu.memory_space<vmem>>, vector<2x4xf32>
    %c0_227 = arith.constant 0 : index
    %c0_228 = arith.constant 0 : index
    %215 = vector.load %arg13[%c0_227, %c0_228] : memref<4x32xf32, #tpu.memory_space<vmem>>, vector<4x32xf32>
    %cst_229 = arith.constant dense<0.000000e+00> : vector<2x32xf32>
    %216 = tpu.matmul %214, %215, %cst_229 {dimension_numbers = #tpu.dot_dimension_numbers<[1], [0], [0], [1], [0, 0, 1, 1], [], []>} : vector<2x4xf32>, vector<4x32xf32>, vector<2x32xf32> -> vector<2x32xf32>
    %c0_230 = arith.constant 0 : index
    %c0_231 = arith.constant 0 : index
    %c0_232 = arith.constant 0 : index
    %217 = vector.load %arg12[%c0_230, %c0_231, %c0_232] : memref<1x64x32xf32, #tpu.memory_space<vmem>>, vector<1x64x32xf32>
    %218 = vector.shape_cast %217 : vector<1x64x32xf32> to vector<64x32xf32>
    %cst_233 = arith.constant dense<0.000000e+00> : vector<2x32xf32>
    %219 = tpu.matmul %213, %218, %cst_233 {dimension_numbers = #tpu.dot_dimension_numbers<[1], [0], [0], [1], [0, 0, 1, 1], [], []>} : vector<2x64xf32>, vector<64x32xf32>, vector<2x32xf32> -> vector<2x32xf32>
    %220 = arith.addf %216, %219 : vector<2x32xf32>
    %c0_234 = arith.constant 0 : index
    %c0_235 = arith.constant 0 : index
    %221 = vector.load %arg14[%c0_234, %c0_235] : memref<1x32xf32, #tpu.memory_space<vmem>>, vector<1x32xf32>
    %222 = vector.broadcast %221 : vector<1x32xf32> to vector<2x32xf32>
    %223 = arith.addf %220, %222 : vector<2x32xf32>
    %cst_236 = arith.constant 0.000000e+00 : f32
    %224 = vector.broadcast %cst_236 : f32 to vector<2x32xf32>
    %225 = arith.maximumf %223, %224 : vector<2x32xf32>
    %c0_237 = arith.constant 0 : index
    %c0_238 = arith.constant 0 : index
    %226 = vector.load %arg15[%c0_237, %c0_238] : memref<32x32xf32, #tpu.memory_space<vmem>>, vector<32x32xf32>
    %cst_239 = arith.constant dense<0.000000e+00> : vector<2x32xf32>
    %227 = tpu.matmul %225, %226, %cst_239 {dimension_numbers = #tpu.dot_dimension_numbers<[1], [0], [0], [1], [0, 0, 1, 1], [], []>} : vector<2x32xf32>, vector<32x32xf32>, vector<2x32xf32> -> vector<2x32xf32>
    %c0_240 = arith.constant 0 : index
    %c0_241 = arith.constant 0 : index
    %228 = vector.load %arg16[%c0_240, %c0_241] : memref<1x32xf32, #tpu.memory_space<vmem>>, vector<1x32xf32>
    %229 = vector.broadcast %228 : vector<1x32xf32> to vector<2x32xf32>
    %230 = arith.addf %227, %229 : vector<2x32xf32>
    %cst_242 = arith.constant 0.000000e+00 : f32
    %231 = vector.broadcast %cst_242 : f32 to vector<2x32xf32>
    %232 = arith.maximumf %230, %231 : vector<2x32xf32>
    %c0_243 = arith.constant 0 : index
    %c0_244 = arith.constant 0 : index
    %233 = vector.load %arg17[%c0_243, %c0_244] : memref<32x1xf32, #tpu.memory_space<vmem>>, vector<32x1xf32>
    %cst_245 = arith.constant dense<0.000000e+00> : vector<2x1xf32>
    %234 = tpu.matmul %232, %233, %cst_245 {dimension_numbers = #tpu.dot_dimension_numbers<[1], [0], [0], [1], [0, 0, 1, 1], [], []>} : vector<2x32xf32>, vector<32x1xf32>, vector<2x1xf32> -> vector<2x1xf32>
    %c0_246 = arith.constant 0 : index
    %c0_247 = arith.constant 0 : index
    %235 = vector.load %arg18[%c0_246, %c0_247] : memref<1x1xf32, #tpu.memory_space<vmem>>, vector<1x1xf32>
    %236 = vector.broadcast %235 : vector<1x1xf32> to vector<2x1xf32>
    %237 = arith.addf %234, %236 : vector<2x1xf32>
    %c0_248 = arith.constant 0 : index
    %c0_249 = arith.constant 0 : index
    %238 = vector.load %arg19[%c0_248, %c0_249] : memref<2x1xf32, #tpu.memory_space<vmem>>, vector<2x1xf32>
    tpu.vector_store %arg19[%c0_248, %c0_249], %237 {strides = array<i32>} : memref<2x1xf32, #tpu.memory_space<vmem>>, vector<2x1xf32>,
    return
  }
}

</mosaic_0001>

<llo_original>
// kernel: critic_forward.1
$region0: #{critic_forward.1}
  #allocation0 [shape = 'u32[]', space=smem, size = 0x4, offset = 0x4, fixed_abs, tag = 'smem constant byte address 0x4 - core index']
  #allocation1 [shape = 'u32[72,128]{1,0:T(1,128)}', space=vmem, size = 0x9000, scoped, tag = 'internal scratch']
  #allocation2 [shape = 'f32[1,1]{1,0:T(1,128)S(1)}', space=vmem, size = 0x200, scoped, tag = 'scoped memory for critic_forward.1']
  %s0 = inlined_call_operand.vmem [shape: f32[162,256], index: 0, kind: input, shape index: {}]
  %s1 = inlined_call_operand.vmem [shape: f32[2,4], index: 1, kind: input, shape index: {}]
  %s2 = inlined_call_operand.vmem [shape: f32[4,128,162], index: 2, kind: input, shape index: {}]
  %s3 = inlined_call_operand.vmem [shape: f32[4,256,32], index: 3, kind: input, shape index: {}]
  %s4 = inlined_call_operand.vmem [shape: f32[1,32], index: 4, kind: input, shape index: {}]
  %s5 = inlined_call_operand.vmem [shape: f32[16,18,128], index: 5, kind: input, shape index: {}]
  %s6 = inlined_call_operand.vmem [shape: f32[16,32,64], index: 6, kind: input, shape index: {}]
  %s7 = inlined_call_operand.vmem [shape: f32[1,64], index: 7, kind: input, shape index: {}]
  %s8 = inlined_call_operand.vmem [shape: f32[9,2,18], index: 8, kind: input, shape index: {}]
  %s9 = inlined_call_operand.vmem [shape: f32[9,64,64], index: 9, kind: input, shape index: {}]
  %s10 = inlined_call_operand.vmem [shape: f32[1,64], index: 10, kind: input, shape index: {}]
  %s11 = inlined_call_operand.vmem [shape: f32[1,2,2], index: 11, kind: input, shape index: {}]
  %s12 = inlined_call_operand.vmem [shape: f32[1,64,32], index: 12, kind: input, shape index: {}]
  %s13 = inlined_call_operand.vmem [shape: f32[4,32], index: 13, kind: input, shape index: {}]
  %s14 = inlined_call_operand.vmem [shape: f32[1,32], index: 14, kind: input, shape index: {}]
  %s15 = inlined_call_operand.vmem [shape: f32[32,32], index: 15, kind: input, shape index: {}]
  %s16 = inlined_call_operand.vmem [shape: f32[1,32], index: 16, kind: input, shape index: {}]
  %s17 = inlined_call_operand.vmem [shape: f32[32,1], index: 17, kind: input, shape index: {}]
  %s18 = inlined_call_operand.<no memory space> [shape: f32[1,1], index: 18, kind: input, shape index: {}]
  %s19 = inlined_call_operand.vmem [shape: f32[2,1], index: 19, kind: output, shape index: {}]
  %s20 = sld [smem:[#allocation0]]
  $region86: #{critic_forward.1} parent=0
    _
  %s22 = ssub.s32 1, %s20
  %s23 = scalar_select 0, %s22, %s20
  %v24 = vstv %s18
  %25 = vst [vmem:[#allocation2] sm:$0x1] %v24
  // Predicated region
  $region2: #{critic_forward.1} parent=0 // pred_check
    _
  $region3: #{critic_forward.1} parent=0 // pred_check_branch
    %27 = sbr.rel (0) target = $region5
  $region4: #{critic_forward.1} parent=0 // pred_region
    _
  $region5: #{critic_forward.1} parent=0 // pred_fallthru
    _
  // Predicated region
  $region6: #{critic_forward.1} parent=0 // pred_check
    _
  $region7: #{critic_forward.1} parent=0 // pred_check_branch
    %29 = sbr.rel (0) target = $region9
  $region8: #{critic_forward.1} parent=0 // pred_region
    _
  $region9: #{critic_forward.1} parent=0 // pred_fallthru
    _
  // Predicated region
  $region10: #{critic_forward.1} parent=0 // pred_check
    _
  $region11: #{critic_forward.1} parent=0 // pred_check_branch
    %31 = sbr.rel (0) target = $region13
  $region12: #{critic_forward.1} parent=0 // pred_region
    _
  $region13: #{critic_forward.1} parent=0 // pred_fallthru
    _
  // Predicated region
  $region14: #{critic_forward.1} parent=0 // pred_check
    _
  $region15: #{critic_forward.1} parent=0 // pred_check_branch
    %33 = sbr.rel (0) target = $region17
  $region16: #{critic_forward.1} parent=0 // pred_region
    _
  $region17: #{critic_forward.1} parent=0 // pred_fallthru
    _
  // Predicated region
  $region18: #{critic_forward.1} parent=0 // pred_check
    _
  $region19: #{critic_forward.1} parent=0 // pred_check_branch
    %35 = sbr.rel (0) target = $region21
  $region20: #{critic_forward.1} parent=0 // pred_region
    _
  $region21: #{critic_forward.1} parent=0 // pred_fallthru
    _
  // Predicated region
  $region22: #{critic_forward.1} parent=0 // pred_check
    _
  $region23: #{critic_forward.1} parent=0 // pred_check_branch
    %37 = sbr.rel (0) target = $region25
  $region24: #{critic_forward.1} parent=0 // pred_region
    _
  $region25: #{critic_forward.1} parent=0 // pred_fallthru
    _
  // Predicated region
  $region26: #{critic_forward.1} parent=0 // pred_check
    _
  $region27: #{critic_forward.1} parent=0 // pred_check_branch
    %39 = sbr.rel (0) target = $region29
  $region28: #{critic_forward.1} parent=0 // pred_region
    _
  $region29: #{critic_forward.1} parent=0 // pred_fallthru
    _
  // Predicated region
  $region30: #{critic_forward.1} parent=0 // pred_check
    _
  $region31: #{critic_forward.1} parent=0 // pred_check_branch
    %41 = sbr.rel (0) target = $region33
  $region32: #{critic_forward.1} parent=0 // pred_region
    _
  $region33: #{critic_forward.1} parent=0 // pred_fallthru
    _
  // Predicated region
  $region34: #{critic_forward.1} parent=0 // pred_check
    _
  $region35: #{critic_forward.1} parent=0 // pred_check_branch
    %43 = sbr.rel (0) target = $region37
  $region36: #{critic_forward.1} parent=0 // pred_region
    _
  $region37: #{critic_forward.1} parent=0 // pred_fallthru
    _
  // Predicated region
  $region38: #{critic_forward.1} parent=0 // pred_check
    _
  $region39: #{critic_forward.1} parent=0 // pred_check_branch
    %45 = sbr.rel (0) target = $region41
  $region40: #{critic_forward.1} parent=0 // pred_region
    _
  $region41: #{critic_forward.1} parent=0 // pred_fallthru
    _
  // Predicated region
  $region42: #{critic_forward.1} parent=0 // pred_check
    _
  $region43: #{critic_forward.1} parent=0 // pred_check_branch
    %47 = sbr.rel (0) target = $region45
  $region44: #{critic_forward.1} parent=0 // pred_region
    _
  $region45: #{critic_forward.1} parent=0 // pred_fallthru
    _
  // Predicated region
  $region46: #{critic_forward.1} parent=0 // pred_check
    _
  $region47: #{critic_forward.1} parent=0 // pred_check_branch
    %49 = sbr.rel (0) target = $region49
  $region48: #{critic_forward.1} parent=0 // pred_region
    _
  $region49: #{critic_forward.1} parent=0 // pred_fallthru
    _
  // Predicated region
  $region50: #{critic_forward.1} parent=0 // pred_check
    _
  $region51: #{critic_forward.1} parent=0 // pred_check_branch
    %51 = sbr.rel (0) target = $region53
  $region52: #{critic_forward.1} parent=0 // pred_region
    _
  $region53: #{critic_forward.1} parent=0 // pred_fallthru
    _
  // Predicated region
  $region54: #{critic_forward.1} parent=0 // pred_check
    _
  $region55: #{critic_forward.1} parent=0 // pred_check_branch
    %53 = sbr.rel (0) target = $region57
  $region56: #{critic_forward.1} parent=0 // pred_region
    _
  $region57: #{critic_forward.1} parent=0 // pred_fallthru
    _
  // Predicated region
  $region58: #{critic_forward.1} parent=0 // pred_check
    _
  $region59: #{critic_forward.1} parent=0 // pred_check_branch
    %55 = sbr.rel (0) target = $region61
  $region60: #{critic_forward.1} parent=0 // pred_region
    _
  $region61: #{critic_forward.1} parent=0 // pred_fallthru
    _
  // Predicated region
  $region62: #{critic_forward.1} parent=0 // pred_check
    _
  $region63: #{critic_forward.1} parent=0 // pred_check_branch
    %57 = sbr.rel (0) target = $region65
  $region64: #{critic_forward.1} parent=0 // pred_region
    _
  $region65: #{critic_forward.1} parent=0 // pred_fallthru
    _
  // Predicated region
  $region66: #{critic_forward.1} parent=0 // pred_check
    _
  $region67: #{critic_forward.1} parent=0 // pred_check_branch
    %59 = sbr.rel (0) target = $region69
  $region68: #{critic_forward.1} parent=0 // pred_region
    _
  $region69: #{critic_forward.1} parent=0 // pred_fallthru
    _
  // Predicated region
  $region70: #{critic_forward.1} parent=0 // pred_check
    _
  $region71: #{critic_forward.1} parent=0 // pred_check_branch
    %61 = sbr.rel (0) target = $region73
  $region72: #{critic_forward.1} parent=0 // pred_region
    _
  $region73: #{critic_forward.1} parent=0 // pred_fallthru
    _
  // Predicated region
  $region74: #{critic_forward.1} parent=0 // pred_check
    _
  $region75: #{critic_forward.1} parent=0 // pred_check_branch
    %63 = sbr.rel (0) target = $region77
  $region76: #{critic_forward.1} parent=0 // pred_region
    _
  $region77: #{critic_forward.1} parent=0 // pred_fallthru
    _
  %v64 = vld [vmem:[%s0] sm:$0xff]
  %v65 = vld [vmem:[%s0 + $0x8] sm:$0xff]
  %v66 = vld [vmem:[%s0 + $0x10] sm:$0xff]
  %v67 = vld [vmem:[%s0 + $0x18] sm:$0xff]
  %v68 = vld [vmem:[%s0 + $0x20] sm:$0xff]
  %v69 = vld [vmem:[%s0 + $0x28] sm:$0xff]
  %v70 = vld [vmem:[%s0 + $0x30] sm:$0xff]
  %v71 = vld [vmem:[%s0 + $0x38] sm:$0xff]
  %v72 = vld [vmem:[%s0 + $0x40] sm:$0xff]
  %v73 = vld [vmem:[%s0 + $0x48] sm:$0xff]
  %v74 = vld [vmem:[%s0 + $0x50] sm:$0xff]
  %v75 = vld [vmem:[%s0 + $0x58] sm:$0xff]
  %v76 = vld [vmem:[%s0 + $0x60] sm:$0xff]
  %v77 = vld [vmem:[%s0 + $0x68] sm:$0xff]
  %v78 = vld [vmem:[%s0 + $0x70] sm:$0xff]
  %v79 = vld [vmem:[%s0 + $0x78] sm:$0xff]
  %v80 = vld [vmem:[%s0 + $0x80] sm:$0xff]
  %v81 = vld [vmem:[%s0 + $0x88] sm:$0xff]
  %v82 = vld [vmem:[%s0 + $0x90] sm:$0xff]
  %v83 = vld [vmem:[%s0 + $0x98] sm:$0xff]
  %v84 = vld [vmem:[%s0 + $0xa0] sm:$0xff]
  %v85 = vld [vmem:[%s0 + $0xa8] sm:$0xff]
  %v86 = vld [vmem:[%s0 + $0xb0] sm:$0xff]
  %v87 = vld [vmem:[%s0 + $0xb8] sm:$0xff]
  %v88 = vld [vmem:[%s0 + $0xc0] sm:$0xff]
  %v89 = vld [vmem:[%s0 + $0xc8] sm:$0xff]
  %v90 = vld [vmem:[%s0 + $0xd0] sm:$0xff]
  %v91 = vld [vmem:[%s0 + $0xd8] sm:$0xff]
  %v92 = vld [vmem:[%s0 + $0xe0] sm:$0xff]
  %v93 = vld [vmem:[%s0 + $0xe8] sm:$0xff]
  %v94 = vld [vmem:[%s0 + $0xf0] sm:$0xff]
  %v95 = vld [vmem:[%s0 + $0xf8] sm:$0xff]
  %v96 = vld [vmem:[%s0 + $0x100] sm:$0xff]
  %v97 = vld [vmem:[%s0 + $0x108] sm:$0xff]
  %v98 = vld [vmem:[%s0 + $0x110] sm:$0xff]
  %v99 = vld [vmem:[%s0 + $0x118] sm:$0xff]
  %v100 = vld [vmem:[%s0 + $0x120] sm:$0xff]
  %v101 = vld [vmem:[%s0 + $0x128] sm:$0xff]
  %v102 = vld [vmem:[%s0 + $0x130] sm:$0xff]
  %v103 = vld [vmem:[%s0 + $0x138] sm:$0xff]
  %v104 = vld [vmem:[%s0 + $0x140] sm:$0x3]
  %v105 = vld [vmem:[%s0 + $0x148] sm:$0x3]
  %v106 = vld [vmem:[%s3] sm:$0xff]
  %v107 = vld [vmem:[%s3 + $0x8] sm:$0xff]
  %v108 = vld [vmem:[%s3 + $0x10] sm:$0xff]
  %v109 = vld [vmem:[%s3 + $0x18] sm:$0xff]
  %v110 = vld [vmem:[%s3 + $0x20] sm:$0xff]
  %v111 = vld [vmem:[%s3 + $0x28] sm:$0xff]
  %v112 = vld [vmem:[%s3 + $0x30] sm:$0xff]
  %v113 = vld [vmem:[%s3 + $0x38] sm:$0xff]
  %v114 = vld [vmem:[%s3 + $0x40] sm:$0xff]
  %v115 = vld [vmem:[%s3 + $0x48] sm:$0xff]
  %v116 = vld [vmem:[%s3 + $0x50] sm:$0xff]
  %v117 = vld [vmem:[%s3 + $0x58] sm:$0xff]
  %v118 = vld [vmem:[%s3 + $0x60] sm:$0xff]
  %v119 = vld [vmem:[%s3 + $0x68] sm:$0xff]
  %v120 = vld [vmem:[%s3 + $0x70] sm:$0xff]
  %v121 = vld [vmem:[%s3 + $0x78] sm:$0xff]
  %v122 = vld [vmem:[%s3 + $0x80] sm:$0xff]
  %v123 = vld [vmem:[%s3 + $0x88] sm:$0xff]
  %v124 = vld [vmem:[%s3 + $0x90] sm:$0xff]
  %v125 = vld [vmem:[%s3 + $0x98] sm:$0xff]
  %v126 = vld [vmem:[%s3 + $0xa0] sm:$0xff]
  %v127 = vld [vmem:[%s3 + $0xa8] sm:$0xff]
  %v128 = vld [vmem:[%s3 + $0xb0] sm:$0xff]
  %v129 = vld [vmem:[%s3 + $0xb8] sm:$0xff]
  %v130 = vld [vmem:[%s3 + $0xc0] sm:$0xff]
  %v131 = vld [vmem:[%s3 + $0xc8] sm:$0xff]
  %v132 = vld [vmem:[%s3 + $0xd0] sm:$0xff]
  %v133 = vld [vmem:[%s3 + $0xd8] sm:$0xff]
  %v134 = vld [vmem:[%s3 + $0xe0] sm:$0xff]
  %v135 = vld [vmem:[%s3 + $0xe8] sm:$0xff]
  %v136 = vld [vmem:[%s3 + $0xf0] sm:$0xff]
  %v137 = vld [vmem:[%s3 + $0xf8] sm:$0xff]
  %138 = vmatpush.msra.mxu0 %v121
  %139 = vmatpush.msra.mxu0 %v120
  %140 = vmatpush.msra.mxu0 %v119
  %141 = vmatpush.msra.mxu0 %v118
  %142 = vmatpush.msra.mxu0 %v117
  %143 = vmatpush.msra.mxu0 %v116
  %144 = vmatpush.msra.mxu0 %v115
  %145 = vmatpush.msra.mxu0 %v114
  %146 = vmatpush.msra.mxu0 %v113
  %147 = vmatpush.msra.mxu0 %v112
  %148 = vmatpush.msra.mxu0 %v111
  %149 = vmatpush.msra.mxu0 %v110
  %150 = vmatpush.msra.mxu0 %v109
  %151 = vmatpush.msra.mxu0 %v108
  %152 = vmatpush.msra.mxu0 %v107
  %153 = vmatpush.msra.mxu0 %v106
  %154 = vmatmul.f32.gmra.mxu0 %v64
  %v155 = vpop.f32.mrf.mxu0
  %v156 = vadd.f32 0.0, %v155
  %157 = vmatmul.f32.gmra.mxu0 %v66
  %v158 = vpop.f32.mrf.mxu0
  %v159 = vadd.f32 0.0, %v158
  %160 = vmatmul.f32.gmra.mxu0 %v68
  %v161 = vpop.f32.mrf.mxu0
  %v162 = vadd.f32 0.0, %v161
  %163 = vmatmul.f32.gmra.mxu0 %v70
  %v164 = vpop.f32.mrf.mxu0
  %v165 = vadd.f32 0.0, %v164
  %166 = vmatmul.f32.gmra.mxu0 %v72
  %v167 = vpop.f32.mrf.mxu0
  %v168 = vadd.f32 0.0, %v167
  %169 = vmatmul.f32.gmra.mxu0 %v74
  %v170 = vpop.f32.mrf.mxu0
  %v171 = vadd.f32 0.0, %v170
  %172 = vmatmul.f32.gmra.mxu0 %v76
  %v173 = vpop.f32.mrf.mxu0
  %v174 = vadd.f32 0.0, %v173
  %175 = vmatmul.f32.gmra.mxu0 %v78
  %v176 = vpop.f32.mrf.mxu0
  %v177 = vadd.f32 0.0, %v176
  %178 = vmatmul.f32.gmra.mxu0 %v80
  %v179 = vpop.f32.mrf.mxu0
  %v180 = vadd.f32 0.0, %v179
  %181 = vmatmul.f32.gmra.mxu0 %v82
  %v182 = vpop.f32.mrf.mxu0
  %v183 = vadd.f32 0.0, %v182
  %184 = vmatmul.f32.gmra.mxu0 %v84
  %v185 = vpop.f32.mrf.mxu0
  %v186 = vadd.f32 0.0, %v185
  %187 = vmatmul.f32.gmra.mxu0 %v86
  %v188 = vpop.f32.mrf.mxu0
  %v189 = vadd.f32 0.0, %v188
  %190 = vmatmul.f32.gmra.mxu0 %v88
  %v191 = vpop.f32.mrf.mxu0
  %v192 = vadd.f32 0.0, %v191
  %193 = vmatmul.f32.gmra.mxu0 %v90
  %v194 = vpop.f32.mrf.mxu0
  %v195 = vadd.f32 0.0, %v194
  %196 = vmatmul.f32.gmra.mxu0 %v92
  %v197 = vpop.f32.mrf.mxu0
  %v198 = vadd.f32 0.0, %v197
  %199 = vmatmul.f32.gmra.mxu0 %v94
  %v200 = vpop.f32.mrf.mxu0
  %v201 = vadd.f32 0.0, %v200
  %202 = vmatmul.f32.gmra.mxu0 %v96
  %v203 = vpop.f32.mrf.mxu0
  %v204 = vadd.f32 0.0, %v203
  %205 = vmatmul.f32.gmra.mxu0 %v98
  %v206 = vpop.f32.mrf.mxu0
  %v207 = vadd.f32 0.0, %v206
  %208 = vmatmul.f32.gmra.mxu0 %v100
  %v209 = vpop.f32.mrf.mxu0
  %v210 = vadd.f32 0.0, %v209
  %211 = vmatmul.f32.gmra.mxu0 %v102
  %v212 = vpop.f32.mrf.mxu0
  %v213 = vadd.f32 0.0, %v212
  %214 = vmatmul.f32.gmra.mxu0 %v104
  %v215 = vpop.f32.mrf.mxu0
  %v216 = vadd.f32 0.0, %v215
  %217 = vdwg.mxu0
  %218 = vmatpush.msra.mxu0 %v137
  %219 = vmatpush.msra.mxu0 %v136
  %220 = vmatpush.msra.mxu0 %v135
  %221 = vmatpush.msra.mxu0 %v134
  %222 = vmatpush.msra.mxu0 %v133
  %223 = vmatpush.msra.mxu0 %v132
  %224 = vmatpush.msra.mxu0 %v131
  %225 = vmatpush.msra.mxu0 %v130
  %226 = vmatpush.msra.mxu0 %v129
  %227 = vmatpush.msra.mxu0 %v128
  %228 = vmatpush.msra.mxu0 %v127
  %229 = vmatpush.msra.mxu0 %v126
  %230 = vmatpush.msra.mxu0 %v125
  %231 = vmatpush.msra.mxu0 %v124
  %232 = vmatpush.msra.mxu0 %v123
  %233 = vmatpush.msra.mxu0 %v122
  %234 = vmatmul.f32.gmra.mxu0 %v65
  %v235 = vpop.f32.mrf.mxu0
  %v236 = vadd.f32 %v156, %v235
  %237 = vmatmul.f32.gmra.mxu0 %v67
  %v238 = vpop.f32.mrf.mxu0
  %v239 = vadd.f32 %v159, %v238
  %240 = vmatmul.f32.gmra.mxu0 %v69
  %v241 = vpop.f32.mrf.mxu0
  %v242 = vadd.f32 %v162, %v241
  %243 = vmatmul.f32.gmra.mxu0 %v71
  %v244 = vpop.f32.mrf.mxu0
  %v245 = vadd.f32 %v165, %v244
  %246 = vmatmul.f32.gmra.mxu0 %v73
  %v247 = vpop.f32.mrf.mxu0
  %v248 = vadd.f32 %v168, %v247
  %249 = vmatmul.f32.gmra.mxu0 %v75
  %v250 = vpop.f32.mrf.mxu0
  %v251 = vadd.f32 %v171, %v250
  %252 = vmatmul.f32.gmra.mxu0 %v77
  %v253 = vpop.f32.mrf.mxu0
  %v254 = vadd.f32 %v174, %v253
  %255 = vmatmul.f32.gmra.mxu0 %v79
  %v256 = vpop.f32.mrf.mxu0
  %v257 = vadd.f32 %v177, %v256
  %258 = vmatmul.f32.gmra.mxu0 %v81
  %v259 = vpop.f32.mrf.mxu0
  %v260 = vadd.f32 %v180, %v259
  %261 = vmatmul.f32.gmra.mxu0 %v83
  %v262 = vpop.f32.mrf.mxu0
  %v263 = vadd.f32 %v183, %v262
  %264 = vmatmul.f32.gmra.mxu0 %v85
  %v265 = vpop.f32.mrf.mxu0
  %v266 = vadd.f32 %v186, %v265
  %267 = vmatmul.f32.gmra.mxu0 %v87
  %v268 = vpop.f32.mrf.mxu0
  %v269 = vadd.f32 %v189, %v268
  %270 = vmatmul.f32.gmra.mxu0 %v89
  %v271 = vpop.f32.mrf.mxu0
  %v272 = vadd.f32 %v192, %v271
  %273 = vmatmul.f32.gmra.mxu0 %v91
  %v274 = vpop.f32.mrf.mxu0
  %v275 = vadd.f32 %v195, %v274
  %276 = vmatmul.f32.gmra.mxu0 %v93
  %v277 = vpop.f32.mrf.mxu0
  %v278 = vadd.f32 %v198, %v277
  %279 = vmatmul.f32.gmra.mxu0 %v95
  %v280 = vpop.f32.mrf.mxu0
  %v281 = vadd.f32 %v201, %v280
  %282 = vmatmul.f32.gmra.mxu0 %v97
  %v283 = vpop.f32.mrf.mxu0
  %v284 = vadd.f32 %v204, %v283
  %285 = vmatmul.f32.gmra.mxu0 %v99
  %v286 = vpop.f32.mrf.mxu0
  %v287 = vadd.f32 %v207, %v286
  %288 = vmatmul.f32.gmra.mxu0 %v101
  %v289 = vpop.f32.mrf.mxu0
  %v290 = vadd.f32 %v210, %v289
  %291 = vmatmul.f32.gmra.mxu0 %v103
  %v292 = vpop.f32.mrf.mxu0
  %v293 = vadd.f32 %v213, %v292
  %294 = vmatmul.f32.gmra.mxu0 %v105
  %v295 = vpop.f32.mrf.mxu0
  %v296 = vadd.f32 %v216, %v295
  %297 = vdwg.mxu0
  %v298 = vld [vmem:[%s2] sm:$0xff]
  %v299 = vld [vmem:[%s2 + $0x8] sm:$0xff]
  %v300 = vld [vmem:[%s2 + $0x10] sm:$0xff]
  %v301 = vld [vmem:[%s2 + $0x18] sm:$0xff]
  %v302 = vld [vmem:[%s2 + $0x20] sm:$0xff]
  %v303 = vld [vmem:[%s2 + $0x28] sm:$0xff]
  %v304 = vld [vmem:[%s2 + $0x30] sm:$0xff]
  %v305 = vld [vmem:[%s2 + $0x38] sm:$0xff]
  %v306 = vld [vmem:[%s2 + $0x40] sm:$0xff]
  %v307 = vld [vmem:[%s2 + $0x48] sm:$0xff]
  %v308 = vld [vmem:[%s2 + $0x50] sm:$0xff]
  %v309 = vld [vmem:[%s2 + $0x58] sm:$0xff]
  %v310 = vld [vmem:[%s2 + $0x60] sm:$0xff]
  %v311 = vld [vmem:[%s2 + $0x68] sm:$0xff]
  %v312 = vld [vmem:[%s2 + $0x70] sm:$0xff]
  %v313 = vld [vmem:[%s2 + $0x78] sm:$0xff]
  %v314 = vld [vmem:[%s2 + $0x80] sm:$0xff]
  %v315 = vld [vmem:[%s2 + $0x88] sm:$0xff]
  %v316 = vld [vmem:[%s2 + $0x90] sm:$0xff]
  %v317 = vld [vmem:[%s2 + $0x98] sm:$0xff]
  %v318 = vld [vmem:[%s2 + $0xa0] sm:$0xff]
  %v319 = vld [vmem:[%s2 + $0xa8] sm:$0xff]
  %v320 = vld [vmem:[%s2 + $0xb0] sm:$0xff]
  %v321 = vld [vmem:[%s2 + $0xb8] sm:$0xff]
  %v322 = vld [vmem:[%s2 + $0xc0] sm:$0xff]
  %v323 = vld [vmem:[%s2 + $0xc8] sm:$0xff]
  %v324 = vld [vmem:[%s2 + $0xd0] sm:$0xff]
  %v325 = vld [vmem:[%s2 + $0xd8] sm:$0xff]
  %v326 = vld [vmem:[%s2 + $0xe0] sm:$0xff]
  %v327 = vld [vmem:[%s2 + $0xe8] sm:$0xff]
  %v328 = vld [vmem:[%s2 + $0xf0] sm:$0xff]
  %v329 = vld [vmem:[%s2 + $0xf8] sm:$0xff]
  %s330 = scalar_lea.vmem %s3, 256
  %v331 = vld [vmem:[%s330] sm:$0xff]
  %v332 = vld [vmem:[%s330 + $0x8] sm:$0xff]
  %v333 = vld [vmem:[%s330 + $0x10] sm:$0xff]
  %v334 = vld [vmem:[%s330 + $0x18] sm:$0xff]
  %v335 = vld [vmem:[%s330 + $0x20] sm:$0xff]
  %v336 = vld [vmem:[%s330 + $0x28] sm:$0xff]
  %v337 = vld [vmem:[%s330 + $0x30] sm:$0xff]
  %v338 = vld [vmem:[%s330 + $0x38] sm:$0xff]
  %v339 = vld [vmem:[%s330 + $0x40] sm:$0xff]
  %v340 = vld [vmem:[%s330 + $0x48] sm:$0xff]
  %v341 = vld [vmem:[%s330 + $0x50] sm:$0xff]
  %v342 = vld [vmem:[%s330 + $0x58] sm:$0xff]
  %v343 = vld [vmem:[%s330 + $0x60] sm:$0xff]
  %v344 = vld [vmem:[%s330 + $0x68] sm:$0xff]
  %v345 = vld [vmem:[%s330 + $0x70] sm:$0xff]
  %v346 = vld [vmem:[%s330 + $0x78] sm:$0xff]
  %v347 = vld [vmem:[%s330 + $0x80] sm:$0xff]
  %v348 = vld [vmem:[%s330 + $0x88] sm:$0xff]
  %v349 = vld [vmem:[%s330 + $0x90] sm:$0xff]
  %v350 = vld [vmem:[%s330 + $0x98] sm:$0xff]
  %v351 = vld [vmem:[%s330 + $0xa0] sm:$0xff]
  %v352 = vld [vmem:[%s330 + $0xa8] sm:$0xff]
  %v353 = vld [vmem:[%s330 + $0xb0] sm:$0xff]
  %v354 = vld [vmem:[%s330 + $0xb8] sm:$0xff]
  %v355 = vld [vmem:[%s330 + $0xc0] sm:$0xff]
  %v356 = vld [vmem:[%s330 + $0xc8] sm:$0xff]
  %v357 = vld [vmem:[%s330 + $0xd0] sm:$0xff]
  %v358 = vld [vmem:[%s330 + $0xd8] sm:$0xff]
  %v359 = vld [vmem:[%s330 + $0xe0] sm:$0xff]
  %v360 = vld [vmem:[%s330 + $0xe8] sm:$0xff]
  %v361 = vld [vmem:[%s330 + $0xf0] sm:$0xff]
  %v362 = vld [vmem:[%s330 + $0xf8] sm:$0xff]
  %363 = vmatpush.msra.mxu0 %v346
  %364 = vmatpush.msra.mxu0 %v345
  %365 = vmatpush.msra.mxu0 %v344
  %366 = vmatpush.msra.mxu0 %v343
  %367 = vmatpush.msra.mxu0 %v342
  %368 = vmatpush.msra.mxu0 %v341
  %369 = vmatpush.msra.mxu0 %v340
  %370 = vmatpush.msra.mxu0 %v339
  %371 = vmatpush.msra.mxu0 %v338
  %372 = vmatpush.msra.mxu0 %v337
  %373 = vmatpush.msra.mxu0 %v336
  %374 = vmatpush.msra.mxu0 %v335
  %375 = vmatpush.msra.mxu0 %v334
  %376 = vmatpush.msra.mxu0 %v333
  %377 = vmatpush.msra.mxu0 %v332
  %378 = vmatpush.msra.mxu0 %v331
  %379 = vmatmul.f32.gmra.mxu0 %v64
  %v380 = vpop.f32.mrf.mxu0
  %v381 = vadd.f32 0.0, %v380
  %382 = vmatmul.f32.gmra.mxu0 %v66
  %v383 = vpop.f32.mrf.mxu0
  %v384 = vadd.f32 0.0, %v383
  %385 = vmatmul.f32.gmra.mxu0 %v68
  %v386 = vpop.f32.mrf.mxu0
  %v387 = vadd.f32 0.0, %v386
  %388 = vmatmul.f32.gmra.mxu0 %v70
  %v389 = vpop.f32.mrf.mxu0
  %v390 = vadd.f32 0.0, %v389
  %391 = vmatmul.f32.gmra.mxu0 %v72
  %v392 = vpop.f32.mrf.mxu0
  %v393 = vadd.f32 0.0, %v392
  %394 = vmatmul.f32.gmra.mxu0 %v74
  %v395 = vpop.f32.mrf.mxu0
  %v396 = vadd.f32 0.0, %v395
  %397 = vmatmul.f32.gmra.mxu0 %v76
  %v398 = vpop.f32.mrf.mxu0
  %v399 = vadd.f32 0.0, %v398
  %400 = vmatmul.f32.gmra.mxu0 %v78
  %v401 = vpop.f32.mrf.mxu0
  %v402 = vadd.f32 0.0, %v401
  %403 = vmatmul.f32.gmra.mxu0 %v80
  %v404 = vpop.f32.mrf.mxu0
  %v405 = vadd.f32 0.0, %v404
  %406 = vmatmul.f32.gmra.mxu0 %v82
  %v407 = vpop.f32.mrf.mxu0
  %v408 = vadd.f32 0.0, %v407
  %409 = vmatmul.f32.gmra.mxu0 %v84
  %v410 = vpop.f32.mrf.mxu0
  %v411 = vadd.f32 0.0, %v410
  %412 = vmatmul.f32.gmra.mxu0 %v86
  %v413 = vpop.f32.mrf.mxu0
  %v414 = vadd.f32 0.0, %v413
  %415 = vmatmul.f32.gmra.mxu0 %v88
  %v416 = vpop.f32.mrf.mxu0
  %v417 = vadd.f32 0.0, %v416
  %418 = vmatmul.f32.gmra.mxu0 %v90
  %v419 = vpop.f32.mrf.mxu0
  %v420 = vadd.f32 0.0, %v419
  %421 = vmatmul.f32.gmra.mxu0 %v92
  %v422 = vpop.f32.mrf.mxu0
  %v423 = vadd.f32 0.0, %v422
  %424 = vmatmul.f32.gmra.mxu0 %v94
  %v425 = vpop.f32.mrf.mxu0
  %v426 = vadd.f32 0.0, %v425
  %427 = vmatmul.f32.gmra.mxu0 %v96
  %v428 = vpop.f32.mrf.mxu0
  %v429 = vadd.f32 0.0, %v428
  %430 = vmatmul.f32.gmra.mxu0 %v98
  %v431 = vpop.f32.mrf.mxu0
  %v432 = vadd.f32 0.0, %v431
  %433 = vmatmul.f32.gmra.mxu0 %v100
  %v434 = vpop.f32.mrf.mxu0
  %v435 = vadd.f32 0.0, %v434
  %436 = vmatmul.f32.gmra.mxu0 %v102
  %v437 = vpop.f32.mrf.mxu0
  %v438 = vadd.f32 0.0, %v437
  %439 = vmatmul.f32.gmra.mxu0 %v104
  %v440 = vpop.f32.mrf.mxu0
  %v441 = vadd.f32 0.0, %v440
  %442 = vdwg.mxu0
  %443 = vmatpush.msra.mxu0 %v362
  %444 = vmatpush.msra.mxu0 %v361
  %445 = vmatpush.msra.mxu0 %v360
  %446 = vmatpush.msra.mxu0 %v359
  %447 = vmatpush.msra.mxu0 %v358
  %448 = vmatpush.msra.mxu0 %v357
  %449 = vmatpush.msra.mxu0 %v356
  %450 = vmatpush.msra.mxu0 %v355
  %451 = vmatpush.msra.mxu0 %v354
  %452 = vmatpush.msra.mxu0 %v353
  %453 = vmatpush.msra.mxu0 %v352
  %454 = vmatpush.msra.mxu0 %v351
  %455 = vmatpush.msra.mxu0 %v350
  %456 = vmatpush.msra.mxu0 %v349
  %457 = vmatpush.msra.mxu0 %v348
  %458 = vmatpush.msra.mxu0 %v347
  %459 = vmatmul.f32.gmra.mxu0 %v65
  %v460 = vpop.f32.mrf.mxu0
  %v461 = vadd.f32 %v381, %v460
  %462 = vmatmul.f32.gmra.mxu0 %v67
  %v463 = vpop.f32.mrf.mxu0
  %v464 = vadd.f32 %v384, %v463
  %465 = vmatmul.f32.gmra.mxu0 %v69
  %v466 = vpop.f32.mrf.mxu0
  %v467 = vadd.f32 %v387, %v466
  %468 = vmatmul.f32.gmra.mxu0 %v71
  %v469 = vpop.f32.mrf.mxu0
  %v470 = vadd.f32 %v390, %v469
  %471 = vmatmul.f32.gmra.mxu0 %v73
  %v472 = vpop.f32.mrf.mxu0
  %v473 = vadd.f32 %v393, %v472
  %474 = vmatmul.f32.gmra.mxu0 %v75
  %v475 = vpop.f32.mrf.mxu0
  %v476 = vadd.f32 %v396, %v475
  %477 = vmatmul.f32.gmra.mxu0 %v77
  %v478 = vpop.f32.mrf.mxu0
  %v479 = vadd.f32 %v399, %v478
  %480 = vmatmul.f32.gmra.mxu0 %v79
  %v481 = vpop.f32.mrf.mxu0
  %v482 = vadd.f32 %v402, %v481
  %483 = vmatmul.f32.gmra.mxu0 %v81
  %v484 = vpop.f32.mrf.mxu0
  %v485 = vadd.f32 %v405, %v484
  %486 = vmatmul.f32.gmra.mxu0 %v83
  %v487 = vpop.f32.mrf.mxu0
  %v488 = vadd.f32 %v408, %v487
  %489 = vmatmul.f32.gmra.mxu0 %v85
  %v490 = vpop.f32.mrf.mxu0
  %v491 = vadd.f32 %v411, %v490
  %492 = vmatmul.f32.gmra.mxu0 %v87
  %v493 = vpop.f32.mrf.mxu0
  %v494 = vadd.f32 %v414, %v493
  %495 = vmatmul.f32.gmra.mxu0 %v89
  %v496 = vpop.f32.mrf.mxu0
  %v497 = vadd.f32 %v417, %v496
  %498 = vmatmul.f32.gmra.mxu0 %v91
  %v499 = vpop.f32.mrf.mxu0
  %v500 = vadd.f32 %v420, %v499
  %501 = vmatmul.f32.gmra.mxu0 %v93
  %v502 = vpop.f32.mrf.mxu0
  %v503 = vadd.f32 %v423, %v502
  %504 = vmatmul.f32.gmra.mxu0 %v95
  %v505 = vpop.f32.mrf.mxu0
  %v506 = vadd.f32 %v426, %v505
  %507 = vmatmul.f32.gmra.mxu0 %v97
  %v508 = vpop.f32.mrf.mxu0
  %v509 = vadd.f32 %v429, %v508
  %510 = vmatmul.f32.gmra.mxu0 %v99
  %v511 = vpop.f32.mrf.mxu0
  %v512 = vadd.f32 %v432, %v511
  %513 = vmatmul.f32.gmra.mxu0 %v101
  %v514 = vpop.f32.mrf.mxu0
  %v515 = vadd.f32 %v435, %v514
  %516 = vmatmul.f32.gmra.mxu0 %v103
  %v517 = vpop.f32.mrf.mxu0
  %v518 = vadd.f32 %v438, %v517
  %519 = vmatmul.f32.gmra.mxu0 %v105
  %v520 = vpop.f32.mrf.mxu0
  %v521 = vadd.f32 %v441, %v520
  %522 = vdwg.mxu0
  %s523 = scalar_lea.vmem %s2, 256
  %v524 = vld [vmem:[%s523] sm:$0xff]
  %v525 = vld [vmem:[%s523 + $0x8] sm:$0xff]
  %v526 = vld [vmem:[%s523 + $0x10] sm:$0xff]
  %v527 = vld [vmem:[%s523 + $0x18] sm:$0xff]
  %v528 = vld [vmem:[%s523 + $0x20] sm:$0xff]
  %v529 = vld [vmem:[%s523 + $0x28] sm:$0xff]
  %v530 = vld [vmem:[%s523 + $0x30] sm:$0xff]
  %v531 = vld [vmem:[%s523 + $0x38] sm:$0xff]
  %v532 = vld [vmem:[%s523 + $0x40] sm:$0xff]
  %v533 = vld [vmem:[%s523 + $0x48] sm:$0xff]
  %v534 = vld [vmem:[%s523 + $0x50] sm:$0xff]
  %v535 = vld [vmem:[%s523 + $0x58] sm:$0xff]
  %v536 = vld [vmem:[%s523 + $0x60] sm:$0xff]
  %v537 = vld [vmem:[%s523 + $0x68] sm:$0xff]
  %v538 = vld [vmem:[%s523 + $0x70] sm:$0xff]
  %v539 = vld [vmem:[%s523 + $0x78] sm:$0xff]
  %v540 = vld [vmem:[%s523 + $0x80] sm:$0xff]
  %v541 = vld [vmem:[%s523 + $0x88] sm:$0xff]
  %v542 = vld [vmem:[%s523 + $0x90] sm:$0xff]
  %v543 = vld [vmem:[%s523 + $0x98] sm:$0xff]
  %v544 = vld [vmem:[%s523 + $0xa0] sm:$0xff]
  %v545 = vld [vmem:[%s523 + $0xa8] sm:$0xff]
  %v546 = vld [vmem:[%s523 + $0xb0] sm:$0xff]
  %v547 = vld [vmem:[%s523 + $0xb8] sm:$0xff]
  %v548 = vld [vmem:[%s523 + $0xc0] sm:$0xff]
  %v549 = vld [vmem:[%s523 + $0xc8] sm:$0xff]
  %v550 = vld [vmem:[%s523 + $0xd0] sm:$0xff]
  %v551 = vld [vmem:[%s523 + $0xd8] sm:$0xff]
  %v552 = vld [vmem:[%s523 + $0xe0] sm:$0xff]
  %v553 = vld [vmem:[%s523 + $0xe8] sm:$0xff]
  %v554 = vld [vmem:[%s523 + $0xf0] sm:$0xff]
  %v555 = vld [vmem:[%s523 + $0xf8] sm:$0xff]
  %vm556 = vcmask 277504
  %v558 = vsel %vm556, %v525, 0
  %v561 = vsel %vm556, %v527, 0
  %v564 = vsel %vm556, %v529, 0
  %v567 = vsel %vm556, %v531, 0
  %v570 = vsel %vm556, %v533, 0
  %v573 = vsel %vm556, %v535, 0
  %v576 = vsel %vm556, %v537, 0
  %v579 = vsel %vm556, %v539, 0
  %v582 = vsel %vm556, %v541, 0
  %v585 = vsel %vm556, %v543, 0
  %v588 = vsel %vm556, %v545, 0
  %v591 = vsel %vm556, %v547, 0
  %v594 = vsel %vm556, %v549, 0
  %v597 = vsel %vm556, %v551, 0
  %v600 = vsel %vm556, %v553, 0
  %v603 = vsel %vm556, %v555, 0
  %vm605 = vcmask 1041408
  %v607 = vsel %vm605, %v521, 0
  %609 = vmatpush.msra.mxu0 %v506
  %610 = vmatpush.msra.mxu0 %v503
  %611 = vmatpush.msra.mxu0 %v500
  %612 = vmatpush.msra.mxu0 %v497
  %613 = vmatpush.msra.mxu0 %v494
  %614 = vmatpush.msra.mxu0 %v491
  %615 = vmatpush.msra.mxu0 %v488
  %616 = vmatpush.msra.mxu0 %v485
  %617 = vmatpush.msra.mxu0 %v482
  %618 = vmatpush.msra.mxu0 %v479
  %619 = vmatpush.msra.mxu0 %v476
  %620 = vmatpush.msra.mxu0 %v473
  %621 = vmatpush.msra.mxu0 %v470
  %622 = vmatpush.msra.mxu0 %v467
  %623 = vmatpush.msra.mxu0 %v464
  %624 = vmatpush.msra.mxu0 %v461
  %625 = vmatmul.f32.gmra.mxu0 %v524
  %v626 = vpop.f32.mrf.mxu0
  %v627 = vadd.f32 0.0, %v626
  %628 = vmatmul.f32.gmra.mxu0 %v526
  %v629 = vpop.f32.mrf.mxu0
  %v630 = vadd.f32 0.0, %v629
  %631 = vmatmul.f32.gmra.mxu0 %v528
  %v632 = vpop.f32.mrf.mxu0
  %v633 = vadd.f32 0.0, %v632
  %634 = vmatmul.f32.gmra.mxu0 %v530
  %v635 = vpop.f32.mrf.mxu0
  %v636 = vadd.f32 0.0, %v635
  %637 = vmatmul.f32.gmra.mxu0 %v532
  %v638 = vpop.f32.mrf.mxu0
  %v639 = vadd.f32 0.0, %v638
  %640 = vmatmul.f32.gmra.mxu0 %v534
  %v641 = vpop.f32.mrf.mxu0
  %v642 = vadd.f32 0.0, %v641
  %643 = vmatmul.f32.gmra.mxu0 %v536
  %v644 = vpop.f32.mrf.mxu0
  %v645 = vadd.f32 0.0, %v644
  %646 = vmatmul.f32.gmra.mxu0 %v538
  %v647 = vpop.f32.mrf.mxu0
  %v648 = vadd.f32 0.0, %v647
  %649 = vmatmul.f32.gmra.mxu0 %v540
  %v650 = vpop.f32.mrf.mxu0
  %v651 = vadd.f32 0.0, %v650
  %652 = vmatmul.f32.gmra.mxu0 %v542
  %v653 = vpop.f32.mrf.mxu0
  %v654 = vadd.f32 0.0, %v653
  %655 = vmatmul.f32.gmra.mxu0 %v544
  %v656 = vpop.f32.mrf.mxu0
  %v657 = vadd.f32 0.0, %v656
  %658 = vmatmul.f32.gmra.mxu0 %v546
  %v659 = vpop.f32.mrf.mxu0
  %v660 = vadd.f32 0.0, %v659
  %661 = vmatmul.f32.gmra.mxu0 %v548
  %v662 = vpop.f32.mrf.mxu0
  %v663 = vadd.f32 0.0, %v662
  %664 = vmatmul.f32.gmra.mxu0 %v550
  %v665 = vpop.f32.mrf.mxu0
  %v666 = vadd.f32 0.0, %v665
  %667 = vmatmul.f32.gmra.mxu0 %v552
  %v668 = vpop.f32.mrf.mxu0
  %v669 = vadd.f32 0.0, %v668
  %670 = vmatmul.f32.gmra.mxu0 %v554
  %v671 = vpop.f32.mrf.mxu0
  %v672 = vadd.f32 0.0, %v671
  %673 = vdwg.mxu0
  %674 = vmatpush.msra.mxu0 0.0
  %675 = vmatpush.msra.mxu0 0.0
  %676 = vmatpush.msra.mxu0 0.0
  %677 = vmatpush.msra.mxu0 0.0
  %678 = vmatpush.msra.mxu0 0.0
  %679 = vmatpush.msra.mxu0 0.0
  %680 = vmatpush.msra.mxu0 0.0
  %681 = vmatpush.msra.mxu0 0.0
  %682 = vmatpush.msra.mxu0 0.0
  %683 = vmatpush.msra.mxu0 0.0
  %684 = vmatpush.msra.mxu0 0.0
  %685 = vmatpush.msra.mxu0 %v607
  %686 = vmatpush.msra.mxu0 %v518
  %687 = vmatpush.msra.mxu0 %v515
  %688 = vmatpush.msra.mxu0 %v512
  %689 = vmatpush.msra.mxu0 %v509
  %690 = vmatmul.f32.gmra.mxu0 %v558
  %v691 = vpop.f32.mrf.mxu0
  %v692 = vadd.f32 %v627, %v691
  %693 = vmatmul.f32.gmra.mxu0 %v561
  %v694 = vpop.f32.mrf.mxu0
  %v695 = vadd.f32 %v630, %v694
  %696 = vmatmul.f32.gmra.mxu0 %v564
  %v697 = vpop.f32.mrf.mxu0
  %v698 = vadd.f32 %v633, %v697
  %699 = vmatmul.f32.gmra.mxu0 %v567
  %v700 = vpop.f32.mrf.mxu0
  %v701 = vadd.f32 %v636, %v700
  %702 = vmatmul.f32.gmra.mxu0 %v570
  %v703 = vpop.f32.mrf.mxu0
  %v704 = vadd.f32 %v639, %v703
  %705 = vmatmul.f32.gmra.mxu0 %v573
  %v706 = vpop.f32.mrf.mxu0
  %v707 = vadd.f32 %v642, %v706
  %708 = vmatmul.f32.gmra.mxu0 %v576
  %v709 = vpop.f32.mrf.mxu0
  %v710 = vadd.f32 %v645, %v709
  %711 = vmatmul.f32.gmra.mxu0 %v579
  %v712 = vpop.f32.mrf.mxu0
  %v713 = vadd.f32 %v648, %v712
  %714 = vmatmul.f32.gmra.mxu0 %v582
  %v715 = vpop.f32.mrf.mxu0
  %v716 = vadd.f32 %v651, %v715
  %717 = vmatmul.f32.gmra.mxu0 %v585
  %v718 = vpop.f32.mrf.mxu0
  %v719 = vadd.f32 %v654, %v718
  %720 = vmatmul.f32.gmra.mxu0 %v588
  %v721 = vpop.f32.mrf.mxu0
  %v722 = vadd.f32 %v657, %v721
  %723 = vmatmul.f32.gmra.mxu0 %v591
  %v724 = vpop.f32.mrf.mxu0
  %v725 = vadd.f32 %v660, %v724
  %726 = vmatmul.f32.gmra.mxu0 %v594
  %v727 = vpop.f32.mrf.mxu0
  %v728 = vadd.f32 %v663, %v727
  %729 = vmatmul.f32.gmra.mxu0 %v597
  %v730 = vpop.f32.mrf.mxu0
  %v731 = vadd.f32 %v666, %v730
  %732 = vmatmul.f32.gmra.mxu0 %v600
  %v733 = vpop.f32.mrf.mxu0
  %v734 = vadd.f32 %v669, %v733
  %735 = vmatmul.f32.gmra.mxu0 %v603
  %v736 = vpop.f32.mrf.mxu0
  %v737 = vadd.f32 %v672, %v736
  %738 = vdwg.mxu0
  %v740 = vsel %vm556, %v299, 0
  %v743 = vsel %vm556, %v301, 0
  %v746 = vsel %vm556, %v303, 0
  %v749 = vsel %vm556, %v305, 0
  %v752 = vsel %vm556, %v307, 0
  %v755 = vsel %vm556, %v309, 0
  %v758 = vsel %vm556, %v311, 0
  %v761 = vsel %vm556, %v313, 0
  %v764 = vsel %vm556, %v315, 0
  %v767 = vsel %vm556, %v317, 0
  %v770 = vsel %vm556, %v319, 0
  %v773 = vsel %vm556, %v321, 0
  %v776 = vsel %vm556, %v323, 0
  %v779 = vsel %vm556, %v325, 0
  %v782 = vsel %vm556, %v327, 0
  %v785 = vsel %vm556, %v329, 0
  %v788 = vsel %vm605, %v296, 0
  %790 = vmatpush.msra.mxu0 %v281
  %791 = vmatpush.msra.mxu0 %v278
  %792 = vmatpush.msra.mxu0 %v275
  %793 = vmatpush.msra.mxu0 %v272
  %794 = vmatpush.msra.mxu0 %v269
  %795 = vmatpush.msra.mxu0 %v266
  %796 = vmatpush.msra.mxu0 %v263
  %797 = vmatpush.msra.mxu0 %v260
  %798 = vmatpush.msra.mxu0 %v257
  %799 = vmatpush.msra.mxu0 %v254
  %800 = vmatpush.msra.mxu0 %v251
  %801 = vmatpush.msra.mxu0 %v248
  %802 = vmatpush.msra.mxu0 %v245
  %803 = vmatpush.msra.mxu0 %v242
  %804 = vmatpush.msra.mxu0 %v239
  %805 = vmatpush.msra.mxu0 %v236
  %806 = vmatmul.f32.gmra.mxu0 %v298
  %v807 = vpop.f32.mrf.mxu0
  %v808 = vadd.f32 %v692, %v807
  %809 = vmatmul.f32.gmra.mxu0 %v300
  %v810 = vpop.f32.mrf.mxu0
  %v811 = vadd.f32 %v695, %v810
  %812 = vmatmul.f32.gmra.mxu0 %v302
  %v813 = vpop.f32.mrf.mxu0
  %v814 = vadd.f32 %v698, %v813
  %815 = vmatmul.f32.gmra.mxu0 %v304
  %v816 = vpop.f32.mrf.mxu0
  %v817 = vadd.f32 %v701, %v816
  %818 = vmatmul.f32.gmra.mxu0 %v306
  %v819 = vpop.f32.mrf.mxu0
  %v820 = vadd.f32 %v704, %v819
  %821 = vmatmul.f32.gmra.mxu0 %v308
  %v822 = vpop.f32.mrf.mxu0
  %v823 = vadd.f32 %v707, %v822
  %824 = vmatmul.f32.gmra.mxu0 %v310
  %v825 = vpop.f32.mrf.mxu0
  %v826 = vadd.f32 %v710, %v825
  %827 = vmatmul.f32.gmra.mxu0 %v312
  %v828 = vpop.f32.mrf.mxu0
  %v829 = vadd.f32 %v713, %v828
  %830 = vmatmul.f32.gmra.mxu0 %v314
  %v831 = vpop.f32.mrf.mxu0
  %v832 = vadd.f32 %v716, %v831
  %833 = vmatmul.f32.gmra.mxu0 %v316
  %v834 = vpop.f32.mrf.mxu0
  %v835 = vadd.f32 %v719, %v834
  %836 = vmatmul.f32.gmra.mxu0 %v318
  %v837 = vpop.f32.mrf.mxu0
  %v838 = vadd.f32 %v722, %v837
  %839 = vmatmul.f32.gmra.mxu0 %v320
  %v840 = vpop.f32.mrf.mxu0
  %v841 = vadd.f32 %v725, %v840
  %842 = vmatmul.f32.gmra.mxu0 %v322
  %v843 = vpop.f32.mrf.mxu0
  %v844 = vadd.f32 %v728, %v843
  %845 = vmatmul.f32.gmra.mxu0 %v324
  %v846 = vpop.f32.mrf.mxu0
  %v847 = vadd.f32 %v731, %v846
  %848 = vmatmul.f32.gmra.mxu0 %v326
  %v849 = vpop.f32.mrf.mxu0
  %v850 = vadd.f32 %v734, %v849
  %851 = vmatmul.f32.gmra.mxu0 %v328
  %v852 = vpop.f32.mrf.mxu0
  %v853 = vadd.f32 %v737, %v852
  %854 = vdwg.mxu0
  %855 = vmatpush.msra.mxu0 0.0
  %856 = vmatpush.msra.mxu0 0.0
  %857 = vmatpush.msra.mxu0 0.0
  %858 = vmatpush.msra.mxu0 0.0
  %859 = vmatpush.msra.mxu0 0.0
  %860 = vmatpush.msra.mxu0 0.0
  %861 = vmatpush.msra.mxu0 0.0
  %862 = vmatpush.msra.mxu0 0.0
  %863 = vmatpush.msra.mxu0 0.0
  %864 = vmatpush.msra.mxu0 0.0
  %865 = vmatpush.msra.mxu0 0.0
  %866 = vmatpush.msra.mxu0 %v788
  %867 = vmatpush.msra.mxu0 %v293
  %868 = vmatpush.msra.mxu0 %v290
  %869 = vmatpush.msra.mxu0 %v287
  %870 = vmatpush.msra.mxu0 %v284
  %871 = vmatmul.f32.gmra.mxu0 %v740
  %v872 = vpop.f32.mrf.mxu0
  %v873 = vadd.f32 %v808, %v872
  %874 = vmatmul.f32.gmra.mxu0 %v743
  %v875 = vpop.f32.mrf.mxu0
  %v876 = vadd.f32 %v811, %v875
  %877 = vmatmul.f32.gmra.mxu0 %v746
  %v878 = vpop.f32.mrf.mxu0
  %v879 = vadd.f32 %v814, %v878
  %880 = vmatmul.f32.gmra.mxu0 %v749
  %v881 = vpop.f32.mrf.mxu0
  %v882 = vadd.f32 %v817, %v881
  %883 = vmatmul.f32.gmra.mxu0 %v752
  %v884 = vpop.f32.mrf.mxu0
  %v885 = vadd.f32 %v820, %v884
  %886 = vmatmul.f32.gmra.mxu0 %v755
  %v887 = vpop.f32.mrf.mxu0
  %v888 = vadd.f32 %v823, %v887
  %889 = vmatmul.f32.gmra.mxu0 %v758
  %v890 = vpop.f32.mrf.mxu0
  %v891 = vadd.f32 %v826, %v890
  %892 = vmatmul.f32.gmra.mxu0 %v761
  %v893 = vpop.f32.mrf.mxu0
  %v894 = vadd.f32 %v829, %v893
  %895 = vmatmul.f32.gmra.mxu0 %v764
  %v896 = vpop.f32.mrf.mxu0
  %v897 = vadd.f32 %v832, %v896
  %898 = vmatmul.f32.gmra.mxu0 %v767
  %v899 = vpop.f32.mrf.mxu0
  %v900 = vadd.f32 %v835, %v899
  %901 = vmatmul.f32.gmra.mxu0 %v770
  %v902 = vpop.f32.mrf.mxu0
  %v903 = vadd.f32 %v838, %v902
  %904 = vmatmul.f32.gmra.mxu0 %v773
  %v905 = vpop.f32.mrf.mxu0
  %v906 = vadd.f32 %v841, %v905
  %907 = vmatmul.f32.gmra.mxu0 %v776
  %v908 = vpop.f32.mrf.mxu0
  %v909 = vadd.f32 %v844, %v908
  %910 = vmatmul.f32.gmra.mxu0 %v779
  %v911 = vpop.f32.mrf.mxu0
  %v912 = vadd.f32 %v847, %v911
  %913 = vmatmul.f32.gmra.mxu0 %v782
  %v914 = vpop.f32.mrf.mxu0
  %v915 = vadd.f32 %v850, %v914
  %916 = vmatmul.f32.gmra.mxu0 %v785
  %v917 = vpop.f32.mrf.mxu0
  %v918 = vadd.f32 %v853, %v917
  %919 = vdwg.mxu0
  %s920 = scalar_lea.vmem %s3, 512
  %v921 = vld [vmem:[%s920] sm:$0xff]
  %v922 = vld [vmem:[%s920 + $0x8] sm:$0xff]
  %v923 = vld [vmem:[%s920 + $0x10] sm:$0xff]
  %v924 = vld [vmem:[%s920 + $0x18] sm:$0xff]
  %v925 = vld [vmem:[%s920 + $0x20] sm:$0xff]
  %v926 = vld [vmem:[%s920 + $0x28] sm:$0xff]
  %v927 = vld [vmem:[%s920 + $0x30] sm:$0xff]
  %v928 = vld [vmem:[%s920 + $0x38] sm:$0xff]
  %v929 = vld [vmem:[%s920 + $0x40] sm:$0xff]
  %v930 = vld [vmem:[%s920 + $0x48] sm:$0xff]
  %v931 = vld [vmem:[%s920 + $0x50] sm:$0xff]
  %v932 = vld [vmem:[%s920 + $0x58] sm:$0xff]
  %v933 = vld [vmem:[%s920 + $0x60] sm:$0xff]
  %v934 = vld [vmem:[%s920 + $0x68] sm:$0xff]
  %v935 = vld [vmem:[%s920 + $0x70] sm:$0xff]
  %v936 = vld [vmem:[%s920 + $0x78] sm:$0xff]
  %v937 = vld [vmem:[%s920 + $0x80] sm:$0xff]
  %v938 = vld [vmem:[%s920 + $0x88] sm:$0xff]
  %v939 = vld [vmem:[%s920 + $0x90] sm:$0xff]
  %v940 = vld [vmem:[%s920 + $0x98] sm:$0xff]
  %v941 = vld [vmem:[%s920 + $0xa0] sm:$0xff]
  %v942 = vld [vmem:[%s920 + $0xa8] sm:$0xff]
  %v943 = vld [vmem:[%s920 + $0xb0] sm:$0xff]
  %v944 = vld [vmem:[%s920 + $0xb8] sm:$0xff]
  %v945 = vld [vmem:[%s920 + $0xc0] sm:$0xff]
  %v946 = vld [vmem:[%s920 + $0xc8] sm:$0xff]
  %v947 = vld [vmem:[%s920 + $0xd0] sm:$0xff]
  %v948 = vld [vmem:[%s920 + $0xd8] sm:$0xff]
  %v949 = vld [vmem:[%s920 + $0xe0] sm:$0xff]
  %v950 = vld [vmem:[%s920 + $0xe8] sm:$0xff]
  %v951 = vld [vmem:[%s920 + $0xf0] sm:$0xff]
  %v952 = vld [vmem:[%s920 + $0xf8] sm:$0xff]
  %953 = vmatpush.msra.mxu0 %v936
  %954 = vmatpush.msra.mxu0 %v935
  %955 = vmatpush.msra.mxu0 %v934
  %956 = vmatpush.msra.mxu0 %v933
  %957 = vmatpush.msra.mxu0 %v932
  %958 = vmatpush.msra.mxu0 %v931
  %959 = vmatpush.msra.mxu0 %v930
  %960 = vmatpush.msra.mxu0 %v929
  %961 = vmatpush.msra.mxu0 %v928
  %962 = vmatpush.msra.mxu0 %v927
  %963 = vmatpush.msra.mxu0 %v926
  %964 = vmatpush.msra.mxu0 %v925
  %965 = vmatpush.msra.mxu0 %v924
  %966 = vmatpush.msra.mxu0 %v923
  %967 = vmatpush.msra.mxu0 %v922
  %968 = vmatpush.msra.mxu0 %v921
  %969 = vmatmul.f32.gmra.mxu0 %v64
  %v970 = vpop.f32.mrf.mxu0
  %v971 = vadd.f32 0.0, %v970
  %972 = vmatmul.f32.gmra.mxu0 %v66
  %v973 = vpop.f32.mrf.mxu0
  %v974 = vadd.f32 0.0, %v973
  %975 = vmatmul.f32.gmra.mxu0 %v68
  %v976 = vpop.f32.mrf.mxu0
  %v977 = vadd.f32 0.0, %v976
  %978 = vmatmul.f32.gmra.mxu0 %v70
  %v979 = vpop.f32.mrf.mxu0
  %v980 = vadd.f32 0.0, %v979
  %981 = vmatmul.f32.gmra.mxu0 %v72
  %v982 = vpop.f32.mrf.mxu0
  %v983 = vadd.f32 0.0, %v982
  %984 = vmatmul.f32.gmra.mxu0 %v74
  %v985 = vpop.f32.mrf.mxu0
  %v986 = vadd.f32 0.0, %v985
  %987 = vmatmul.f32.gmra.mxu0 %v76
  %v988 = vpop.f32.mrf.mxu0
  %v989 = vadd.f32 0.0, %v988
  %990 = vmatmul.f32.gmra.mxu0 %v78
  %v991 = vpop.f32.mrf.mxu0
  %v992 = vadd.f32 0.0, %v991
  %993 = vmatmul.f32.gmra.mxu0 %v80
  %v994 = vpop.f32.mrf.mxu0
  %v995 = vadd.f32 0.0, %v994
  %996 = vmatmul.f32.gmra.mxu0 %v82
  %v997 = vpop.f32.mrf.mxu0
  %v998 = vadd.f32 0.0, %v997
  %999 = vmatmul.f32.gmra.mxu0 %v84
  %v1000 = vpop.f32.mrf.mxu0
  %v1001 = vadd.f32 0.0, %v1000
  %1002 = vmatmul.f32.gmra.mxu0 %v86
  %v1003 = vpop.f32.mrf.mxu0
  %v1004 = vadd.f32 0.0, %v1003
  %1005 = vmatmul.f32.gmra.mxu0 %v88
  %v1006 = vpop.f32.mrf.mxu0
  %v1007 = vadd.f32 0.0, %v1006
  %1008 = vmatmul.f32.gmra.mxu0 %v90
  %v1009 = vpop.f32.mrf.mxu0
  %v1010 = vadd.f32 0.0, %v1009
  %1011 = vmatmul.f32.gmra.mxu0 %v92
  %v1012 = vpop.f32.mrf.mxu0
  %v1013 = vadd.f32 0.0, %v1012
  %1014 = vmatmul.f32.gmra.mxu0 %v94
  %v1015 = vpop.f32.mrf.mxu0
  %v1016 = vadd.f32 0.0, %v1015
  %1017 = vmatmul.f32.gmra.mxu0 %v96
  %v1018 = vpop.f32.mrf.mxu0
  %v1019 = vadd.f32 0.0, %v1018
  %1020 = vmatmul.f32.gmra.mxu0 %v98
  %v1021 = vpop.f32.mrf.mxu0
  %v1022 = vadd.f32 0.0, %v1021
  %1023 = vmatmul.f32.gmra.mxu0 %v100
  %v1024 = vpop.f32.mrf.mxu0
  %v1025 = vadd.f32 0.0, %v1024
  %1026 = vmatmul.f32.gmra.mxu0 %v102
  %v1027 = vpop.f32.mrf.mxu0
  %v1028 = vadd.f32 0.0, %v1027
  %1029 = vmatmul.f32.gmra.mxu0 %v104
  %v1030 = vpop.f32.mrf.mxu0
  %v1031 = vadd.f32 0.0, %v1030
  %1032 = vdwg.mxu0
  %1033 = vmatpush.msra.mxu0 %v952
  %1034 = vmatpush.msra.mxu0 %v951
  %1035 = vmatpush.msra.mxu0 %v950
  %1036 = vmatpush.msra.mxu0 %v949
  %1037 = vmatpush.msra.mxu0 %v948
  %1038 = vmatpush.msra.mxu0 %v947
  %1039 = vmatpush.msra.mxu0 %v946
  %1040 = vmatpush.msra.mxu0 %v945
  %1041 = vmatpush.msra.mxu0 %v944
  %1042 = vmatpush.msra.mxu0 %v943
  %1043 = vmatpush.msra.mxu0 %v942
  %1044 = vmatpush.msra.mxu0 %v941
  %1045 = vmatpush.msra.mxu0 %v940
  %1046 = vmatpush.msra.mxu0 %v939
  %1047 = vmatpush.msra.mxu0 %v938
  %1048 = vmatpush.msra.mxu0 %v937
  %1049 = vmatmul.f32.gmra.mxu0 %v65
  %v1050 = vpop.f32.mrf.mxu0
  %v1051 = vadd.f32 %v971, %v1050
  %1052 = vmatmul.f32.gmra.mxu0 %v67
  %v1053 = vpop.f32.mrf.mxu0
  %v1054 = vadd.f32 %v974, %v1053
  %1055 = vmatmul.f32.gmra.mxu0 %v69
  %v1056 = vpop.f32.mrf.mxu0
  %v1057 = vadd.f32 %v977, %v1056
  %1058 = vmatmul.f32.gmra.mxu0 %v71
  %v1059 = vpop.f32.mrf.mxu0
  %v1060 = vadd.f32 %v980, %v1059
  %1061 = vmatmul.f32.gmra.mxu0 %v73
  %v1062 = vpop.f32.mrf.mxu0
  %v1063 = vadd.f32 %v983, %v1062
  %1064 = vmatmul.f32.gmra.mxu0 %v75
  %v1065 = vpop.f32.mrf.mxu0
  %v1066 = vadd.f32 %v986, %v1065
  %1067 = vmatmul.f32.gmra.mxu0 %v77
  %v1068 = vpop.f32.mrf.mxu0
  %v1069 = vadd.f32 %v989, %v1068
  %1070 = vmatmul.f32.gmra.mxu0 %v79
  %v1071 = vpop.f32.mrf.mxu0
  %v1072 = vadd.f32 %v992, %v1071
  %1073 = vmatmul.f32.gmra.mxu0 %v81
  %v1074 = vpop.f32.mrf.mxu0
  %v1075 = vadd.f32 %v995, %v1074
  %1076 = vmatmul.f32.gmra.mxu0 %v83
  %v1077 = vpop.f32.mrf.mxu0
  %v1078 = vadd.f32 %v998, %v1077
  %1079 = vmatmul.f32.gmra.mxu0 %v85
  %v1080 = vpop.f32.mrf.mxu0
  %v1081 = vadd.f32 %v1001, %v1080
  %1082 = vmatmul.f32.gmra.mxu0 %v87
  %v1083 = vpop.f32.mrf.mxu0
  %v1084 = vadd.f32 %v1004, %v1083
  %1085 = vmatmul.f32.gmra.mxu0 %v89
  %v1086 = vpop.f32.mrf.mxu0
  %v1087 = vadd.f32 %v1007, %v1086
  %1088 = vmatmul.f32.gmra.mxu0 %v91
  %v1089 = vpop.f32.mrf.mxu0
  %v1090 = vadd.f32 %v1010, %v1089
  %1091 = vmatmul.f32.gmra.mxu0 %v93
  %v1092 = vpop.f32.mrf.mxu0
  %v1093 = vadd.f32 %v1013, %v1092
  %1094 = vmatmul.f32.gmra.mxu0 %v95
  %v1095 = vpop.f32.mrf.mxu0
  %v1096 = vadd.f32 %v1016, %v1095
  %1097 = vmatmul.f32.gmra.mxu0 %v97
  %v1098 = vpop.f32.mrf.mxu0
  %v1099 = vadd.f32 %v1019, %v1098
  %1100 = vmatmul.f32.gmra.mxu0 %v99
  %v1101 = vpop.f32.mrf.mxu0
  %v1102 = vadd.f32 %v1022, %v1101
  %1103 = vmatmul.f32.gmra.mxu0 %v101
  %v1104 = vpop.f32.mrf.mxu0
  %v1105 = vadd.f32 %v1025, %v1104
  %1106 = vmatmul.f32.gmra.mxu0 %v103
  %v1107 = vpop.f32.mrf.mxu0
  %v1108 = vadd.f32 %v1028, %v1107
  %1109 = vmatmul.f32.gmra.mxu0 %v105
  %v1110 = vpop.f32.mrf.mxu0
  %v1111 = vadd.f32 %v1031, %v1110
  %1112 = vdwg.mxu0
  %s1113 = scalar_lea.vmem %s2, 512
  %v1114 = vld [vmem:[%s1113] sm:$0xff]
  %v1115 = vld [vmem:[%s1113 + $0x8] sm:$0xff]
  %v1116 = vld [vmem:[%s1113 + $0x10] sm:$0xff]
  %v1117 = vld [vmem:[%s1113 + $0x18] sm:$0xff]
  %v1118 = vld [vmem:[%s1113 + $0x20] sm:$0xff]
  %v1119 = vld [vmem:[%s1113 + $0x28] sm:$0xff]
  %v1120 = vld [vmem:[%s1113 + $0x30] sm:$0xff]
  %v1121 = vld [vmem:[%s1113 + $0x38] sm:$0xff]
  %v1122 = vld [vmem:[%s1113 + $0x40] sm:$0xff]
  %v1123 = vld [vmem:[%s1113 + $0x48] sm:$0xff]
  %v1124 = vld [vmem:[%s1113 + $0x50] sm:$0xff]
  %v1125 = vld [vmem:[%s1113 + $0x58] sm:$0xff]
  %v1126 = vld [vmem:[%s1113 + $0x60] sm:$0xff]
  %v1127 = vld [vmem:[%s1113 + $0x68] sm:$0xff]
  %v1128 = vld [vmem:[%s1113 + $0x70] sm:$0xff]
  %v1129 = vld [vmem:[%s1113 + $0x78] sm:$0xff]
  %v1130 = vld [vmem:[%s1113 + $0x80] sm:$0xff]
  %v1131 = vld [vmem:[%s1113 + $0x88] sm:$0xff]
  %v1132 = vld [vmem:[%s1113 + $0x90] sm:$0xff]
  %v1133 = vld [vmem:[%s1113 + $0x98] sm:$0xff]
  %v1134 = vld [vmem:[%s1113 + $0xa0] sm:$0xff]
  %v1135 = vld [vmem:[%s1113 + $0xa8] sm:$0xff]
  %v1136 = vld [vmem:[%s1113 + $0xb0] sm:$0xff]
  %v1137 = vld [vmem:[%s1113 + $0xb8] sm:$0xff]
  %v1138 = vld [vmem:[%s1113 + $0xc0] sm:$0xff]
  %v1139 = vld [vmem:[%s1113 + $0xc8] sm:$0xff]
  %v1140 = vld [vmem:[%s1113 + $0xd0] sm:$0xff]
  %v1141 = vld [vmem:[%s1113 + $0xd8] sm:$0xff]
  %v1142 = vld [vmem:[%s1113 + $0xe0] sm:$0xff]
  %v1143 = vld [vmem:[%s1113 + $0xe8] sm:$0xff]
  %v1144 = vld [vmem:[%s1113 + $0xf0] sm:$0xff]
  %v1145 = vld [vmem:[%s1113 + $0xf8] sm:$0xff]
  %v1147 = vsel %vm556, %v1115, 0
  %v1150 = vsel %vm556, %v1117, 0
  %v1153 = vsel %vm556, %v1119, 0
  %v1156 = vsel %vm556, %v1121, 0
  %v1159 = vsel %vm556, %v1123, 0
  %v1162 = vsel %vm556, %v1125, 0
  %v1165 = vsel %vm556, %v1127, 0
  %v1168 = vsel %vm556, %v1129, 0
  %v1171 = vsel %vm556, %v1131, 0
  %v1174 = vsel %vm556, %v1133, 0
  %v1177 = vsel %vm556, %v1135, 0
  %v1180 = vsel %vm556, %v1137, 0
  %v1183 = vsel %vm556, %v1139, 0
  %v1186 = vsel %vm556, %v1141, 0
  %v1189 = vsel %vm556, %v1143, 0
  %v1192 = vsel %vm556, %v1145, 0
  %v1195 = vsel %vm605, %v1111, 0
  %1197 = vmatpush.msra.mxu0 %v1096
  %1198 = vmatpush.msra.mxu0 %v1093
  %1199 = vmatpush.msra.mxu0 %v1090
  %1200 = vmatpush.msra.mxu0 %v1087
  %1201 = vmatpush.msra.mxu0 %v1084
  %1202 = vmatpush.msra.mxu0 %v1081
  %1203 = vmatpush.msra.mxu0 %v1078
  %1204 = vmatpush.msra.mxu0 %v1075
  %1205 = vmatpush.msra.mxu0 %v1072
  %1206 = vmatpush.msra.mxu0 %v1069
  %1207 = vmatpush.msra.mxu0 %v1066
  %1208 = vmatpush.msra.mxu0 %v1063
  %1209 = vmatpush.msra.mxu0 %v1060
  %1210 = vmatpush.msra.mxu0 %v1057
  %1211 = vmatpush.msra.mxu0 %v1054
  %1212 = vmatpush.msra.mxu0 %v1051
  %1213 = vmatmul.f32.gmra.mxu0 %v1114
  %v1214 = vpop.f32.mrf.mxu0
  %v1215 = vadd.f32 0.0, %v1214
  %1216 = vmatmul.f32.gmra.mxu0 %v1116
  %v1217 = vpop.f32.mrf.mxu0
  %v1218 = vadd.f32 0.0, %v1217
  %1219 = vmatmul.f32.gmra.mxu0 %v1118
  %v1220 = vpop.f32.mrf.mxu0
  %v1221 = vadd.f32 0.0, %v1220
  %1222 = vmatmul.f32.gmra.mxu0 %v1120
  %v1223 = vpop.f32.mrf.mxu0
  %v1224 = vadd.f32 0.0, %v1223
  %1225 = vmatmul.f32.gmra.mxu0 %v1122
  %v1226 = vpop.f32.mrf.mxu0
  %v1227 = vadd.f32 0.0, %v1226
  %1228 = vmatmul.f32.gmra.mxu0 %v1124
  %v1229 = vpop.f32.mrf.mxu0
  %v1230 = vadd.f32 0.0, %v1229
  %1231 = vmatmul.f32.gmra.mxu0 %v1126
  %v1232 = vpop.f32.mrf.mxu0
  %v1233 = vadd.f32 0.0, %v1232
  %1234 = vmatmul.f32.gmra.mxu0 %v1128
  %v1235 = vpop.f32.mrf.mxu0
  %v1236 = vadd.f32 0.0, %v1235
  %1237 = vmatmul.f32.gmra.mxu0 %v1130
  %v1238 = vpop.f32.mrf.mxu0
  %v1239 = vadd.f32 0.0, %v1238
  %1240 = vmatmul.f32.gmra.mxu0 %v1132
  %v1241 = vpop.f32.mrf.mxu0
  %v1242 = vadd.f32 0.0, %v1241
  %1243 = vmatmul.f32.gmra.mxu0 %v1134
  %v1244 = vpop.f32.mrf.mxu0
  %v1245 = vadd.f32 0.0, %v1244
  %1246 = vmatmul.f32.gmra.mxu0 %v1136
  %v1247 = vpop.f32.mrf.mxu0
  %v1248 = vadd.f32 0.0, %v1247
  %1249 = vmatmul.f32.gmra.mxu0 %v1138
  %v1250 = vpop.f32.mrf.mxu0
  %v1251 = vadd.f32 0.0, %v1250
  %1252 = vmatmul.f32.gmra.mxu0 %v1140
  %v1253 = vpop.f32.mrf.mxu0
  %v1254 = vadd.f32 0.0, %v1253
  %1255 = vmatmul.f32.gmra.mxu0 %v1142
  %v1256 = vpop.f32.mrf.mxu0
  %v1257 = vadd.f32 0.0, %v1256
  %1258 = vmatmul.f32.gmra.mxu0 %v1144
  %v1259 = vpop.f32.mrf.mxu0
  %v1260 = vadd.f32 0.0, %v1259
  %1261 = vdwg.mxu0
  %1262 = vmatpush.msra.mxu0 0.0
  %1263 = vmatpush.msra.mxu0 0.0
  %1264 = vmatpush.msra.mxu0 0.0
  %1265 = vmatpush.msra.mxu0 0.0
  %1266 = vmatpush.msra.mxu0 0.0
  %1267 = vmatpush.msra.mxu0 0.0
  %1268 = vmatpush.msra.mxu0 0.0
  %1269 = vmatpush.msra.mxu0 0.0
  %1270 = vmatpush.msra.mxu0 0.0
  %1271 = vmatpush.msra.mxu0 0.0
  %1272 = vmatpush.msra.mxu0 0.0
  %1273 = vmatpush.msra.mxu0 %v1195
  %1274 = vmatpush.msra.mxu0 %v1108
  %1275 = vmatpush.msra.mxu0 %v1105
  %1276 = vmatpush.msra.mxu0 %v1102
  %1277 = vmatpush.msra.mxu0 %v1099
  %1278 = vmatmul.f32.gmra.mxu0 %v1147
  %v1279 = vpop.f32.mrf.mxu0
  %v1280 = vadd.f32 %v1215, %v1279
  %1281 = vmatmul.f32.gmra.mxu0 %v1150
  %v1282 = vpop.f32.mrf.mxu0
  %v1283 = vadd.f32 %v1218, %v1282
  %1284 = vmatmul.f32.gmra.mxu0 %v1153
  %v1285 = vpop.f32.mrf.mxu0
  %v1286 = vadd.f32 %v1221, %v1285
  %1287 = vmatmul.f32.gmra.mxu0 %v1156
  %v1288 = vpop.f32.mrf.mxu0
  %v1289 = vadd.f32 %v1224, %v1288
  %1290 = vmatmul.f32.gmra.mxu0 %v1159
  %v1291 = vpop.f32.mrf.mxu0
  %v1292 = vadd.f32 %v1227, %v1291
  %1293 = vmatmul.f32.gmra.mxu0 %v1162
  %v1294 = vpop.f32.mrf.mxu0
  %v1295 = vadd.f32 %v1230, %v1294
  %1296 = vmatmul.f32.gmra.mxu0 %v1165
  %v1297 = vpop.f32.mrf.mxu0
  %v1298 = vadd.f32 %v1233, %v1297
  %1299 = vmatmul.f32.gmra.mxu0 %v1168
  %v1300 = vpop.f32.mrf.mxu0
  %v1301 = vadd.f32 %v1236, %v1300
  %1302 = vmatmul.f32.gmra.mxu0 %v1171
  %v1303 = vpop.f32.mrf.mxu0
  %v1304 = vadd.f32 %v1239, %v1303
  %1305 = vmatmul.f32.gmra.mxu0 %v1174
  %v1306 = vpop.f32.mrf.mxu0
  %v1307 = vadd.f32 %v1242, %v1306
  %1308 = vmatmul.f32.gmra.mxu0 %v1177
  %v1309 = vpop.f32.mrf.mxu0
  %v1310 = vadd.f32 %v1245, %v1309
  %1311 = vmatmul.f32.gmra.mxu0 %v1180
  %v1312 = vpop.f32.mrf.mxu0
  %v1313 = vadd.f32 %v1248, %v1312
  %1314 = vmatmul.f32.gmra.mxu0 %v1183
  %v1315 = vpop.f32.mrf.mxu0
  %v1316 = vadd.f32 %v1251, %v1315
  %1317 = vmatmul.f32.gmra.mxu0 %v1186
  %v1318 = vpop.f32.mrf.mxu0
  %v1319 = vadd.f32 %v1254, %v1318
  %1320 = vmatmul.f32.gmra.mxu0 %v1189
  %v1321 = vpop.f32.mrf.mxu0
  %v1322 = vadd.f32 %v1257, %v1321
  %1323 = vmatmul.f32.gmra.mxu0 %v1192
  %v1324 = vpop.f32.mrf.mxu0
  %v1325 = vadd.f32 %v1260, %v1324
  %1326 = vdwg.mxu0
  %v1327 = vadd.f32 %v873, %v1280
  %v1328 = vadd.f32 %v876, %v1283
  %v1329 = vadd.f32 %v879, %v1286
  %v1330 = vadd.f32 %v882, %v1289
  %v1331 = vadd.f32 %v885, %v1292
  %v1332 = vadd.f32 %v888, %v1295
  %v1333 = vadd.f32 %v891, %v1298
  %v1334 = vadd.f32 %v894, %v1301
  %v1335 = vadd.f32 %v897, %v1304
  %v1336 = vadd.f32 %v900, %v1307
  %v1337 = vadd.f32 %v903, %v1310
  %v1338 = vadd.f32 %v906, %v1313
  %v1339 = vadd.f32 %v909, %v1316
  %v1340 = vadd.f32 %v912, %v1319
  %v1341 = vadd.f32 %v915, %v1322
  %v1342 = vadd.f32 %v918, %v1325
  %s1343 = scalar_lea.vmem %s3, 768
  %v1344 = vld [vmem:[%s1343] sm:$0xff]
  %v1345 = vld [vmem:[%s1343 + $0x8] sm:$0xff]
  %v1346 = vld [vmem:[%s1343 + $0x10] sm:$0xff]
  %v1347 = vld [vmem:[%s1343 + $0x18] sm:$0xff]
  %v1348 = vld [vmem:[%s1343 + $0x20] sm:$0xff]
  %v1349 = vld [vmem:[%s1343 + $0x28] sm:$0xff]
  %v1350 = vld [vmem:[%s1343 + $0x30] sm:$0xff]
  %v1351 = vld [vmem:[%s1343 + $0x38] sm:$0xff]
  %v1352 = vld [vmem:[%s1343 + $0x40] sm:$0xff]
  %v1353 = vld [vmem:[%s1343 + $0x48] sm:$0xff]
  %v1354 = vld [vmem:[%s1343 + $0x50] sm:$0xff]
  %v1355 = vld [vmem:[%s1343 + $0x58] sm:$0xff]
  %v1356 = vld [vmem:[%s1343 + $0x60] sm:$0xff]
  %v1357 = vld [vmem:[%s1343 + $0x68] sm:$0xff]
  %v1358 = vld [vmem:[%s1343 + $0x70] sm:$0xff]
  %v1359 = vld [vmem:[%s1343 + $0x78] sm:$0xff]
  %v1360 = vld [vmem:[%s1343 + $0x80] sm:$0xff]
  %v1361 = vld [vmem:[%s1343 + $0x88] sm:$0xff]
  %v1362 = vld [vmem:[%s1343 + $0x90] sm:$0xff]
  %v1363 = vld [vmem:[%s1343 + $0x98] sm:$0xff]
  %v1364 = vld [vmem:[%s1343 + $0xa0] sm:$0xff]
  %v1365 = vld [vmem:[%s1343 + $0xa8] sm:$0xff]
  %v1366 = vld [vmem:[%s1343 + $0xb0] sm:$0xff]
  %v1367 = vld [vmem:[%s1343 + $0xb8] sm:$0xff]
  %v1368 = vld [vmem:[%s1343 + $0xc0] sm:$0xff]
  %v1369 = vld [vmem:[%s1343 + $0xc8] sm:$0xff]
  %v1370 = vld [vmem:[%s1343 + $0xd0] sm:$0xff]
  %v1371 = vld [vmem:[%s1343 + $0xd8] sm:$0xff]
  %v1372 = vld [vmem:[%s1343 + $0xe0] sm:$0xff]
  %v1373 = vld [vmem:[%s1343 + $0xe8] sm:$0xff]
  %v1374 = vld [vmem:[%s1343 + $0xf0] sm:$0xff]
  %v1375 = vld [vmem:[%s1343 + $0xf8] sm:$0xff]
  %1376 = vmatpush.msra.mxu0 %v1359
  %1377 = vmatpush.msra.mxu0 %v1358
  %1378 = vmatpush.msra.mxu0 %v1357
  %1379 = vmatpush.msra.mxu0 %v1356
  %1380 = vmatpush.msra.mxu0 %v1355
  %1381 = vmatpush.msra.mxu0 %v1354
  %1382 = vmatpush.msra.mxu0 %v1353
  %1383 = vmatpush.msra.mxu0 %v1352
  %1384 = vmatpush.msra.mxu0 %v1351
  %1385 = vmatpush.msra.mxu0 %v1350
  %1386 = vmatpush.msra.mxu0 %v1349
  %1387 = vmatpush.msra.mxu0 %v1348
  %1388 = vmatpush.msra.mxu0 %v1347
  %1389 = vmatpush.msra.mxu0 %v1346
  %1390 = vmatpush.msra.mxu0 %v1345
  %1391 = vmatpush.msra.mxu0 %v1344
  %1392 = vmatmul.f32.gmra.mxu0 %v64
  %v1393 = vpop.f32.mrf.mxu0
  %v1394 = vadd.f32 0.0, %v1393
  %1395 = vmatmul.f32.gmra.mxu0 %v66
  %v1396 = vpop.f32.mrf.mxu0
  %v1397 = vadd.f32 0.0, %v1396
  %1398 = vmatmul.f32.gmra.mxu0 %v68
  %v1399 = vpop.f32.mrf.mxu0
  %v1400 = vadd.f32 0.0, %v1399
  %1401 = vmatmul.f32.gmra.mxu0 %v70
  %v1402 = vpop.f32.mrf.mxu0
  %v1403 = vadd.f32 0.0, %v1402
  %1404 = vmatmul.f32.gmra.mxu0 %v72
  %v1405 = vpop.f32.mrf.mxu0
  %v1406 = vadd.f32 0.0, %v1405
  %1407 = vmatmul.f32.gmra.mxu0 %v74
  %v1408 = vpop.f32.mrf.mxu0
  %v1409 = vadd.f32 0.0, %v1408
  %1410 = vmatmul.f32.gmra.mxu0 %v76
  %v1411 = vpop.f32.mrf.mxu0
  %v1412 = vadd.f32 0.0, %v1411
  %1413 = vmatmul.f32.gmra.mxu0 %v78
  %v1414 = vpop.f32.mrf.mxu0
  %v1415 = vadd.f32 0.0, %v1414
  %1416 = vmatmul.f32.gmra.mxu0 %v80
  %v1417 = vpop.f32.mrf.mxu0
  %v1418 = vadd.f32 0.0, %v1417
  %1419 = vmatmul.f32.gmra.mxu0 %v82
  %v1420 = vpop.f32.mrf.mxu0
  %v1421 = vadd.f32 0.0, %v1420
  %1422 = vmatmul.f32.gmra.mxu0 %v84
  %v1423 = vpop.f32.mrf.mxu0
  %v1424 = vadd.f32 0.0, %v1423
  %1425 = vmatmul.f32.gmra.mxu0 %v86
  %v1426 = vpop.f32.mrf.mxu0
  %v1427 = vadd.f32 0.0, %v1426
  %1428 = vmatmul.f32.gmra.mxu0 %v88
  %v1429 = vpop.f32.mrf.mxu0
  %v1430 = vadd.f32 0.0, %v1429
  %1431 = vmatmul.f32.gmra.mxu0 %v90
  %v1432 = vpop.f32.mrf.mxu0
  %v1433 = vadd.f32 0.0, %v1432
  %1434 = vmatmul.f32.gmra.mxu0 %v92
  %v1435 = vpop.f32.mrf.mxu0
  %v1436 = vadd.f32 0.0, %v1435
  %1437 = vmatmul.f32.gmra.mxu0 %v94
  %v1438 = vpop.f32.mrf.mxu0
  %v1439 = vadd.f32 0.0, %v1438
  %1440 = vmatmul.f32.gmra.mxu0 %v96
  %v1441 = vpop.f32.mrf.mxu0
  %v1442 = vadd.f32 0.0, %v1441
  %1443 = vmatmul.f32.gmra.mxu0 %v98
  %v1444 = vpop.f32.mrf.mxu0
  %v1445 = vadd.f32 0.0, %v1444
  %1446 = vmatmul.f32.gmra.mxu0 %v100
  %v1447 = vpop.f32.mrf.mxu0
  %v1448 = vadd.f32 0.0, %v1447
  %1449 = vmatmul.f32.gmra.mxu0 %v102
  %v1450 = vpop.f32.mrf.mxu0
  %v1451 = vadd.f32 0.0, %v1450
  %1452 = vmatmul.f32.gmra.mxu0 %v104
  %v1453 = vpop.f32.mrf.mxu0
  %v1454 = vadd.f32 0.0, %v1453
  %1455 = vdwg.mxu0
  %1456 = vmatpush.msra.mxu0 %v1375
  %1457 = vmatpush.msra.mxu0 %v1374
  %1458 = vmatpush.msra.mxu0 %v1373
  %1459 = vmatpush.msra.mxu0 %v1372
  %1460 = vmatpush.msra.mxu0 %v1371
  %1461 = vmatpush.msra.mxu0 %v1370
  %1462 = vmatpush.msra.mxu0 %v1369
  %1463 = vmatpush.msra.mxu0 %v1368
  %1464 = vmatpush.msra.mxu0 %v1367
  %1465 = vmatpush.msra.mxu0 %v1366
  %1466 = vmatpush.msra.mxu0 %v1365
  %1467 = vmatpush.msra.mxu0 %v1364
  %1468 = vmatpush.msra.mxu0 %v1363
  %1469 = vmatpush.msra.mxu0 %v1362
  %1470 = vmatpush.msra.mxu0 %v1361
  %1471 = vmatpush.msra.mxu0 %v1360
  %1472 = vmatmul.f32.gmra.mxu0 %v65
  %v1473 = vpop.f32.mrf.mxu0
  %v1474 = vadd.f32 %v1394, %v1473
  %1475 = vmatmul.f32.gmra.mxu0 %v67
  %v1476 = vpop.f32.mrf.mxu0
  %v1477 = vadd.f32 %v1397, %v1476
  %1478 = vmatmul.f32.gmra.mxu0 %v69
  %v1479 = vpop.f32.mrf.mxu0
  %v1480 = vadd.f32 %v1400, %v1479
  %1481 = vmatmul.f32.gmra.mxu0 %v71
  %v1482 = vpop.f32.mrf.mxu0
  %v1483 = vadd.f32 %v1403, %v1482
  %1484 = vmatmul.f32.gmra.mxu0 %v73
  %v1485 = vpop.f32.mrf.mxu0
  %v1486 = vadd.f32 %v1406, %v1485
  %1487 = vmatmul.f32.gmra.mxu0 %v75
  %v1488 = vpop.f32.mrf.mxu0
  %v1489 = vadd.f32 %v1409, %v1488
  %1490 = vmatmul.f32.gmra.mxu0 %v77
  %v1491 = vpop.f32.mrf.mxu0
  %v1492 = vadd.f32 %v1412, %v1491
  %1493 = vmatmul.f32.gmra.mxu0 %v79
  %v1494 = vpop.f32.mrf.mxu0
  %v1495 = vadd.f32 %v1415, %v1494
  %1496 = vmatmul.f32.gmra.mxu0 %v81
  %v1497 = vpop.f32.mrf.mxu0
  %v1498 = vadd.f32 %v1418, %v1497
  %1499 = vmatmul.f32.gmra.mxu0 %v83
  %v1500 = vpop.f32.mrf.mxu0
  %v1501 = vadd.f32 %v1421, %v1500
  %1502 = vmatmul.f32.gmra.mxu0 %v85
  %v1503 = vpop.f32.mrf.mxu0
  %v1504 = vadd.f32 %v1424, %v1503
  %1505 = vmatmul.f32.gmra.mxu0 %v87
  %v1506 = vpop.f32.mrf.mxu0
  %v1507 = vadd.f32 %v1427, %v1506
  %1508 = vmatmul.f32.gmra.mxu0 %v89
  %v1509 = vpop.f32.mrf.mxu0
  %v1510 = vadd.f32 %v1430, %v1509
  %1511 = vmatmul.f32.gmra.mxu0 %v91
  %v1512 = vpop.f32.mrf.mxu0
  %v1513 = vadd.f32 %v1433, %v1512
  %1514 = vmatmul.f32.gmra.mxu0 %v93
  %v1515 = vpop.f32.mrf.mxu0
  %v1516 = vadd.f32 %v1436, %v1515
  %1517 = vmatmul.f32.gmra.mxu0 %v95
  %v1518 = vpop.f32.mrf.mxu0
  %v1519 = vadd.f32 %v1439, %v1518
  %1520 = vmatmul.f32.gmra.mxu0 %v97
  %v1521 = vpop.f32.mrf.mxu0
  %v1522 = vadd.f32 %v1442, %v1521
  %1523 = vmatmul.f32.gmra.mxu0 %v99
  %v1524 = vpop.f32.mrf.mxu0
  %v1525 = vadd.f32 %v1445, %v1524
  %1526 = vmatmul.f32.gmra.mxu0 %v101
  %v1527 = vpop.f32.mrf.mxu0
  %v1528 = vadd.f32 %v1448, %v1527
  %1529 = vmatmul.f32.gmra.mxu0 %v103
  %v1530 = vpop.f32.mrf.mxu0
  %v1531 = vadd.f32 %v1451, %v1530
  %1532 = vmatmul.f32.gmra.mxu0 %v105
  %v1533 = vpop.f32.mrf.mxu0
  %v1534 = vadd.f32 %v1454, %v1533
  %1535 = vdwg.mxu0
  %s1536 = scalar_lea.vmem %s2, 768
  %v1537 = vld [vmem:[%s1536] sm:$0xff]
  %v1538 = vld [vmem:[%s1536 + $0x8] sm:$0xff]
  %v1539 = vld [vmem:[%s1536 + $0x10] sm:$0xff]
  %v1540 = vld [vmem:[%s1536 + $0x18] sm:$0xff]
  %v1541 = vld [vmem:[%s1536 + $0x20] sm:$0xff]
  %v1542 = vld [vmem:[%s1536 + $0x28] sm:$0xff]
  %v1543 = vld [vmem:[%s1536 + $0x30] sm:$0xff]
  %v1544 = vld [vmem:[%s1536 + $0x38] sm:$0xff]
  %v1545 = vld [vmem:[%s1536 + $0x40] sm:$0xff]
  %v1546 = vld [vmem:[%s1536 + $0x48] sm:$0xff]
  %v1547 = vld [vmem:[%s1536 + $0x50] sm:$0xff]
  %v1548 = vld [vmem:[%s1536 + $0x58] sm:$0xff]
  %v1549 = vld [vmem:[%s1536 + $0x60] sm:$0xff]
  %v1550 = vld [vmem:[%s1536 + $0x68] sm:$0xff]
  %v1551 = vld [vmem:[%s1536 + $0x70] sm:$0xff]
  %v1552 = vld [vmem:[%s1536 + $0x78] sm:$0xff]
  %v1553 = vld [vmem:[%s1536 + $0x80] sm:$0xff]
  %v1554 = vld [vmem:[%s1536 + $0x88] sm:$0xff]
  %v1555 = vld [vmem:[%s1536 + $0x90] sm:$0xff]
  %v1556 = vld [vmem:[%s1536 + $0x98] sm:$0xff]
  %v1557 = vld [vmem:[%s1536 + $0xa0] sm:$0xff]
  %v1558 = vld [vmem:[%s1536 + $0xa8] sm:$0xff]
  %v1559 = vld [vmem:[%s1536 + $0xb0] sm:$0xff]
  %v1560 = vld [vmem:[%s1536 + $0xb8] sm:$0xff]
  %v1561 = vld [vmem:[%s1536 + $0xc0] sm:$0xff]
  %v1562 = vld [vmem:[%s1536 + $0xc8] sm:$0xff]
  %v1563 = vld [vmem:[%s1536 + $0xd0] sm:$0xff]
  %v1564 = vld [vmem:[%s1536 + $0xd8] sm:$0xff]
  %v1565 = vld [vmem:[%s1536 + $0xe0] sm:$0xff]
  %v1566 = vld [vmem:[%s1536 + $0xe8] sm:$0xff]
  %v1567 = vld [vmem:[%s1536 + $0xf0] sm:$0xff]
  %v1568 = vld [vmem:[%s1536 + $0xf8] sm:$0xff]
  %v1570 = vsel %vm556, %v1538, 0
  %v1573 = vsel %vm556, %v1540, 0
  %v1576 = vsel %vm556, %v1542, 0
  %v1579 = vsel %vm556, %v1544, 0
  %v1582 = vsel %vm556, %v1546, 0
  %v1585 = vsel %vm556, %v1548, 0
  %v1588 = vsel %vm556, %v1550, 0
  %v1591 = vsel %vm556, %v1552, 0
  %v1594 = vsel %vm556, %v1554, 0
  %v1597 = vsel %vm556, %v1556, 0
  %v1600 = vsel %vm556, %v1558, 0
  %v1603 = vsel %vm556, %v1560, 0
  %v1606 = vsel %vm556, %v1562, 0
  %v1609 = vsel %vm556, %v1564, 0
  %v1612 = vsel %vm556, %v1566, 0
  %v1615 = vsel %vm556, %v1568, 0
  %v1618 = vsel %vm605, %v1534, 0
  %1620 = vmatpush.msra.mxu0 %v1519
  %1621 = vmatpush.msra.mxu0 %v1516
  %1622 = vmatpush.msra.mxu0 %v1513
  %1623 = vmatpush.msra.mxu0 %v1510
  %1624 = vmatpush.msra.mxu0 %v1507
  %1625 = vmatpush.msra.mxu0 %v1504
  %1626 = vmatpush.msra.mxu0 %v1501
  %1627 = vmatpush.msra.mxu0 %v1498
  %1628 = vmatpush.msra.mxu0 %v1495
  %1629 = vmatpush.msra.mxu0 %v1492
  %1630 = vmatpush.msra.mxu0 %v1489
  %1631 = vmatpush.msra.mxu0 %v1486
  %1632 = vmatpush.msra.mxu0 %v1483
  %1633 = vmatpush.msra.mxu0 %v1480
  %1634 = vmatpush.msra.mxu0 %v1477
  %1635 = vmatpush.msra.mxu0 %v1474
  %1636 = vmatmul.f32.gmra.mxu0 %v1537
  %v1637 = vpop.f32.mrf.mxu0
  %v1638 = vadd.f32 0.0, %v1637
  %1639 = vmatmul.f32.gmra.mxu0 %v1539
  %v1640 = vpop.f32.mrf.mxu0
  %v1641 = vadd.f32 0.0, %v1640
  %1642 = vmatmul.f32.gmra.mxu0 %v1541
  %v1643 = vpop.f32.mrf.mxu0
  %v1644 = vadd.f32 0.0, %v1643
  %1645 = vmatmul.f32.gmra.mxu0 %v1543
  %v1646 = vpop.f32.mrf.mxu0
  %v1647 = vadd.f32 0.0, %v1646
  %1648 = vmatmul.f32.gmra.mxu0 %v1545
  %v1649 = vpop.f32.mrf.mxu0
  %v1650 = vadd.f32 0.0, %v1649
  %1651 = vmatmul.f32.gmra.mxu0 %v1547
  %v1652 = vpop.f32.mrf.mxu0
  %v1653 = vadd.f32 0.0, %v1652
  %1654 = vmatmul.f32.gmra.mxu0 %v1549
  %v1655 = vpop.f32.mrf.mxu0
  %v1656 = vadd.f32 0.0, %v1655
  %1657 = vmatmul.f32.gmra.mxu0 %v1551
  %v1658 = vpop.f32.mrf.mxu0
  %v1659 = vadd.f32 0.0, %v1658
  %1660 = vmatmul.f32.gmra.mxu0 %v1553
  %v1661 = vpop.f32.mrf.mxu0
  %v1662 = vadd.f32 0.0, %v1661
  %1663 = vmatmul.f32.gmra.mxu0 %v1555
  %v1664 = vpop.f32.mrf.mxu0
  %v1665 = vadd.f32 0.0, %v1664
  %1666 = vmatmul.f32.gmra.mxu0 %v1557
  %v1667 = vpop.f32.mrf.mxu0
  %v1668 = vadd.f32 0.0, %v1667
  %1669 = vmatmul.f32.gmra.mxu0 %v1559
  %v1670 = vpop.f32.mrf.mxu0
  %v1671 = vadd.f32 0.0, %v1670
  %1672 = vmatmul.f32.gmra.mxu0 %v1561
  %v1673 = vpop.f32.mrf.mxu0
  %v1674 = vadd.f32 0.0, %v1673
  %1675 = vmatmul.f32.gmra.mxu0 %v1563
  %v1676 = vpop.f32.mrf.mxu0
  %v1677 = vadd.f32 0.0, %v1676
  %1678 = vmatmul.f32.gmra.mxu0 %v1565
  %v1679 = vpop.f32.mrf.mxu0
  %v1680 = vadd.f32 0.0, %v1679
  %1681 = vmatmul.f32.gmra.mxu0 %v1567
  %v1682 = vpop.f32.mrf.mxu0
  %v1683 = vadd.f32 0.0, %v1682
  %1684 = vdwg.mxu0
  %1685 = vmatpush.msra.mxu0 0.0
  %1686 = vmatpush.msra.mxu0 0.0
  %1687 = vmatpush.msra.mxu0 0.0
  %1688 = vmatpush.msra.mxu0 0.0
  %1689 = vmatpush.msra.mxu0 0.0
  %1690 = vmatpush.msra.mxu0 0.0
  %1691 = vmatpush.msra.mxu0 0.0
  %1692 = vmatpush.msra.mxu0 0.0
  %1693 = vmatpush.msra.mxu0 0.0
  %1694 = vmatpush.msra.mxu0 0.0
  %1695 = vmatpush.msra.mxu0 0.0
  %1696 = vmatpush.msra.mxu0 %v1618
  %1697 = vmatpush.msra.mxu0 %v1531
  %1698 = vmatpush.msra.mxu0 %v1528
  %1699 = vmatpush.msra.mxu0 %v1525
  %1700 = vmatpush.msra.mxu0 %v1522
  %1701 = vmatmul.f32.gmra.mxu0 %v1570
  %v1702 = vpop.f32.mrf.mxu0
  %v1703 = vadd.f32 %v1638, %v1702
  %1704 = vmatmul.f32.gmra.mxu0 %v1573
  %v1705 = vpop.f32.mrf.mxu0
  %v1706 = vadd.f32 %v1641, %v1705
  %1707 = vmatmul.f32.gmra.mxu0 %v1576
  %v1708 = vpop.f32.mrf.mxu0
  %v1709 = vadd.f32 %v1644, %v1708
  %1710 = vmatmul.f32.gmra.mxu0 %v1579
  %v1711 = vpop.f32.mrf.mxu0
  %v1712 = vadd.f32 %v1647, %v1711
  %1713 = vmatmul.f32.gmra.mxu0 %v1582
  %v1714 = vpop.f32.mrf.mxu0
  %v1715 = vadd.f32 %v1650, %v1714
  %1716 = vmatmul.f32.gmra.mxu0 %v1585
  %v1717 = vpop.f32.mrf.mxu0
  %v1718 = vadd.f32 %v1653, %v1717
  %1719 = vmatmul.f32.gmra.mxu0 %v1588
  %v1720 = vpop.f32.mrf.mxu0
  %v1721 = vadd.f32 %v1656, %v1720
  %1722 = vmatmul.f32.gmra.mxu0 %v1591
  %v1723 = vpop.f32.mrf.mxu0
  %v1724 = vadd.f32 %v1659, %v1723
  %1725 = vmatmul.f32.gmra.mxu0 %v1594
  %v1726 = vpop.f32.mrf.mxu0
  %v1727 = vadd.f32 %v1662, %v1726
  %1728 = vmatmul.f32.gmra.mxu0 %v1597
  %v1729 = vpop.f32.mrf.mxu0
  %v1730 = vadd.f32 %v1665, %v1729
  %1731 = vmatmul.f32.gmra.mxu0 %v1600
  %v1732 = vpop.f32.mrf.mxu0
  %v1733 = vadd.f32 %v1668, %v1732
  %1734 = vmatmul.f32.gmra.mxu0 %v1603
  %v1735 = vpop.f32.mrf.mxu0
  %v1736 = vadd.f32 %v1671, %v1735
  %1737 = vmatmul.f32.gmra.mxu0 %v1606
  %v1738 = vpop.f32.mrf.mxu0
  %v1739 = vadd.f32 %v1674, %v1738
  %1740 = vmatmul.f32.gmra.mxu0 %v1609
  %v1741 = vpop.f32.mrf.mxu0
  %v1742 = vadd.f32 %v1677, %v1741
  %1743 = vmatmul.f32.gmra.mxu0 %v1612
  %v1744 = vpop.f32.mrf.mxu0
  %v1745 = vadd.f32 %v1680, %v1744
  %1746 = vmatmul.f32.gmra.mxu0 %v1615
  %v1747 = vpop.f32.mrf.mxu0
  %v1748 = vadd.f32 %v1683, %v1747
  %1749 = vdwg.mxu0
  %v1750 = vadd.f32 %v1327, %v1703
  %v1751 = vadd.f32 %v1328, %v1706
  %v1752 = vadd.f32 %v1329, %v1709
  %v1753 = vadd.f32 %v1330, %v1712
  %v1754 = vadd.f32 %v1331, %v1715
  %v1755 = vadd.f32 %v1332, %v1718
  %v1756 = vadd.f32 %v1333, %v1721
  %v1757 = vadd.f32 %v1334, %v1724
  %v1758 = vadd.f32 %v1335, %v1727
  %v1759 = vadd.f32 %v1336, %v1730
  %v1760 = vadd.f32 %v1337, %v1733
  %v1761 = vadd.f32 %v1338, %v1736
  %v1762 = vadd.f32 %v1339, %v1739
  %v1763 = vadd.f32 %v1340, %v1742
  %v1764 = vadd.f32 %v1341, %v1745
  %v1765 = vadd.f32 %v1342, %v1748
  %v1766 = vld [vmem:[%s4] sm:$0x1]
  %v1768 = vperm.slane %v1766, 0
  %v1770 = vadd.f32 %v1750, %v1768
  %v1771 = vadd.f32 %v1751, %v1768
  %v1772 = vadd.f32 %v1752, %v1768
  %v1773 = vadd.f32 %v1753, %v1768
  %v1774 = vadd.f32 %v1754, %v1768
  %v1775 = vadd.f32 %v1755, %v1768
  %v1776 = vadd.f32 %v1756, %v1768
  %v1777 = vadd.f32 %v1757, %v1768
  %v1778 = vadd.f32 %v1758, %v1768
  %v1779 = vadd.f32 %v1759, %v1768
  %v1780 = vadd.f32 %v1760, %v1768
  %v1781 = vadd.f32 %v1761, %v1768
  %v1782 = vadd.f32 %v1762, %v1768
  %v1783 = vadd.f32 %v1763, %v1768
  %v1784 = vadd.f32 %v1764, %v1768
  %v1785 = vadd.f32 %v1765, %v1768
  %v1786 = vmax.f32 %v1770, 0.0
  %v1787 = vmax.f32 %v1771, 0.0
  %v1788 = vmax.f32 %v1772, 0.0
  %v1789 = vmax.f32 %v1773, 0.0
  %v1790 = vmax.f32 %v1774, 0.0
  %v1791 = vmax.f32 %v1775, 0.0
  %v1792 = vmax.f32 %v1776, 0.0
  %v1793 = vmax.f32 %v1777, 0.0
  %v1794 = vmax.f32 %v1778, 0.0
  %v1795 = vmax.f32 %v1779, 0.0
  %v1796 = vmax.f32 %v1780, 0.0
  %v1797 = vmax.f32 %v1781, 0.0
  %v1798 = vmax.f32 %v1782, 0.0
  %v1799 = vmax.f32 %v1783, 0.0
  %v1800 = vmax.f32 %v1784, 0.0
  %v1801 = vmax.f32 %v1785, 0.0
  %v1802 = vld [vmem:[%s5] sm:$0xff]
  %v1803 = vld [vmem:[%s5 + $0x8] sm:$0xff]
  %v1804 = vld [vmem:[%s5 + $0x10] sm:$0x3]
  %1805 = vmatpush.msra.mxu0 %v1801
  %1806 = vmatpush.msra.mxu0 %v1800
  %1807 = vmatpush.msra.mxu0 %v1799
  %1808 = vmatpush.msra.mxu0 %v1798
  %1809 = vmatpush.msra.mxu0 %v1797
  %1810 = vmatpush.msra.mxu0 %v1796
  %1811 = vmatpush.msra.mxu0 %v1795
  %1812 = vmatpush.msra.mxu0 %v1794
  %1813 = vmatpush.msra.mxu0 %v1793
  %1814 = vmatpush.msra.mxu0 %v1792
  %1815 = vmatpush.msra.mxu0 %v1791
  %1816 = vmatpush.msra.mxu0 %v1790
  %1817 = vmatpush.msra.mxu0 %v1789
  %1818 = vmatpush.msra.mxu0 %v1788
  %1819 = vmatpush.msra.mxu0 %v1787
  %1820 = vmatpush.msra.mxu0 %v1786
  %1821 = vmatmul.f32.gmra.mxu0 %v1802
  %v1822 = vpop.f32.mrf.mxu0
  %v1823 = vadd.f32 0.0, %v1822
  %1824 = vmatmul.f32.gmra.mxu0 %v1803
  %v1825 = vpop.f32.mrf.mxu0
  %v1826 = vadd.f32 0.0, %v1825
  %1827 = vmatmul.f32.gmra.mxu0 %v1804
  %v1828 = vpop.f32.mrf.mxu0
  %v1829 = vadd.f32 0.0, %v1828
  %1830 = vdwg.mxu0
  %v1831 = vld [vmem:[%s6] sm:$0xff]
  %v1832 = vld [vmem:[%s6 + $0x8] sm:$0xff]
  %v1833 = vld [vmem:[%s6 + $0x10] sm:$0xff]
  %v1834 = vld [vmem:[%s6 + $0x18] sm:$0xff]
  %s1835 = scalar_lea.vmem %s5, 24
  %v1836 = vld [vmem:[%s1835] sm:$0xff]
  %v1837 = vld [vmem:[%s1835 + $0x8] sm:$0xff]
  %v1838 = vld [vmem:[%s1835 + $0x10] sm:$0x3]
  %1839 = vmatpush.msra.mxu0 %v1801
  %1840 = vmatpush.msra.mxu0 %v1800
  %1841 = vmatpush.msra.mxu0 %v1799
  %1842 = vmatpush.msra.mxu0 %v1798
  %1843 = vmatpush.msra.mxu0 %v1797
  %1844 = vmatpush.msra.mxu0 %v1796
  %1845 = vmatpush.msra.mxu0 %v1795
  %1846 = vmatpush.msra.mxu0 %v1794
  %1847 = vmatpush.msra.mxu0 %v1793
  %1848 = vmatpush.msra.mxu0 %v1792
  %1849 = vmatpush.msra.mxu0 %v1791
  %1850 = vmatpush.msra.mxu0 %v1790
  %1851 = vmatpush.msra.mxu0 %v1789
  %1852 = vmatpush.msra.mxu0 %v1788
  %1853 = vmatpush.msra.mxu0 %v1787
  %1854 = vmatpush.msra.mxu0 %v1786
  %1855 = vmatmul.f32.gmra.mxu0 %v1836
  %v1856 = vpop.f32.mrf.mxu0
  %v1857 = vadd.f32 0.0, %v1856
  %1858 = vmatmul.f32.gmra.mxu0 %v1837
  %v1859 = vpop.f32.mrf.mxu0
  %v1860 = vadd.f32 0.0, %v1859
  %1861 = vmatmul.f32.gmra.mxu0 %v1838
  %v1862 = vpop.f32.mrf.mxu0
  %v1863 = vadd.f32 0.0, %v1862
  %1864 = vdwg.mxu0
  %s1865 = scalar_lea.vmem %s6, 32
  %v1866 = vld [vmem:[%s1865] sm:$0xff]
  %v1867 = vld [vmem:[%s1865 + $0x8] sm:$0xff]
  %v1868 = vld [vmem:[%s1865 + $0x10] sm:$0xff]
  %v1869 = vld [vmem:[%s1865 + $0x18] sm:$0xff]
  %vm1870 = vcmask 261120
  %v1872 = vsel %vm1870, %v1857, 0
  %v1875 = vsel %vm1870, %v1860, 0
  %v1878 = vsel %vm1870, %v1863, 0
  %1880 = vmatpush.msra.mxu0 0.0
  %1881 = vmatpush.msra.mxu0 0.0
  %1882 = vmatpush.msra.mxu0 0.0
  %1883 = vmatpush.msra.mxu0 0.0
  %1884 = vmatpush.msra.mxu0 0.0
  %1885 = vmatpush.msra.mxu0 0.0
  %1886 = vmatpush.msra.mxu0 0.0
  %1887 = vmatpush.msra.mxu0 0.0
  %1888 = vmatpush.msra.mxu0 0.0
  %1889 = vmatpush.msra.mxu0 0.0
  %1890 = vmatpush.msra.mxu0 0.0
  %1891 = vmatpush.msra.mxu0 0.0
  %1892 = vmatpush.msra.mxu0 %v1869
  %1893 = vmatpush.msra.mxu0 %v1868
  %1894 = vmatpush.msra.mxu0 %v1867
  %1895 = vmatpush.msra.mxu0 %v1866
  %1896 = vmatmul.f32.gmra.mxu0 %v1872
  %v1897 = vpop.f32.mrf.mxu0
  %v1898 = vadd.f32 0.0, %v1897
  %1899 = vmatmul.f32.gmra.mxu0 %v1875
  %v1900 = vpop.f32.mrf.mxu0
  %v1901 = vadd.f32 0.0, %v1900
  %1902 = vmatmul.f32.gmra.mxu0 %v1878
  %v1903 = vpop.f32.mrf.mxu0
  %v1904 = vadd.f32 0.0, %v1903
  %1905 = vdwg.mxu0
  %v1907 = vsel %vm1870, %v1823, 0
  %v1910 = vsel %vm1870, %v1826, 0
  %v1913 = vsel %vm1870, %v1829, 0
  %1915 = vmatpush.msra.mxu0 0.0
  %1916 = vmatpush.msra.mxu0 0.0
  %1917 = vmatpush.msra.mxu0 0.0
  %1918 = vmatpush.msra.mxu0 0.0
  %1919 = vmatpush.msra.mxu0 0.0
  %1920 = vmatpush.msra.mxu0 0.0
  %1921 = vmatpush.msra.mxu0 0.0
  %1922 = vmatpush.msra.mxu0 0.0
  %1923 = vmatpush.msra.mxu0 0.0
  %1924 = vmatpush.msra.mxu0 0.0
  %1925 = vmatpush.msra.mxu0 0.0
  %1926 = vmatpush.msra.mxu0 0.0
  %1927 = vmatpush.msra.mxu0 %v1834
  %1928 = vmatpush.msra.mxu0 %v1833
  %1929 = vmatpush.msra.mxu0 %v1832
  %1930 = vmatpush.msra.mxu0 %v1831
  %1931 = vmatmul.f32.gmra.mxu0 %v1907
  %v1932 = vpop.f32.mrf.mxu0
  %v1933 = vadd.f32 %v1898, %v1932
  %1934 = vmatmul.f32.gmra.mxu0 %v1910
  %v1935 = vpop.f32.mrf.mxu0
  %v1936 = vadd.f32 %v1901, %v1935
  %1937 = vmatmul.f32.gmra.mxu0 %v1913
  %v1938 = vpop.f32.mrf.mxu0
  %v1939 = vadd.f32 %v1904, %v1938
  %1940 = vdwg.mxu0
  %s1941 = scalar_lea.vmem %s5, 48
  %v1942 = vld [vmem:[%s1941] sm:$0xff]
  %v1943 = vld [vmem:[%s1941 + $0x8] sm:$0xff]
  %v1944 = vld [vmem:[%s1941 + $0x10] sm:$0x3]
  %1945 = vmatpush.msra.mxu0 %v1801
  %1946 = vmatpush.msra.mxu0 %v1800
  %1947 = vmatpush.msra.mxu0 %v1799
  %1948 = vmatpush.msra.mxu0 %v1798
  %1949 = vmatpush.msra.mxu0 %v1797
  %1950 = vmatpush.msra.mxu0 %v1796
  %1951 = vmatpush.msra.mxu0 %v1795
  %1952 = vmatpush.msra.mxu0 %v1794
  %1953 = vmatpush.msra.mxu0 %v1793
  %1954 = vmatpush.msra.mxu0 %v1792
  %1955 = vmatpush.msra.mxu0 %v1791
  %1956 = vmatpush.msra.mxu0 %v1790
  %1957 = vmatpush.msra.mxu0 %v1789
  %1958 = vmatpush.msra.mxu0 %v1788
  %1959 = vmatpush.msra.mxu0 %v1787
  %1960 = vmatpush.msra.mxu0 %v1786
  %1961 = vmatmul.f32.gmra.mxu0 %v1942
  %v1962 = vpop.f32.mrf.mxu0
  %v1963 = vadd.f32 0.0, %v1962
  %1964 = vmatmul.f32.gmra.mxu0 %v1943
  %v1965 = vpop.f32.mrf.mxu0
  %v1966 = vadd.f32 0.0, %v1965
  %1967 = vmatmul.f32.gmra.mxu0 %v1944
  %v1968 = vpop.f32.mrf.mxu0
  %v1969 = vadd.f32 0.0, %v1968
  %1970 = vdwg.mxu0
  %s1971 = scalar_lea.vmem %s6, 64
  %v1972 = vld [vmem:[%s1971] sm:$0xff]
  %v1973 = vld [vmem:[%s1971 + $0x8] sm:$0xff]
  %v1974 = vld [vmem:[%s1971 + $0x10] sm:$0xff]
  %v1975 = vld [vmem:[%s1971 + $0x18] sm:$0xff]
  %v1977 = vsel %vm1870, %v1963, 0
  %v1980 = vsel %vm1870, %v1966, 0
  %v1983 = vsel %vm1870, %v1969, 0
  %1985 = vmatpush.msra.mxu0 0.0
  %1986 = vmatpush.msra.mxu0 0.0
  %1987 = vmatpush.msra.mxu0 0.0
  %1988 = vmatpush.msra.mxu0 0.0
  %1989 = vmatpush.msra.mxu0 0.0
  %1990 = vmatpush.msra.mxu0 0.0
  %1991 = vmatpush.msra.mxu0 0.0
  %1992 = vmatpush.msra.mxu0 0.0
  %1993 = vmatpush.msra.mxu0 0.0
  %1994 = vmatpush.msra.mxu0 0.0
  %1995 = vmatpush.msra.mxu0 0.0
  %1996 = vmatpush.msra.mxu0 0.0
  %1997 = vmatpush.msra.mxu0 %v1975
  %1998 = vmatpush.msra.mxu0 %v1974
  %1999 = vmatpush.msra.mxu0 %v1973
  %2000 = vmatpush.msra.mxu0 %v1972
  %2001 = vmatmul.f32.gmra.mxu0 %v1977
  %v2002 = vpop.f32.mrf.mxu0
  %v2003 = vadd.f32 0.0, %v2002
  %2004 = vmatmul.f32.gmra.mxu0 %v1980
  %v2005 = vpop.f32.mrf.mxu0
  %v2006 = vadd.f32 0.0, %v2005
  %2007 = vmatmul.f32.gmra.mxu0 %v1983
  %v2008 = vpop.f32.mrf.mxu0
  %v2009 = vadd.f32 0.0, %v2008
  %2010 = vdwg.mxu0
  %v2011 = vadd.f32 %v1933, %v2003
  %v2012 = vadd.f32 %v1936, %v2006
  %v2013 = vadd.f32 %v1939, %v2009
  %s2014 = scalar_lea.vmem %s5, 72
  %v2015 = vld [vmem:[%s2014] sm:$0xff]
  %v2016 = vld [vmem:[%s2014 + $0x8] sm:$0xff]
  %v2017 = vld [vmem:[%s2014 + $0x10] sm:$0x3]
  %2018 = vmatpush.msra.mxu0 %v1801
  %2019 = vmatpush.msra.mxu0 %v1800
  %2020 = vmatpush.msra.mxu0 %v1799
  %2021 = vmatpush.msra.mxu0 %v1798
  %2022 = vmatpush.msra.mxu0 %v1797
  %2023 = vmatpush.msra.mxu0 %v1796
  %2024 = vmatpush.msra.mxu0 %v1795
  %2025 = vmatpush.msra.mxu0 %v1794
  %2026 = vmatpush.msra.mxu0 %v1793
  %2027 = vmatpush.msra.mxu0 %v1792
  %2028 = vmatpush.msra.mxu0 %v1791
  %2029 = vmatpush.msra.mxu0 %v1790
  %2030 = vmatpush.msra.mxu0 %v1789
  %2031 = vmatpush.msra.mxu0 %v1788
  %2032 = vmatpush.msra.mxu0 %v1787
  %2033 = vmatpush.msra.mxu0 %v1786
  %2034 = vmatmul.f32.gmra.mxu0 %v2015
  %v2035 = vpop.f32.mrf.mxu0
  %v2036 = vadd.f32 0.0, %v2035
  %2037 = vmatmul.f32.gmra.mxu0 %v2016
  %v2038 = vpop.f32.mrf.mxu0
  %v2039 = vadd.f32 0.0, %v2038
  %2040 = vmatmul.f32.gmra.mxu0 %v2017
  %v2041 = vpop.f32.mrf.mxu0
  %v2042 = vadd.f32 0.0, %v2041
  %2043 = vdwg.mxu0
  %s2044 = scalar_lea.vmem %s6, 96
  %v2045 = vld [vmem:[%s2044] sm:$0xff]
  %v2046 = vld [vmem:[%s2044 + $0x8] sm:$0xff]
  %v2047 = vld [vmem:[%s2044 + $0x10] sm:$0xff]
  %v2048 = vld [vmem:[%s2044 + $0x18] sm:$0xff]
  %v2050 = vsel %vm1870, %v2036, 0
  %v2053 = vsel %vm1870, %v2039, 0
  %v2056 = vsel %vm1870, %v2042, 0
  %2058 = vmatpush.msra.mxu0 0.0
  %2059 = vmatpush.msra.mxu0 0.0
  %2060 = vmatpush.msra.mxu0 0.0
  %2061 = vmatpush.msra.mxu0 0.0
  %2062 = vmatpush.msra.mxu0 0.0
  %2063 = vmatpush.msra.mxu0 0.0
  %2064 = vmatpush.msra.mxu0 0.0
  %2065 = vmatpush.msra.mxu0 0.0
  %2066 = vmatpush.msra.mxu0 0.0
  %2067 = vmatpush.msra.mxu0 0.0
  %2068 = vmatpush.msra.mxu0 0.0
  %2069 = vmatpush.msra.mxu0 0.0
  %2070 = vmatpush.msra.mxu0 %v2048
  %2071 = vmatpush.msra.mxu0 %v2047
  %2072 = vmatpush.msra.mxu0 %v2046
  %2073 = vmatpush.msra.mxu0 %v2045
  %2074 = vmatmul.f32.gmra.mxu0 %v2050
  %v2075 = vpop.f32.mrf.mxu0
  %v2076 = vadd.f32 0.0, %v2075
  %2077 = vmatmul.f32.gmra.mxu0 %v2053
  %v2078 = vpop.f32.mrf.mxu0
  %v2079 = vadd.f32 0.0, %v2078
  %2080 = vmatmul.f32.gmra.mxu0 %v2056
  %v2081 = vpop.f32.mrf.mxu0
  %v2082 = vadd.f32 0.0, %v2081
  %2083 = vdwg.mxu0
  %v2084 = vadd.f32 %v2011, %v2076
  %v2085 = vadd.f32 %v2012, %v2079
  %v2086 = vadd.f32 %v2013, %v2082
  %s2087 = scalar_lea.vmem %s5, 96
  %v2088 = vld [vmem:[%s2087] sm:$0xff]
  %v2089 = vld [vmem:[%s2087 + $0x8] sm:$0xff]
  %v2090 = vld [vmem:[%s2087 + $0x10] sm:$0x3]
  %2091 = vmatpush.msra.mxu0 %v1801
  %2092 = vmatpush.msra.mxu0 %v1800
  %2093 = vmatpush.msra.mxu0 %v1799
  %2094 = vmatpush.msra.mxu0 %v1798
  %2095 = vmatpush.msra.mxu0 %v1797
  %2096 = vmatpush.msra.mxu0 %v1796
  %2097 = vmatpush.msra.mxu0 %v1795
  %2098 = vmatpush.msra.mxu0 %v1794
  %2099 = vmatpush.msra.mxu0 %v1793
  %2100 = vmatpush.msra.mxu0 %v1792
  %2101 = vmatpush.msra.mxu0 %v1791
  %2102 = vmatpush.msra.mxu0 %v1790
  %2103 = vmatpush.msra.mxu0 %v1789
  %2104 = vmatpush.msra.mxu0 %v1788
  %2105 = vmatpush.msra.mxu0 %v1787
  %2106 = vmatpush.msra.mxu0 %v1786
  %2107 = vmatmul.f32.gmra.mxu0 %v2088
  %v2108 = vpop.f32.mrf.mxu0
  %v2109 = vadd.f32 0.0, %v2108
  %2110 = vmatmul.f32.gmra.mxu0 %v2089
  %v2111 = vpop.f32.mrf.mxu0
  %v2112 = vadd.f32 0.0, %v2111
  %2113 = vmatmul.f32.gmra.mxu0 %v2090
  %v2114 = vpop.f32.mrf.mxu0
  %v2115 = vadd.f32 0.0, %v2114
  %2116 = vdwg.mxu0
  %s2117 = scalar_lea.vmem %s6, 128
  %v2118 = vld [vmem:[%s2117] sm:$0xff]
  %v2119 = vld [vmem:[%s2117 + $0x8] sm:$0xff]
  %v2120 = vld [vmem:[%s2117 + $0x10] sm:$0xff]
  %v2121 = vld [vmem:[%s2117 + $0x18] sm:$0xff]
  %v2123 = vsel %vm1870, %v2109, 0
  %v2126 = vsel %vm1870, %v2112, 0
  %v2129 = vsel %vm1870, %v2115, 0
  %2131 = vmatpush.msra.mxu0 0.0
  %2132 = vmatpush.msra.mxu0 0.0
  %2133 = vmatpush.msra.mxu0 0.0
  %2134 = vmatpush.msra.mxu0 0.0
  %2135 = vmatpush.msra.mxu0 0.0
  %2136 = vmatpush.msra.mxu0 0.0
  %2137 = vmatpush.msra.mxu0 0.0
  %2138 = vmatpush.msra.mxu0 0.0
  %2139 = vmatpush.msra.mxu0 0.0
  %2140 = vmatpush.msra.mxu0 0.0
  %2141 = vmatpush.msra.mxu0 0.0
  %2142 = vmatpush.msra.mxu0 0.0
  %2143 = vmatpush.msra.mxu0 %v2121
  %2144 = vmatpush.msra.mxu0 %v2120
  %2145 = vmatpush.msra.mxu0 %v2119
  %2146 = vmatpush.msra.mxu0 %v2118
  %2147 = vmatmul.f32.gmra.mxu0 %v2123
  %v2148 = vpop.f32.mrf.mxu0
  %v2149 = vadd.f32 0.0, %v2148
  %2150 = vmatmul.f32.gmra.mxu0 %v2126
  %v2151 = vpop.f32.mrf.mxu0
  %v2152 = vadd.f32 0.0, %v2151
  %2153 = vmatmul.f32.gmra.mxu0 %v2129
  %v2154 = vpop.f32.mrf.mxu0
  %v2155 = vadd.f32 0.0, %v2154
  %2156 = vdwg.mxu0
  %v2157 = vadd.f32 %v2084, %v2149
  %v2158 = vadd.f32 %v2085, %v2152
  %v2159 = vadd.f32 %v2086, %v2155
  %s2160 = scalar_lea.vmem %s5, 120
  %v2161 = vld [vmem:[%s2160] sm:$0xff]
  %v2162 = vld [vmem:[%s2160 + $0x8] sm:$0xff]
  %v2163 = vld [vmem:[%s2160 + $0x10] sm:$0x3]
  %2164 = vmatpush.msra.mxu0 %v1801
  %2165 = vmatpush.msra.mxu0 %v1800
  %2166 = vmatpush.msra.mxu0 %v1799
  %2167 = vmatpush.msra.mxu0 %v1798
  %2168 = vmatpush.msra.mxu0 %v1797
  %2169 = vmatpush.msra.mxu0 %v1796
  %2170 = vmatpush.msra.mxu0 %v1795
  %2171 = vmatpush.msra.mxu0 %v1794
  %2172 = vmatpush.msra.mxu0 %v1793
  %2173 = vmatpush.msra.mxu0 %v1792
  %2174 = vmatpush.msra.mxu0 %v1791
  %2175 = vmatpush.msra.mxu0 %v1790
  %2176 = vmatpush.msra.mxu0 %v1789
  %2177 = vmatpush.msra.mxu0 %v1788
  %2178 = vmatpush.msra.mxu0 %v1787
  %2179 = vmatpush.msra.mxu0 %v1786
  %2180 = vmatmul.f32.gmra.mxu0 %v2161
  %v2181 = vpop.f32.mrf.mxu0
  %v2182 = vadd.f32 0.0, %v2181
  %2183 = vmatmul.f32.gmra.mxu0 %v2162
  %v2184 = vpop.f32.mrf.mxu0
  %v2185 = vadd.f32 0.0, %v2184
  %2186 = vmatmul.f32.gmra.mxu0 %v2163
  %v2187 = vpop.f32.mrf.mxu0
  %v2188 = vadd.f32 0.0, %v2187
  %2189 = vdwg.mxu0
  %s2190 = scalar_lea.vmem %s6, 160
  %v2191 = vld [vmem:[%s2190] sm:$0xff]
  %v2192 = vld [vmem:[%s2190 + $0x8] sm:$0xff]
  %v2193 = vld [vmem:[%s2190 + $0x10] sm:$0xff]
  %v2194 = vld [vmem:[%s2190 + $0x18] sm:$0xff]
  %v2196 = vsel %vm1870, %v2182, 0
  %v2199 = vsel %vm1870, %v2185, 0
  %v2202 = vsel %vm1870, %v2188, 0
  %2204 = vmatpush.msra.mxu0 0.0
  %2205 = vmatpush.msra.mxu0 0.0
  %2206 = vmatpush.msra.mxu0 0.0
  %2207 = vmatpush.msra.mxu0 0.0
  %2208 = vmatpush.msra.mxu0 0.0
  %2209 = vmatpush.msra.mxu0 0.0
  %2210 = vmatpush.msra.mxu0 0.0
  %2211 = vmatpush.msra.mxu0 0.0
  %2212 = vmatpush.msra.mxu0 0.0
  %2213 = vmatpush.msra.mxu0 0.0
  %2214 = vmatpush.msra.mxu0 0.0
  %2215 = vmatpush.msra.mxu0 0.0
  %2216 = vmatpush.msra.mxu0 %v2194
  %2217 = vmatpush.msra.mxu0 %v2193
  %2218 = vmatpush.msra.mxu0 %v2192
  %2219 = vmatpush.msra.mxu0 %v2191
  %2220 = vmatmul.f32.gmra.mxu0 %v2196
  %v2221 = vpop.f32.mrf.mxu0
  %v2222 = vadd.f32 0.0, %v2221
  %2223 = vmatmul.f32.gmra.mxu0 %v2199
  %v2224 = vpop.f32.mrf.mxu0
  %v2225 = vadd.f32 0.0, %v2224
  %2226 = vmatmul.f32.gmra.mxu0 %v2202
  %v2227 = vpop.f32.mrf.mxu0
  %v2228 = vadd.f32 0.0, %v2227
  %2229 = vdwg.mxu0
  %v2230 = vadd.f32 %v2157, %v2222
  %v2231 = vadd.f32 %v2158, %v2225
  %v2232 = vadd.f32 %v2159, %v2228
  %s2233 = scalar_lea.vmem %s5, 144
  %v2234 = vld [vmem:[%s2233] sm:$0xff]
  %v2235 = vld [vmem:[%s2233 + $0x8] sm:$0xff]
  %v2236 = vld [vmem:[%s2233 + $0x10] sm:$0x3]
  %2237 = vmatpush.msra.mxu0 %v1801
  %2238 = vmatpush.msra.mxu0 %v1800
  %2239 = vmatpush.msra.mxu0 %v1799
  %2240 = vmatpush.msra.mxu0 %v1798
  %2241 = vmatpush.msra.mxu0 %v1797
  %2242 = vmatpush.msra.mxu0 %v1796
  %2243 = vmatpush.msra.mxu0 %v1795
  %2244 = vmatpush.msra.mxu0 %v1794
  %2245 = vmatpush.msra.mxu0 %v1793
  %2246 = vmatpush.msra.mxu0 %v1792
  %2247 = vmatpush.msra.mxu0 %v1791
  %2248 = vmatpush.msra.mxu0 %v1790
  %2249 = vmatpush.msra.mxu0 %v1789
  %2250 = vmatpush.msra.mxu0 %v1788
  %2251 = vmatpush.msra.mxu0 %v1787
  %2252 = vmatpush.msra.mxu0 %v1786
  %2253 = vmatmul.f32.gmra.mxu0 %v2234
  %v2254 = vpop.f32.mrf.mxu0
  %v2255 = vadd.f32 0.0, %v2254
  %2256 = vmatmul.f32.gmra.mxu0 %v2235
  %v2257 = vpop.f32.mrf.mxu0
  %v2258 = vadd.f32 0.0, %v2257
  %2259 = vmatmul.f32.gmra.mxu0 %v2236
  %v2260 = vpop.f32.mrf.mxu0
  %v2261 = vadd.f32 0.0, %v2260
  %2262 = vdwg.mxu0
  %s2263 = scalar_lea.vmem %s6, 192
  %v2264 = vld [vmem:[%s2263] sm:$0xff]
  %v2265 = vld [vmem:[%s2263 + $0x8] sm:$0xff]
  %v2266 = vld [vmem:[%s2263 + $0x10] sm:$0xff]
  %v2267 = vld [vmem:[%s2263 + $0x18] sm:$0xff]
  %v2269 = vsel %vm1870, %v2255, 0
  %v2272 = vsel %vm1870, %v2258, 0
  %v2275 = vsel %vm1870, %v2261, 0
  %2277 = vmatpush.msra.mxu0 0.0
  %2278 = vmatpush.msra.mxu0 0.0
  %2279 = vmatpush.msra.mxu0 0.0
  %2280 = vmatpush.msra.mxu0 0.0
  %2281 = vmatpush.msra.mxu0 0.0
  %2282 = vmatpush.msra.mxu0 0.0
  %2283 = vmatpush.msra.mxu0 0.0
  %2284 = vmatpush.msra.mxu0 0.0
  %2285 = vmatpush.msra.mxu0 0.0
  %2286 = vmatpush.msra.mxu0 0.0
  %2287 = vmatpush.msra.mxu0 0.0
  %2288 = vmatpush.msra.mxu0 0.0
  %2289 = vmatpush.msra.mxu0 %v2267
  %2290 = vmatpush.msra.mxu0 %v2266
  %2291 = vmatpush.msra.mxu0 %v2265
  %2292 = vmatpush.msra.mxu0 %v2264
  %2293 = vmatmul.f32.gmra.mxu0 %v2269
  %v2294 = vpop.f32.mrf.mxu0
  %v2295 = vadd.f32 0.0, %v2294
  %2296 = vmatmul.f32.gmra.mxu0 %v2272
  %v2297 = vpop.f32.mrf.mxu0
  %v2298 = vadd.f32 0.0, %v2297
  %2299 = vmatmul.f32.gmra.mxu0 %v2275
  %v2300 = vpop.f32.mrf.mxu0
  %v2301 = vadd.f32 0.0, %v2300
  %2302 = vdwg.mxu0
  %v2303 = vadd.f32 %v2230, %v2295
  %v2304 = vadd.f32 %v2231, %v2298
  %v2305 = vadd.f32 %v2232, %v2301
  %s2306 = scalar_lea.vmem %s5, 168
  %v2307 = vld [vmem:[%s2306] sm:$0xff]
  %v2308 = vld [vmem:[%s2306 + $0x8] sm:$0xff]
  %v2309 = vld [vmem:[%s2306 + $0x10] sm:$0x3]
  %2310 = vmatpush.msra.mxu0 %v1801
  %2311 = vmatpush.msra.mxu0 %v1800
  %2312 = vmatpush.msra.mxu0 %v1799
  %2313 = vmatpush.msra.mxu0 %v1798
  %2314 = vmatpush.msra.mxu0 %v1797
  %2315 = vmatpush.msra.mxu0 %v1796
  %2316 = vmatpush.msra.mxu0 %v1795
  %2317 = vmatpush.msra.mxu0 %v1794
  %2318 = vmatpush.msra.mxu0 %v1793
  %2319 = vmatpush.msra.mxu0 %v1792
  %2320 = vmatpush.msra.mxu0 %v1791
  %2321 = vmatpush.msra.mxu0 %v1790
  %2322 = vmatpush.msra.mxu0 %v1789
  %2323 = vmatpush.msra.mxu0 %v1788
  %2324 = vmatpush.msra.mxu0 %v1787
  %2325 = vmatpush.msra.mxu0 %v1786
  %2326 = vmatmul.f32.gmra.mxu0 %v2307
  %v2327 = vpop.f32.mrf.mxu0
  %v2328 = vadd.f32 0.0, %v2327
  %2329 = vmatmul.f32.gmra.mxu0 %v2308
  %v2330 = vpop.f32.mrf.mxu0
  %v2331 = vadd.f32 0.0, %v2330
  %2332 = vmatmul.f32.gmra.mxu0 %v2309
  %v2333 = vpop.f32.mrf.mxu0
  %v2334 = vadd.f32 0.0, %v2333
  %2335 = vdwg.mxu0
  %s2336 = scalar_lea.vmem %s6, 224
  %v2337 = vld [vmem:[%s2336] sm:$0xff]
  %v2338 = vld [vmem:[%s2336 + $0x8] sm:$0xff]
  %v2339 = vld [vmem:[%s2336 + $0x10] sm:$0xff]
  %v2340 = vld [vmem:[%s2336 + $0x18] sm:$0xff]
  %v2342 = vsel %vm1870, %v2328, 0
  %v2345 = vsel %vm1870, %v2331, 0
  %v2348 = vsel %vm1870, %v2334, 0
  %2350 = vmatpush.msra.mxu0 0.0
  %2351 = vmatpush.msra.mxu0 0.0
  %2352 = vmatpush.msra.mxu0 0.0
  %2353 = vmatpush.msra.mxu0 0.0
  %2354 = vmatpush.msra.mxu0 0.0
  %2355 = vmatpush.msra.mxu0 0.0
  %2356 = vmatpush.msra.mxu0 0.0
  %2357 = vmatpush.msra.mxu0 0.0
  %2358 = vmatpush.msra.mxu0 0.0
  %2359 = vmatpush.msra.mxu0 0.0
  %2360 = vmatpush.msra.mxu0 0.0
  %2361 = vmatpush.msra.mxu0 0.0
  %2362 = vmatpush.msra.mxu0 %v2340
  %2363 = vmatpush.msra.mxu0 %v2339
  %2364 = vmatpush.msra.mxu0 %v2338
  %2365 = vmatpush.msra.mxu0 %v2337
  %2366 = vmatmul.f32.gmra.mxu0 %v2342
  %v2367 = vpop.f32.mrf.mxu0
  %v2368 = vadd.f32 0.0, %v2367
  %2369 = vmatmul.f32.gmra.mxu0 %v2345
  %v2370 = vpop.f32.mrf.mxu0
  %v2371 = vadd.f32 0.0, %v2370
  %2372 = vmatmul.f32.gmra.mxu0 %v2348
  %v2373 = vpop.f32.mrf.mxu0
  %v2374 = vadd.f32 0.0, %v2373
  %2375 = vdwg.mxu0
  %v2376 = vadd.f32 %v2303, %v2368
  %v2377 = vadd.f32 %v2304, %v2371
  %v2378 = vadd.f32 %v2305, %v2374
  %s2379 = scalar_lea.vmem %s5, 192
  %v2380 = vld [vmem:[%s2379] sm:$0xff]
  %v2381 = vld [vmem:[%s2379 + $0x8] sm:$0xff]
  %v2382 = vld [vmem:[%s2379 + $0x10] sm:$0x3]
  %2383 = vmatpush.msra.mxu0 %v1801
  %2384 = vmatpush.msra.mxu0 %v1800
  %2385 = vmatpush.msra.mxu0 %v1799
  %2386 = vmatpush.msra.mxu0 %v1798
  %2387 = vmatpush.msra.mxu0 %v1797
  %2388 = vmatpush.msra.mxu0 %v1796
  %2389 = vmatpush.msra.mxu0 %v1795
  %2390 = vmatpush.msra.mxu0 %v1794
  %2391 = vmatpush.msra.mxu0 %v1793
  %2392 = vmatpush.msra.mxu0 %v1792
  %2393 = vmatpush.msra.mxu0 %v1791
  %2394 = vmatpush.msra.mxu0 %v1790
  %2395 = vmatpush.msra.mxu0 %v1789
  %2396 = vmatpush.msra.mxu0 %v1788
  %2397 = vmatpush.msra.mxu0 %v1787
  %2398 = vmatpush.msra.mxu0 %v1786
  %2399 = vmatmul.f32.gmra.mxu0 %v2380
  %v2400 = vpop.f32.mrf.mxu0
  %v2401 = vadd.f32 0.0, %v2400
  %2402 = vmatmul.f32.gmra.mxu0 %v2381
  %v2403 = vpop.f32.mrf.mxu0
  %v2404 = vadd.f32 0.0, %v2403
  %2405 = vmatmul.f32.gmra.mxu0 %v2382
  %v2406 = vpop.f32.mrf.mxu0
  %v2407 = vadd.f32 0.0, %v2406
  %2408 = vdwg.mxu0
  %s2409 = scalar_lea.vmem %s6, 256
  %v2410 = vld [vmem:[%s2409] sm:$0xff]
  %v2411 = vld [vmem:[%s2409 + $0x8] sm:$0xff]
  %v2412 = vld [vmem:[%s2409 + $0x10] sm:$0xff]
  %v2413 = vld [vmem:[%s2409 + $0x18] sm:$0xff]
  %v2415 = vsel %vm1870, %v2401, 0
  %v2418 = vsel %vm1870, %v2404, 0
  %v2421 = vsel %vm1870, %v2407, 0
  %2423 = vmatpush.msra.mxu0 0.0
  %2424 = vmatpush.msra.mxu0 0.0
  %2425 = vmatpush.msra.mxu0 0.0
  %2426 = vmatpush.msra.mxu0 0.0
  %2427 = vmatpush.msra.mxu0 0.0
  %2428 = vmatpush.msra.mxu0 0.0
  %2429 = vmatpush.msra.mxu0 0.0
  %2430 = vmatpush.msra.mxu0 0.0
  %2431 = vmatpush.msra.mxu0 0.0
  %2432 = vmatpush.msra.mxu0 0.0
  %2433 = vmatpush.msra.mxu0 0.0
  %2434 = vmatpush.msra.mxu0 0.0
  %2435 = vmatpush.msra.mxu0 %v2413
  %2436 = vmatpush.msra.mxu0 %v2412
  %2437 = vmatpush.msra.mxu0 %v2411
  %2438 = vmatpush.msra.mxu0 %v2410
  %2439 = vmatmul.f32.gmra.mxu0 %v2415
  %v2440 = vpop.f32.mrf.mxu0
  %v2441 = vadd.f32 0.0, %v2440
  %2442 = vmatmul.f32.gmra.mxu0 %v2418
  %v2443 = vpop.f32.mrf.mxu0
  %v2444 = vadd.f32 0.0, %v2443
  %2445 = vmatmul.f32.gmra.mxu0 %v2421
  %v2446 = vpop.f32.mrf.mxu0
  %v2447 = vadd.f32 0.0, %v2446
  %2448 = vdwg.mxu0
  %v2449 = vadd.f32 %v2376, %v2441
  %v2450 = vadd.f32 %v2377, %v2444
  %v2451 = vadd.f32 %v2378, %v2447
  %s2452 = scalar_lea.vmem %s5, 216
  %v2453 = vld [vmem:[%s2452] sm:$0xff]
  %v2454 = vld [vmem:[%s2452 + $0x8] sm:$0xff]
  %v2455 = vld [vmem:[%s2452 + $0x10] sm:$0x3]
  %2456 = vmatpush.msra.mxu0 %v1801
  %2457 = vmatpush.msra.mxu0 %v1800
  %2458 = vmatpush.msra.mxu0 %v1799
  %2459 = vmatpush.msra.mxu0 %v1798
  %2460 = vmatpush.msra.mxu0 %v1797
  %2461 = vmatpush.msra.mxu0 %v1796
  %2462 = vmatpush.msra.mxu0 %v1795
  %2463 = vmatpush.msra.mxu0 %v1794
  %2464 = vmatpush.msra.mxu0 %v1793
  %2465 = vmatpush.msra.mxu0 %v1792
  %2466 = vmatpush.msra.mxu0 %v1791
  %2467 = vmatpush.msra.mxu0 %v1790
  %2468 = vmatpush.msra.mxu0 %v1789
  %2469 = vmatpush.msra.mxu0 %v1788
  %2470 = vmatpush.msra.mxu0 %v1787
  %2471 = vmatpush.msra.mxu0 %v1786
  %2472 = vmatmul.f32.gmra.mxu0 %v2453
  %v2473 = vpop.f32.mrf.mxu0
  %v2474 = vadd.f32 0.0, %v2473
  %2475 = vmatmul.f32.gmra.mxu0 %v2454
  %v2476 = vpop.f32.mrf.mxu0
  %v2477 = vadd.f32 0.0, %v2476
  %2478 = vmatmul.f32.gmra.mxu0 %v2455
  %v2479 = vpop.f32.mrf.mxu0
  %v2480 = vadd.f32 0.0, %v2479
  %2481 = vdwg.mxu0
  %s2482 = scalar_lea.vmem %s6, 288
  %v2483 = vld [vmem:[%s2482] sm:$0xff]
  %v2484 = vld [vmem:[%s2482 + $0x8] sm:$0xff]
  %v2485 = vld [vmem:[%s2482 + $0x10] sm:$0xff]
  %v2486 = vld [vmem:[%s2482 + $0x18] sm:$0xff]
  %v2488 = vsel %vm1870, %v2474, 0
  %v2491 = vsel %vm1870, %v2477, 0
  %v2494 = vsel %vm1870, %v2480, 0
  %2496 = vmatpush.msra.mxu0 0.0
  %2497 = vmatpush.msra.mxu0 0.0
  %2498 = vmatpush.msra.mxu0 0.0
  %2499 = vmatpush.msra.mxu0 0.0
  %2500 = vmatpush.msra.mxu0 0.0
  %2501 = vmatpush.msra.mxu0 0.0
  %2502 = vmatpush.msra.mxu0 0.0
  %2503 = vmatpush.msra.mxu0 0.0
  %2504 = vmatpush.msra.mxu0 0.0
  %2505 = vmatpush.msra.mxu0 0.0
  %2506 = vmatpush.msra.mxu0 0.0
  %2507 = vmatpush.msra.mxu0 0.0
  %2508 = vmatpush.msra.mxu0 %v2486
  %2509 = vmatpush.msra.mxu0 %v2485
  %2510 = vmatpush.msra.mxu0 %v2484
  %2511 = vmatpush.msra.mxu0 %v2483
  %2512 = vmatmul.f32.gmra.mxu0 %v2488
  %v2513 = vpop.f32.mrf.mxu0
  %v2514 = vadd.f32 0.0, %v2513
  %2515 = vmatmul.f32.gmra.mxu0 %v2491
  %v2516 = vpop.f32.mrf.mxu0
  %v2517 = vadd.f32 0.0, %v2516
  %2518 = vmatmul.f32.gmra.mxu0 %v2494
  %v2519 = vpop.f32.mrf.mxu0
  %v2520 = vadd.f32 0.0, %v2519
  %2521 = vdwg.mxu0
  %v2522 = vadd.f32 %v2449, %v2514
  %v2523 = vadd.f32 %v2450, %v2517
  %v2524 = vadd.f32 %v2451, %v2520
  %s2525 = scalar_lea.vmem %s5, 240
  %v2526 = vld [vmem:[%s2525] sm:$0xff]
  %v2527 = vld [vmem:[%s2525 + $0x8] sm:$0xff]
  %v2528 = vld [vmem:[%s2525 + $0x10] sm:$0x3]
  %2529 = vmatpush.msra.mxu0 %v1801
  %2530 = vmatpush.msra.mxu0 %v1800
  %2531 = vmatpush.msra.mxu0 %v1799
  %2532 = vmatpush.msra.mxu0 %v1798
  %2533 = vmatpush.msra.mxu0 %v1797
  %2534 = vmatpush.msra.mxu0 %v1796
  %2535 = vmatpush.msra.mxu0 %v1795
  %2536 = vmatpush.msra.mxu0 %v1794
  %2537 = vmatpush.msra.mxu0 %v1793
  %2538 = vmatpush.msra.mxu0 %v1792
  %2539 = vmatpush.msra.mxu0 %v1791
  %2540 = vmatpush.msra.mxu0 %v1790
  %2541 = vmatpush.msra.mxu0 %v1789
  %2542 = vmatpush.msra.mxu0 %v1788
  %2543 = vmatpush.msra.mxu0 %v1787
  %2544 = vmatpush.msra.mxu0 %v1786
  %2545 = vmatmul.f32.gmra.mxu0 %v2526
  %v2546 = vpop.f32.mrf.mxu0
  %v2547 = vadd.f32 0.0, %v2546
  %2548 = vmatmul.f32.gmra.mxu0 %v2527
  %v2549 = vpop.f32.mrf.mxu0
  %v2550 = vadd.f32 0.0, %v2549
  %2551 = vmatmul.f32.gmra.mxu0 %v2528
  %v2552 = vpop.f32.mrf.mxu0
  %v2553 = vadd.f32 0.0, %v2552
  %2554 = vdwg.mxu0
  %s2555 = scalar_lea.vmem %s6, 320
  %v2556 = vld [vmem:[%s2555] sm:$0xff]
  %v2557 = vld [vmem:[%s2555 + $0x8] sm:$0xff]
  %v2558 = vld [vmem:[%s2555 + $0x10] sm:$0xff]
  %v2559 = vld [vmem:[%s2555 + $0x18] sm:$0xff]
  %v2561 = vsel %vm1870, %v2547, 0
  %v2564 = vsel %vm1870, %v2550, 0
  %v2567 = vsel %vm1870, %v2553, 0
  %2569 = vmatpush.msra.mxu0 0.0
  %2570 = vmatpush.msra.mxu0 0.0
  %2571 = vmatpush.msra.mxu0 0.0
  %2572 = vmatpush.msra.mxu0 0.0
  %2573 = vmatpush.msra.mxu0 0.0
  %2574 = vmatpush.msra.mxu0 0.0
  %2575 = vmatpush.msra.mxu0 0.0
  %2576 = vmatpush.msra.mxu0 0.0
  %2577 = vmatpush.msra.mxu0 0.0
  %2578 = vmatpush.msra.mxu0 0.0
  %2579 = vmatpush.msra.mxu0 0.0
  %2580 = vmatpush.msra.mxu0 0.0
  %2581 = vmatpush.msra.mxu0 %v2559
  %2582 = vmatpush.msra.mxu0 %v2558
  %2583 = vmatpush.msra.mxu0 %v2557
  %2584 = vmatpush.msra.mxu0 %v2556
  %2585 = vmatmul.f32.gmra.mxu0 %v2561
  %v2586 = vpop.f32.mrf.mxu0
  %v2587 = vadd.f32 0.0, %v2586
  %2588 = vmatmul.f32.gmra.mxu0 %v2564
  %v2589 = vpop.f32.mrf.mxu0
  %v2590 = vadd.f32 0.0, %v2589
  %2591 = vmatmul.f32.gmra.mxu0 %v2567
  %v2592 = vpop.f32.mrf.mxu0
  %v2593 = vadd.f32 0.0, %v2592
  %2594 = vdwg.mxu0
  %v2595 = vadd.f32 %v2522, %v2587
  %v2596 = vadd.f32 %v2523, %v2590
  %v2597 = vadd.f32 %v2524, %v2593
  %s2598 = scalar_lea.vmem %s5, 264
  %v2599 = vld [vmem:[%s2598] sm:$0xff]
  %v2600 = vld [vmem:[%s2598 + $0x8] sm:$0xff]
  %v2601 = vld [vmem:[%s2598 + $0x10] sm:$0x3]
  %2602 = vmatpush.msra.mxu0 %v1801
  %2603 = vmatpush.msra.mxu0 %v1800
  %2604 = vmatpush.msra.mxu0 %v1799
  %2605 = vmatpush.msra.mxu0 %v1798
  %2606 = vmatpush.msra.mxu0 %v1797
  %2607 = vmatpush.msra.mxu0 %v1796
  %2608 = vmatpush.msra.mxu0 %v1795
  %2609 = vmatpush.msra.mxu0 %v1794
  %2610 = vmatpush.msra.mxu0 %v1793
  %2611 = vmatpush.msra.mxu0 %v1792
  %2612 = vmatpush.msra.mxu0 %v1791
  %2613 = vmatpush.msra.mxu0 %v1790
  %2614 = vmatpush.msra.mxu0 %v1789
  %2615 = vmatpush.msra.mxu0 %v1788
  %2616 = vmatpush.msra.mxu0 %v1787
  %2617 = vmatpush.msra.mxu0 %v1786
  %2618 = vmatmul.f32.gmra.mxu0 %v2599
  %v2619 = vpop.f32.mrf.mxu0
  %v2620 = vadd.f32 0.0, %v2619
  %2621 = vmatmul.f32.gmra.mxu0 %v2600
  %v2622 = vpop.f32.mrf.mxu0
  %v2623 = vadd.f32 0.0, %v2622
  %2624 = vmatmul.f32.gmra.mxu0 %v2601
  %v2625 = vpop.f32.mrf.mxu0
  %v2626 = vadd.f32 0.0, %v2625
  %2627 = vdwg.mxu0
  %s2628 = scalar_lea.vmem %s6, 352
  %v2629 = vld [vmem:[%s2628] sm:$0xff]
  %v2630 = vld [vmem:[%s2628 + $0x8] sm:$0xff]
  %v2631 = vld [vmem:[%s2628 + $0x10] sm:$0xff]
  %v2632 = vld [vmem:[%s2628 + $0x18] sm:$0xff]
  %v2634 = vsel %vm1870, %v2620, 0
  %v2637 = vsel %vm1870, %v2623, 0
  %v2640 = vsel %vm1870, %v2626, 0
  %2642 = vmatpush.msra.mxu0 0.0
  %2643 = vmatpush.msra.mxu0 0.0
  %2644 = vmatpush.msra.mxu0 0.0
  %2645 = vmatpush.msra.mxu0 0.0
  %2646 = vmatpush.msra.mxu0 0.0
  %2647 = vmatpush.msra.mxu0 0.0
  %2648 = vmatpush.msra.mxu0 0.0
  %2649 = vmatpush.msra.mxu0 0.0
  %2650 = vmatpush.msra.mxu0 0.0
  %2651 = vmatpush.msra.mxu0 0.0
  %2652 = vmatpush.msra.mxu0 0.0
  %2653 = vmatpush.msra.mxu0 0.0
  %2654 = vmatpush.msra.mxu0 %v2632
  %2655 = vmatpush.msra.mxu0 %v2631
  %2656 = vmatpush.msra.mxu0 %v2630
  %2657 = vmatpush.msra.mxu0 %v2629
  %2658 = vmatmul.f32.gmra.mxu0 %v2634
  %v2659 = vpop.f32.mrf.mxu0
  %v2660 = vadd.f32 0.0, %v2659
  %2661 = vmatmul.f32.gmra.mxu0 %v2637
  %v2662 = vpop.f32.mrf.mxu0
  %v2663 = vadd.f32 0.0, %v2662
  %2664 = vmatmul.f32.gmra.mxu0 %v2640
  %v2665 = vpop.f32.mrf.mxu0
  %v2666 = vadd.f32 0.0, %v2665
  %2667 = vdwg.mxu0
  %v2668 = vadd.f32 %v2595, %v2660
  %v2669 = vadd.f32 %v2596, %v2663
  %v2670 = vadd.f32 %v2597, %v2666
  %s2671 = scalar_lea.vmem %s5, 288
  %v2672 = vld [vmem:[%s2671] sm:$0xff]
  %v2673 = vld [vmem:[%s2671 + $0x8] sm:$0xff]
  %v2674 = vld [vmem:[%s2671 + $0x10] sm:$0x3]
  %2675 = vmatpush.msra.mxu0 %v1801
  %2676 = vmatpush.msra.mxu0 %v1800
  %2677 = vmatpush.msra.mxu0 %v1799
  %2678 = vmatpush.msra.mxu0 %v1798
  %2679 = vmatpush.msra.mxu0 %v1797
  %2680 = vmatpush.msra.mxu0 %v1796
  %2681 = vmatpush.msra.mxu0 %v1795
  %2682 = vmatpush.msra.mxu0 %v1794
  %2683 = vmatpush.msra.mxu0 %v1793
  %2684 = vmatpush.msra.mxu0 %v1792
  %2685 = vmatpush.msra.mxu0 %v1791
  %2686 = vmatpush.msra.mxu0 %v1790
  %2687 = vmatpush.msra.mxu0 %v1789
  %2688 = vmatpush.msra.mxu0 %v1788
  %2689 = vmatpush.msra.mxu0 %v1787
  %2690 = vmatpush.msra.mxu0 %v1786
  %2691 = vmatmul.f32.gmra.mxu0 %v2672
  %v2692 = vpop.f32.mrf.mxu0
  %v2693 = vadd.f32 0.0, %v2692
  %2694 = vmatmul.f32.gmra.mxu0 %v2673
  %v2695 = vpop.f32.mrf.mxu0
  %v2696 = vadd.f32 0.0, %v2695
  %2697 = vmatmul.f32.gmra.mxu0 %v2674
  %v2698 = vpop.f32.mrf.mxu0
  %v2699 = vadd.f32 0.0, %v2698
  %2700 = vdwg.mxu0
  %s2701 = scalar_lea.vmem %s6, 384
  %v2702 = vld [vmem:[%s2701] sm:$0xff]
  %v2703 = vld [vmem:[%s2701 + $0x8] sm:$0xff]
  %v2704 = vld [vmem:[%s2701 + $0x10] sm:$0xff]
  %v2705 = vld [vmem:[%s2701 + $0x18] sm:$0xff]
  %v2707 = vsel %vm1870, %v2693, 0
  %v2710 = vsel %vm1870, %v2696, 0
  %v2713 = vsel %vm1870, %v2699, 0
  %2715 = vmatpush.msra.mxu0 0.0
  %2716 = vmatpush.msra.mxu0 0.0
  %2717 = vmatpush.msra.mxu0 0.0
  %2718 = vmatpush.msra.mxu0 0.0
  %2719 = vmatpush.msra.mxu0 0.0
  %2720 = vmatpush.msra.mxu0 0.0
  %2721 = vmatpush.msra.mxu0 0.0
  %2722 = vmatpush.msra.mxu0 0.0
  %2723 = vmatpush.msra.mxu0 0.0
  %2724 = vmatpush.msra.mxu0 0.0
  %2725 = vmatpush.msra.mxu0 0.0
  %2726 = vmatpush.msra.mxu0 0.0
  %2727 = vmatpush.msra.mxu0 %v2705
  %2728 = vmatpush.msra.mxu0 %v2704
  %2729 = vmatpush.msra.mxu0 %v2703
  %2730 = vmatpush.msra.mxu0 %v2702
  %2731 = vmatmul.f32.gmra.mxu0 %v2707
  %v2732 = vpop.f32.mrf.mxu0
  %v2733 = vadd.f32 0.0, %v2732
  %2734 = vmatmul.f32.gmra.mxu0 %v2710
  %v2735 = vpop.f32.mrf.mxu0
  %v2736 = vadd.f32 0.0, %v2735
  %2737 = vmatmul.f32.gmra.mxu0 %v2713
  %v2738 = vpop.f32.mrf.mxu0
  %v2739 = vadd.f32 0.0, %v2738
  %2740 = vdwg.mxu0
  %v2741 = vadd.f32 %v2668, %v2733
  %v2742 = vadd.f32 %v2669, %v2736
  %v2743 = vadd.f32 %v2670, %v2739
  %s2744 = scalar_lea.vmem %s5, 312
  %v2745 = vld [vmem:[%s2744] sm:$0xff]
  %v2746 = vld [vmem:[%s2744 + $0x8] sm:$0xff]
  %v2747 = vld [vmem:[%s2744 + $0x10] sm:$0x3]
  %2748 = vmatpush.msra.mxu0 %v1801
  %2749 = vmatpush.msra.mxu0 %v1800
  %2750 = vmatpush.msra.mxu0 %v1799
  %2751 = vmatpush.msra.mxu0 %v1798
  %2752 = vmatpush.msra.mxu0 %v1797
  %2753 = vmatpush.msra.mxu0 %v1796
  %2754 = vmatpush.msra.mxu0 %v1795
  %2755 = vmatpush.msra.mxu0 %v1794
  %2756 = vmatpush.msra.mxu0 %v1793
  %2757 = vmatpush.msra.mxu0 %v1792
  %2758 = vmatpush.msra.mxu0 %v1791
  %2759 = vmatpush.msra.mxu0 %v1790
  %2760 = vmatpush.msra.mxu0 %v1789
  %2761 = vmatpush.msra.mxu0 %v1788
  %2762 = vmatpush.msra.mxu0 %v1787
  %2763 = vmatpush.msra.mxu0 %v1786
  %2764 = vmatmul.f32.gmra.mxu0 %v2745
  %v2765 = vpop.f32.mrf.mxu0
  %v2766 = vadd.f32 0.0, %v2765
  %2767 = vmatmul.f32.gmra.mxu0 %v2746
  %v2768 = vpop.f32.mrf.mxu0
  %v2769 = vadd.f32 0.0, %v2768
  %2770 = vmatmul.f32.gmra.mxu0 %v2747
  %v2771 = vpop.f32.mrf.mxu0
  %v2772 = vadd.f32 0.0, %v2771
  %2773 = vdwg.mxu0
  %s2774 = scalar_lea.vmem %s6, 416
  %v2775 = vld [vmem:[%s2774] sm:$0xff]
  %v2776 = vld [vmem:[%s2774 + $0x8] sm:$0xff]
  %v2777 = vld [vmem:[%s2774 + $0x10] sm:$0xff]
  %v2778 = vld [vmem:[%s2774 + $0x18] sm:$0xff]
  %v2780 = vsel %vm1870, %v2766, 0
  %v2783 = vsel %vm1870, %v2769, 0
  %v2786 = vsel %vm1870, %v2772, 0
  %2788 = vmatpush.msra.mxu0 0.0
  %2789 = vmatpush.msra.mxu0 0.0
  %2790 = vmatpush.msra.mxu0 0.0
  %2791 = vmatpush.msra.mxu0 0.0
  %2792 = vmatpush.msra.mxu0 0.0
  %2793 = vmatpush.msra.mxu0 0.0
  %2794 = vmatpush.msra.mxu0 0.0
  %2795 = vmatpush.msra.mxu0 0.0
  %2796 = vmatpush.msra.mxu0 0.0
  %2797 = vmatpush.msra.mxu0 0.0
  %2798 = vmatpush.msra.mxu0 0.0
  %2799 = vmatpush.msra.mxu0 0.0
  %2800 = vmatpush.msra.mxu0 %v2778
  %2801 = vmatpush.msra.mxu0 %v2777
  %2802 = vmatpush.msra.mxu0 %v2776
  %2803 = vmatpush.msra.mxu0 %v2775
  %2804 = vmatmul.f32.gmra.mxu0 %v2780
  %v2805 = vpop.f32.mrf.mxu0
  %v2806 = vadd.f32 0.0, %v2805
  %2807 = vmatmul.f32.gmra.mxu0 %v2783
  %v2808 = vpop.f32.mrf.mxu0
  %v2809 = vadd.f32 0.0, %v2808
  %2810 = vmatmul.f32.gmra.mxu0 %v2786
  %v2811 = vpop.f32.mrf.mxu0
  %v2812 = vadd.f32 0.0, %v2811
  %2813 = vdwg.mxu0
  %v2814 = vadd.f32 %v2741, %v2806
  %v2815 = vadd.f32 %v2742, %v2809
  %v2816 = vadd.f32 %v2743, %v2812
  %s2817 = scalar_lea.vmem %s5, 336
  %v2818 = vld [vmem:[%s2817] sm:$0xff]
  %v2819 = vld [vmem:[%s2817 + $0x8] sm:$0xff]
  %v2820 = vld [vmem:[%s2817 + $0x10] sm:$0x3]
  %2821 = vmatpush.msra.mxu0 %v1801
  %2822 = vmatpush.msra.mxu0 %v1800
  %2823 = vmatpush.msra.mxu0 %v1799
  %2824 = vmatpush.msra.mxu0 %v1798
  %2825 = vmatpush.msra.mxu0 %v1797
  %2826 = vmatpush.msra.mxu0 %v1796
  %2827 = vmatpush.msra.mxu0 %v1795
  %2828 = vmatpush.msra.mxu0 %v1794
  %2829 = vmatpush.msra.mxu0 %v1793
  %2830 = vmatpush.msra.mxu0 %v1792
  %2831 = vmatpush.msra.mxu0 %v1791
  %2832 = vmatpush.msra.mxu0 %v1790
  %2833 = vmatpush.msra.mxu0 %v1789
  %2834 = vmatpush.msra.mxu0 %v1788
  %2835 = vmatpush.msra.mxu0 %v1787
  %2836 = vmatpush.msra.mxu0 %v1786
  %2837 = vmatmul.f32.gmra.mxu0 %v2818
  %v2838 = vpop.f32.mrf.mxu0
  %v2839 = vadd.f32 0.0, %v2838
  %2840 = vmatmul.f32.gmra.mxu0 %v2819
  %v2841 = vpop.f32.mrf.mxu0
  %v2842 = vadd.f32 0.0, %v2841
  %2843 = vmatmul.f32.gmra.mxu0 %v2820
  %v2844 = vpop.f32.mrf.mxu0
  %v2845 = vadd.f32 0.0, %v2844
  %2846 = vdwg.mxu0
  %s2847 = scalar_lea.vmem %s6, 448
  %v2848 = vld [vmem:[%s2847] sm:$0xff]
  %v2849 = vld [vmem:[%s2847 + $0x8] sm:$0xff]
  %v2850 = vld [vmem:[%s2847 + $0x10] sm:$0xff]
  %v2851 = vld [vmem:[%s2847 + $0x18] sm:$0xff]
  %v2853 = vsel %vm1870, %v2839, 0
  %v2856 = vsel %vm1870, %v2842, 0
  %v2859 = vsel %vm1870, %v2845, 0
  %2861 = vmatpush.msra.mxu0 0.0
  %2862 = vmatpush.msra.mxu0 0.0
  %2863 = vmatpush.msra.mxu0 0.0
  %2864 = vmatpush.msra.mxu0 0.0
  %2865 = vmatpush.msra.mxu0 0.0
  %2866 = vmatpush.msra.mxu0 0.0
  %2867 = vmatpush.msra.mxu0 0.0
  %2868 = vmatpush.msra.mxu0 0.0
  %2869 = vmatpush.msra.mxu0 0.0
  %2870 = vmatpush.msra.mxu0 0.0
  %2871 = vmatpush.msra.mxu0 0.0
  %2872 = vmatpush.msra.mxu0 0.0
  %2873 = vmatpush.msra.mxu0 %v2851
  %2874 = vmatpush.msra.mxu0 %v2850
  %2875 = vmatpush.msra.mxu0 %v2849
  %2876 = vmatpush.msra.mxu0 %v2848
  %2877 = vmatmul.f32.gmra.mxu0 %v2853
  %v2878 = vpop.f32.mrf.mxu0
  %v2879 = vadd.f32 0.0, %v2878
  %2880 = vmatmul.f32.gmra.mxu0 %v2856
  %v2881 = vpop.f32.mrf.mxu0
  %v2882 = vadd.f32 0.0, %v2881
  %2883 = vmatmul.f32.gmra.mxu0 %v2859
  %v2884 = vpop.f32.mrf.mxu0
  %v2885 = vadd.f32 0.0, %v2884
  %2886 = vdwg.mxu0
  %v2887 = vadd.f32 %v2814, %v2879
  %v2888 = vadd.f32 %v2815, %v2882
  %v2889 = vadd.f32 %v2816, %v2885
  %s2890 = scalar_lea.vmem %s5, 360
  %v2891 = vld [vmem:[%s2890] sm:$0xff]
  %v2892 = vld [vmem:[%s2890 + $0x8] sm:$0xff]
  %v2893 = vld [vmem:[%s2890 + $0x10] sm:$0x3]
  %2894 = vmatpush.msra.mxu0 %v1801
  %2895 = vmatpush.msra.mxu0 %v1800
  %2896 = vmatpush.msra.mxu0 %v1799
  %2897 = vmatpush.msra.mxu0 %v1798
  %2898 = vmatpush.msra.mxu0 %v1797
  %2899 = vmatpush.msra.mxu0 %v1796
  %2900 = vmatpush.msra.mxu0 %v1795
  %2901 = vmatpush.msra.mxu0 %v1794
  %2902 = vmatpush.msra.mxu0 %v1793
  %2903 = vmatpush.msra.mxu0 %v1792
  %2904 = vmatpush.msra.mxu0 %v1791
  %2905 = vmatpush.msra.mxu0 %v1790
  %2906 = vmatpush.msra.mxu0 %v1789
  %2907 = vmatpush.msra.mxu0 %v1788
  %2908 = vmatpush.msra.mxu0 %v1787
  %2909 = vmatpush.msra.mxu0 %v1786
  %2910 = vmatmul.f32.gmra.mxu0 %v2891
  %v2911 = vpop.f32.mrf.mxu0
  %v2912 = vadd.f32 0.0, %v2911
  %2913 = vmatmul.f32.gmra.mxu0 %v2892
  %v2914 = vpop.f32.mrf.mxu0
  %v2915 = vadd.f32 0.0, %v2914
  %2916 = vmatmul.f32.gmra.mxu0 %v2893
  %v2917 = vpop.f32.mrf.mxu0
  %v2918 = vadd.f32 0.0, %v2917
  %2919 = vdwg.mxu0
  %s2920 = scalar_lea.vmem %s6, 480
  %v2921 = vld [vmem:[%s2920] sm:$0xff]
  %v2922 = vld [vmem:[%s2920 + $0x8] sm:$0xff]
  %v2923 = vld [vmem:[%s2920 + $0x10] sm:$0xff]
  %v2924 = vld [vmem:[%s2920 + $0x18] sm:$0xff]
  %v2926 = vsel %vm1870, %v2912, 0
  %v2929 = vsel %vm1870, %v2915, 0
  %v2932 = vsel %vm1870, %v2918, 0
  %2934 = vmatpush.msra.mxu0 0.0
  %2935 = vmatpush.msra.mxu0 0.0
  %2936 = vmatpush.msra.mxu0 0.0
  %2937 = vmatpush.msra.mxu0 0.0
  %2938 = vmatpush.msra.mxu0 0.0
  %2939 = vmatpush.msra.mxu0 0.0
  %2940 = vmatpush.msra.mxu0 0.0
  %2941 = vmatpush.msra.mxu0 0.0
  %2942 = vmatpush.msra.mxu0 0.0
  %2943 = vmatpush.msra.mxu0 0.0
  %2944 = vmatpush.msra.mxu0 0.0
  %2945 = vmatpush.msra.mxu0 0.0
  %2946 = vmatpush.msra.mxu0 %v2924
  %2947 = vmatpush.msra.mxu0 %v2923
  %2948 = vmatpush.msra.mxu0 %v2922
  %2949 = vmatpush.msra.mxu0 %v2921
  %2950 = vmatmul.f32.gmra.mxu0 %v2926
  %v2951 = vpop.f32.mrf.mxu0
  %v2952 = vadd.f32 0.0, %v2951
  %2953 = vmatmul.f32.gmra.mxu0 %v2929
  %v2954 = vpop.f32.mrf.mxu0
  %v2955 = vadd.f32 0.0, %v2954
  %2956 = vmatmul.f32.gmra.mxu0 %v2932
  %v2957 = vpop.f32.mrf.mxu0
  %v2958 = vadd.f32 0.0, %v2957
  %2959 = vdwg.mxu0
  %v2960 = vadd.f32 %v2887, %v2952
  %v2961 = vadd.f32 %v2888, %v2955
  %v2962 = vadd.f32 %v2889, %v2958
  %v2963 = vld [vmem:[%s7] sm:$0x1]
  %v2965 = vperm.slane %v2963, 0
  %v2967 = vadd.f32 %v2960, %v2965
  %v2968 = vadd.f32 %v2961, %v2965
  %v2969 = vadd.f32 %v2962, %v2965
  %v2970 = vmax.f32 %v2967, 0.0
  %v2971 = vmax.f32 %v2968, 0.0
  %v2972 = vmax.f32 %v2969, 0.0
  %v2973 = vld [vmem:[%s8] sm:$0x3]
  %vm2974 = vcmask 146432
  %v2976 = vsel %vm2974, %v2973, 0
  %v2979 = vsel %vm605, %v2972, 0
  %2981 = vmatpush.msra.mxu0 0.0
  %2982 = vmatpush.msra.mxu0 0.0
  %2983 = vmatpush.msra.mxu0 0.0
  %2984 = vmatpush.msra.mxu0 0.0
  %2985 = vmatpush.msra.mxu0 0.0
  %2986 = vmatpush.msra.mxu0 0.0
  %2987 = vmatpush.msra.mxu0 0.0
  %2988 = vmatpush.msra.mxu0 0.0
  %2989 = vmatpush.msra.mxu0 0.0
  %2990 = vmatpush.msra.mxu0 0.0
  %2991 = vmatpush.msra.mxu0 0.0
  %2992 = vmatpush.msra.mxu0 0.0
  %2993 = vmatpush.msra.mxu0 0.0
  %2994 = vmatpush.msra.mxu0 %v2979
  %2995 = vmatpush.msra.mxu0 %v2971
  %2996 = vmatpush.msra.mxu0 %v2970
  %2997 = vmatmul.f32.gmra.mxu0 %v2976
  %v2998 = vpop.f32.mrf.mxu0
  %v2999 = vadd.f32 0.0, %v2998
  %3000 = vdwg.mxu0
  %v3001 = vld [vmem:[%s9] sm:$0xff]
  %v3002 = vld [vmem:[%s9 + $0x8] sm:$0xff]
  %v3003 = vld [vmem:[%s9 + $0x10] sm:$0xff]
  %v3004 = vld [vmem:[%s9 + $0x18] sm:$0xff]
  %v3005 = vld [vmem:[%s9 + $0x20] sm:$0xff]
  %v3006 = vld [vmem:[%s9 + $0x28] sm:$0xff]
  %v3007 = vld [vmem:[%s9 + $0x30] sm:$0xff]
  %v3008 = vld [vmem:[%s9 + $0x38] sm:$0xff]
  %s3009 = scalar_lea.vmem %s8, 2
  %v3010 = vld [vmem:[%s3009] sm:$0x3]
  %v3012 = vsel %vm2974, %v3010, 0
  %3014 = vmatpush.msra.mxu0 0.0
  %3015 = vmatpush.msra.mxu0 0.0
  %3016 = vmatpush.msra.mxu0 0.0
  %3017 = vmatpush.msra.mxu0 0.0
  %3018 = vmatpush.msra.mxu0 0.0
  %3019 = vmatpush.msra.mxu0 0.0
  %3020 = vmatpush.msra.mxu0 0.0
  %3021 = vmatpush.msra.mxu0 0.0
  %3022 = vmatpush.msra.mxu0 0.0
  %3023 = vmatpush.msra.mxu0 0.0
  %3024 = vmatpush.msra.mxu0 0.0
  %3025 = vmatpush.msra.mxu0 0.0
  %3026 = vmatpush.msra.mxu0 0.0
  %3027 = vmatpush.msra.mxu0 %v2979
  %3028 = vmatpush.msra.mxu0 %v2971
  %3029 = vmatpush.msra.mxu0 %v2970
  %3030 = vmatmul.f32.gmra.mxu0 %v3012
  %v3031 = vpop.f32.mrf.mxu0
  %v3032 = vadd.f32 0.0, %v3031
  %3033 = vdwg.mxu0
  %s3034 = scalar_lea.vmem %s9, 64
  %v3035 = vld [vmem:[%s3034] sm:$0xff]
  %v3036 = vld [vmem:[%s3034 + $0x8] sm:$0xff]
  %v3037 = vld [vmem:[%s3034 + $0x10] sm:$0xff]
  %v3038 = vld [vmem:[%s3034 + $0x18] sm:$0xff]
  %v3039 = vld [vmem:[%s3034 + $0x20] sm:$0xff]
  %v3040 = vld [vmem:[%s3034 + $0x28] sm:$0xff]
  %v3041 = vld [vmem:[%s3034 + $0x30] sm:$0xff]
  %v3042 = vld [vmem:[%s3034 + $0x38] sm:$0xff]
  %vm3043 = vcmask 523264
  %v3045 = vsel %vm3043, %v3032, 0
  %3047 = vmatpush.msra.mxu0 0.0
  %3048 = vmatpush.msra.mxu0 0.0
  %3049 = vmatpush.msra.mxu0 0.0
  %3050 = vmatpush.msra.mxu0 0.0
  %3051 = vmatpush.msra.mxu0 0.0
  %3052 = vmatpush.msra.mxu0 0.0
  %3053 = vmatpush.msra.mxu0 0.0
  %3054 = vmatpush.msra.mxu0 0.0
  %3055 = vmatpush.msra.mxu0 %v3042
  %3056 = vmatpush.msra.mxu0 %v3041
  %3057 = vmatpush.msra.mxu0 %v3040
  %3058 = vmatpush.msra.mxu0 %v3039
  %3059 = vmatpush.msra.mxu0 %v3038
  %3060 = vmatpush.msra.mxu0 %v3037
  %3061 = vmatpush.msra.mxu0 %v3036
  %3062 = vmatpush.msra.mxu0 %v3035
  %3063 = vmatmul.f32.gmra.mxu0 %v3045
  %v3064 = vpop.f32.mrf.mxu0
  %v3065 = vadd.f32 0.0, %v3064
  %3066 = vdwg.mxu0
  %v3068 = vsel %vm3043, %v2999, 0
  %3070 = vmatpush.msra.mxu0 0.0
  %3071 = vmatpush.msra.mxu0 0.0
  %3072 = vmatpush.msra.mxu0 0.0
  %3073 = vmatpush.msra.mxu0 0.0
  %3074 = vmatpush.msra.mxu0 0.0
  %3075 = vmatpush.msra.mxu0 0.0
  %3076 = vmatpush.msra.mxu0 0.0
  %3077 = vmatpush.msra.mxu0 0.0
  %3078 = vmatpush.msra.mxu0 %v3008
  %3079 = vmatpush.msra.mxu0 %v3007
  %3080 = vmatpush.msra.mxu0 %v3006
  %3081 = vmatpush.msra.mxu0 %v3005
  %3082 = vmatpush.msra.mxu0 %v3004
  %3083 = vmatpush.msra.mxu0 %v3003
  %3084 = vmatpush.msra.mxu0 %v3002
  %3085 = vmatpush.msra.mxu0 %v3001
  %3086 = vmatmul.f32.gmra.mxu0 %v3068
  %v3087 = vpop.f32.mrf.mxu0
  %v3088 = vadd.f32 %v3065, %v3087
  %3089 = vdwg.mxu0
  %s3090 = scalar_lea.vmem %s8, 4
  %v3091 = vld [vmem:[%s3090] sm:$0x3]
  %v3093 = vsel %vm2974, %v3091, 0
  %3095 = vmatpush.msra.mxu0 0.0
  %3096 = vmatpush.msra.mxu0 0.0
  %3097 = vmatpush.msra.mxu0 0.0
  %3098 = vmatpush.msra.mxu0 0.0
  %3099 = vmatpush.msra.mxu0 0.0
  %3100 = vmatpush.msra.mxu0 0.0
  %3101 = vmatpush.msra.mxu0 0.0
  %3102 = vmatpush.msra.mxu0 0.0
  %3103 = vmatpush.msra.mxu0 0.0
  %3104 = vmatpush.msra.mxu0 0.0
  %3105 = vmatpush.msra.mxu0 0.0
  %3106 = vmatpush.msra.mxu0 0.0
  %3107 = vmatpush.msra.mxu0 0.0
  %3108 = vmatpush.msra.mxu0 %v2979
  %3109 = vmatpush.msra.mxu0 %v2971
  %3110 = vmatpush.msra.mxu0 %v2970
  %3111 = vmatmul.f32.gmra.mxu0 %v3093
  %v3112 = vpop.f32.mrf.mxu0
  %v3113 = vadd.f32 0.0, %v3112
  %3114 = vdwg.mxu0
  %s3115 = scalar_lea.vmem %s9, 128
  %v3116 = vld [vmem:[%s3115] sm:$0xff]
  %v3117 = vld [vmem:[%s3115 + $0x8] sm:$0xff]
  %v3118 = vld [vmem:[%s3115 + $0x10] sm:$0xff]
  %v3119 = vld [vmem:[%s3115 + $0x18] sm:$0xff]
  %v3120 = vld [vmem:[%s3115 + $0x20] sm:$0xff]
  %v3121 = vld [vmem:[%s3115 + $0x28] sm:$0xff]
  %v3122 = vld [vmem:[%s3115 + $0x30] sm:$0xff]
  %v3123 = vld [vmem:[%s3115 + $0x38] sm:$0xff]
  %v3125 = vsel %vm3043, %v3113, 0
  %3127 = vmatpush.msra.mxu0 0.0
  %3128 = vmatpush.msra.mxu0 0.0
  %3129 = vmatpush.msra.mxu0 0.0
  %3130 = vmatpush.msra.mxu0 0.0
  %3131 = vmatpush.msra.mxu0 0.0
  %3132 = vmatpush.msra.mxu0 0.0
  %3133 = vmatpush.msra.mxu0 0.0
  %3134 = vmatpush.msra.mxu0 0.0
  %3135 = vmatpush.msra.mxu0 %v3123
  %3136 = vmatpush.msra.mxu0 %v3122
  %3137 = vmatpush.msra.mxu0 %v3121
  %3138 = vmatpush.msra.mxu0 %v3120
  %3139 = vmatpush.msra.mxu0 %v3119
  %3140 = vmatpush.msra.mxu0 %v3118
  %3141 = vmatpush.msra.mxu0 %v3117
  %3142 = vmatpush.msra.mxu0 %v3116
  %3143 = vmatmul.f32.gmra.mxu0 %v3125
  %v3144 = vpop.f32.mrf.mxu0
  %v3145 = vadd.f32 0.0, %v3144
  %3146 = vdwg.mxu0
  %v3147 = vadd.f32 %v3088, %v3145
  %s3148 = scalar_lea.vmem %s8, 6
  %v3149 = vld [vmem:[%s3148] sm:$0x3]
  %v3151 = vsel %vm2974, %v3149, 0
  %3153 = vmatpush.msra.mxu0 0.0
  %3154 = vmatpush.msra.mxu0 0.0
  %3155 = vmatpush.msra.mxu0 0.0
  %3156 = vmatpush.msra.mxu0 0.0
  %3157 = vmatpush.msra.mxu0 0.0
  %3158 = vmatpush.msra.mxu0 0.0
  %3159 = vmatpush.msra.mxu0 0.0
  %3160 = vmatpush.msra.mxu0 0.0
  %3161 = vmatpush.msra.mxu0 0.0
  %3162 = vmatpush.msra.mxu0 0.0
  %3163 = vmatpush.msra.mxu0 0.0
  %3164 = vmatpush.msra.mxu0 0.0
  %3165 = vmatpush.msra.mxu0 0.0
  %3166 = vmatpush.msra.mxu0 %v2979
  %3167 = vmatpush.msra.mxu0 %v2971
  %3168 = vmatpush.msra.mxu0 %v2970
  %3169 = vmatmul.f32.gmra.mxu0 %v3151
  %v3170 = vpop.f32.mrf.mxu0
  %v3171 = vadd.f32 0.0, %v3170
  %3172 = vdwg.mxu0
  %s3173 = scalar_lea.vmem %s9, 192
  %v3174 = vld [vmem:[%s3173] sm:$0xff]
  %v3175 = vld [vmem:[%s3173 + $0x8] sm:$0xff]
  %v3176 = vld [vmem:[%s3173 + $0x10] sm:$0xff]
  %v3177 = vld [vmem:[%s3173 + $0x18] sm:$0xff]
  %v3178 = vld [vmem:[%s3173 + $0x20] sm:$0xff]
  %v3179 = vld [vmem:[%s3173 + $0x28] sm:$0xff]
  %v3180 = vld [vmem:[%s3173 + $0x30] sm:$0xff]
  %v3181 = vld [vmem:[%s3173 + $0x38] sm:$0xff]
  %v3183 = vsel %vm3043, %v3171, 0
  %3185 = vmatpush.msra.mxu0 0.0
  %3186 = vmatpush.msra.mxu0 0.0
  %3187 = vmatpush.msra.mxu0 0.0
  %3188 = vmatpush.msra.mxu0 0.0
  %3189 = vmatpush.msra.mxu0 0.0
  %3190 = vmatpush.msra.mxu0 0.0
  %3191 = vmatpush.msra.mxu0 0.0
  %3192 = vmatpush.msra.mxu0 0.0
  %3193 = vmatpush.msra.mxu0 %v3181
  %3194 = vmatpush.msra.mxu0 %v3180
  %3195 = vmatpush.msra.mxu0 %v3179
  %3196 = vmatpush.msra.mxu0 %v3178
  %3197 = vmatpush.msra.mxu0 %v3177
  %3198 = vmatpush.msra.mxu0 %v3176
  %3199 = vmatpush.msra.mxu0 %v3175
  %3200 = vmatpush.msra.mxu0 %v3174
  %3201 = vmatmul.f32.gmra.mxu0 %v3183
  %v3202 = vpop.f32.mrf.mxu0
  %v3203 = vadd.f32 0.0, %v3202
  %3204 = vdwg.mxu0
  %v3205 = vadd.f32 %v3147, %v3203
  %s3206 = scalar_lea.vmem %s8, 8
  %v3207 = vld [vmem:[%s3206] sm:$0x3]
  %v3209 = vsel %vm2974, %v3207, 0
  %3211 = vmatpush.msra.mxu0 0.0
  %3212 = vmatpush.msra.mxu0 0.0
  %3213 = vmatpush.msra.mxu0 0.0
  %3214 = vmatpush.msra.mxu0 0.0
  %3215 = vmatpush.msra.mxu0 0.0
  %3216 = vmatpush.msra.mxu0 0.0
  %3217 = vmatpush.msra.mxu0 0.0
  %3218 = vmatpush.msra.mxu0 0.0
  %3219 = vmatpush.msra.mxu0 0.0
  %3220 = vmatpush.msra.mxu0 0.0
  %3221 = vmatpush.msra.mxu0 0.0
  %3222 = vmatpush.msra.mxu0 0.0
  %3223 = vmatpush.msra.mxu0 0.0
  %3224 = vmatpush.msra.mxu0 %v2979
  %3225 = vmatpush.msra.mxu0 %v2971
  %3226 = vmatpush.msra.mxu0 %v2970
  %3227 = vmatmul.f32.gmra.mxu0 %v3209
  %v3228 = vpop.f32.mrf.mxu0
  %v3229 = vadd.f32 0.0, %v3228
  %3230 = vdwg.mxu0
  %s3231 = scalar_lea.vmem %s9, 256
  %v3232 = vld [vmem:[%s3231] sm:$0xff]
  %v3233 = vld [vmem:[%s3231 + $0x8] sm:$0xff]
  %v3234 = vld [vmem:[%s3231 + $0x10] sm:$0xff]
  %v3235 = vld [vmem:[%s3231 + $0x18] sm:$0xff]
  %v3236 = vld [vmem:[%s3231 + $0x20] sm:$0xff]
  %v3237 = vld [vmem:[%s3231 + $0x28] sm:$0xff]
  %v3238 = vld [vmem:[%s3231 + $0x30] sm:$0xff]
  %v3239 = vld [vmem:[%s3231 + $0x38] sm:$0xff]
  %v3241 = vsel %vm3043, %v3229, 0
  %3243 = vmatpush.msra.mxu0 0.0
  %3244 = vmatpush.msra.mxu0 0.0
  %3245 = vmatpush.msra.mxu0 0.0
  %3246 = vmatpush.msra.mxu0 0.0
  %3247 = vmatpush.msra.mxu0 0.0
  %3248 = vmatpush.msra.mxu0 0.0
  %3249 = vmatpush.msra.mxu0 0.0
  %3250 = vmatpush.msra.mxu0 0.0
  %3251 = vmatpush.msra.mxu0 %v3239
  %3252 = vmatpush.msra.mxu0 %v3238
  %3253 = vmatpush.msra.mxu0 %v3237
  %3254 = vmatpush.msra.mxu0 %v3236
  %3255 = vmatpush.msra.mxu0 %v3235
  %3256 = vmatpush.msra.mxu0 %v3234
  %3257 = vmatpush.msra.mxu0 %v3233
  %3258 = vmatpush.msra.mxu0 %v3232
  %3259 = vmatmul.f32.gmra.mxu0 %v3241
  %v3260 = vpop.f32.mrf.mxu0
  %v3261 = vadd.f32 0.0, %v3260
  %3262 = vdwg.mxu0
  %v3263 = vadd.f32 %v3205, %v3261
  %s3264 = scalar_lea.vmem %s8, 10
  %v3265 = vld [vmem:[%s3264] sm:$0x3]
  %v3267 = vsel %vm2974, %v3265, 0
  %3269 = vmatpush.msra.mxu0 0.0
  %3270 = vmatpush.msra.mxu0 0.0
  %3271 = vmatpush.msra.mxu0 0.0
  %3272 = vmatpush.msra.mxu0 0.0
  %3273 = vmatpush.msra.mxu0 0.0
  %3274 = vmatpush.msra.mxu0 0.0
  %3275 = vmatpush.msra.mxu0 0.0
  %3276 = vmatpush.msra.mxu0 0.0
  %3277 = vmatpush.msra.mxu0 0.0
  %3278 = vmatpush.msra.mxu0 0.0
  %3279 = vmatpush.msra.mxu0 0.0
  %3280 = vmatpush.msra.mxu0 0.0
  %3281 = vmatpush.msra.mxu0 0.0
  %3282 = vmatpush.msra.mxu0 %v2979
  %3283 = vmatpush.msra.mxu0 %v2971
  %3284 = vmatpush.msra.mxu0 %v2970
  %3285 = vmatmul.f32.gmra.mxu0 %v3267
  %v3286 = vpop.f32.mrf.mxu0
  %v3287 = vadd.f32 0.0, %v3286
  %3288 = vdwg.mxu0
  %s3289 = scalar_lea.vmem %s9, 320
  %v3290 = vld [vmem:[%s3289] sm:$0xff]
  %v3291 = vld [vmem:[%s3289 + $0x8] sm:$0xff]
  %v3292 = vld [vmem:[%s3289 + $0x10] sm:$0xff]
  %v3293 = vld [vmem:[%s3289 + $0x18] sm:$0xff]
  %v3294 = vld [vmem:[%s3289 + $0x20] sm:$0xff]
  %v3295 = vld [vmem:[%s3289 + $0x28] sm:$0xff]
  %v3296 = vld [vmem:[%s3289 + $0x30] sm:$0xff]
  %v3297 = vld [vmem:[%s3289 + $0x38] sm:$0xff]
  %v3299 = vsel %vm3043, %v3287, 0
  %3301 = vmatpush.msra.mxu0 0.0
  %3302 = vmatpush.msra.mxu0 0.0
  %3303 = vmatpush.msra.mxu0 0.0
  %3304 = vmatpush.msra.mxu0 0.0
  %3305 = vmatpush.msra.mxu0 0.0
  %3306 = vmatpush.msra.mxu0 0.0
  %3307 = vmatpush.msra.mxu0 0.0
  %3308 = vmatpush.msra.mxu0 0.0
  %3309 = vmatpush.msra.mxu0 %v3297
  %3310 = vmatpush.msra.mxu0 %v3296
  %3311 = vmatpush.msra.mxu0 %v3295
  %3312 = vmatpush.msra.mxu0 %v3294
  %3313 = vmatpush.msra.mxu0 %v3293
  %3314 = vmatpush.msra.mxu0 %v3292
  %3315 = vmatpush.msra.mxu0 %v3291
  %3316 = vmatpush.msra.mxu0 %v3290
  %3317 = vmatmul.f32.gmra.mxu0 %v3299
  %v3318 = vpop.f32.mrf.mxu0
  %v3319 = vadd.f32 0.0, %v3318
  %3320 = vdwg.mxu0
  %v3321 = vadd.f32 %v3263, %v3319
  %s3322 = scalar_lea.vmem %s8, 12
  %v3323 = vld [vmem:[%s3322] sm:$0x3]
  %v3325 = vsel %vm2974, %v3323, 0
  %3327 = vmatpush.msra.mxu0 0.0
  %3328 = vmatpush.msra.mxu0 0.0
  %3329 = vmatpush.msra.mxu0 0.0
  %3330 = vmatpush.msra.mxu0 0.0
  %3331 = vmatpush.msra.mxu0 0.0
  %3332 = vmatpush.msra.mxu0 0.0
  %3333 = vmatpush.msra.mxu0 0.0
  %3334 = vmatpush.msra.mxu0 0.0
  %3335 = vmatpush.msra.mxu0 0.0
  %3336 = vmatpush.msra.mxu0 0.0
  %3337 = vmatpush.msra.mxu0 0.0
  %3338 = vmatpush.msra.mxu0 0.0
  %3339 = vmatpush.msra.mxu0 0.0
  %3340 = vmatpush.msra.mxu0 %v2979
  %3341 = vmatpush.msra.mxu0 %v2971
  %3342 = vmatpush.msra.mxu0 %v2970
  %3343 = vmatmul.f32.gmra.mxu0 %v3325
  %v3344 = vpop.f32.mrf.mxu0
  %v3345 = vadd.f32 0.0, %v3344
  %3346 = vdwg.mxu0
  %s3347 = scalar_lea.vmem %s9, 384
  %v3348 = vld [vmem:[%s3347] sm:$0xff]
  %v3349 = vld [vmem:[%s3347 + $0x8] sm:$0xff]
  %v3350 = vld [vmem:[%s3347 + $0x10] sm:$0xff]
  %v3351 = vld [vmem:[%s3347 + $0x18] sm:$0xff]
  %v3352 = vld [vmem:[%s3347 + $0x20] sm:$0xff]
  %v3353 = vld [vmem:[%s3347 + $0x28] sm:$0xff]
  %v3354 = vld [vmem:[%s3347 + $0x30] sm:$0xff]
  %v3355 = vld [vmem:[%s3347 + $0x38] sm:$0xff]
  %v3357 = vsel %vm3043, %v3345, 0
  %3359 = vmatpush.msra.mxu0 0.0
  %3360 = vmatpush.msra.mxu0 0.0
  %3361 = vmatpush.msra.mxu0 0.0
  %3362 = vmatpush.msra.mxu0 0.0
  %3363 = vmatpush.msra.mxu0 0.0
  %3364 = vmatpush.msra.mxu0 0.0
  %3365 = vmatpush.msra.mxu0 0.0
  %3366 = vmatpush.msra.mxu0 0.0
  %3367 = vmatpush.msra.mxu0 %v3355
  %3368 = vmatpush.msra.mxu0 %v3354
  %3369 = vmatpush.msra.mxu0 %v3353
  %3370 = vmatpush.msra.mxu0 %v3352
  %3371 = vmatpush.msra.mxu0 %v3351
  %3372 = vmatpush.msra.mxu0 %v3350
  %3373 = vmatpush.msra.mxu0 %v3349
  %3374 = vmatpush.msra.mxu0 %v3348
  %3375 = vmatmul.f32.gmra.mxu0 %v3357
  %v3376 = vpop.f32.mrf.mxu0
  %v3377 = vadd.f32 0.0, %v3376
  %3378 = vdwg.mxu0
  %v3379 = vadd.f32 %v3321, %v3377
  %s3380 = scalar_lea.vmem %s8, 14
  %v3381 = vld [vmem:[%s3380] sm:$0x3]
  %v3383 = vsel %vm2974, %v3381, 0
  %3385 = vmatpush.msra.mxu0 0.0
  %3386 = vmatpush.msra.mxu0 0.0
  %3387 = vmatpush.msra.mxu0 0.0
  %3388 = vmatpush.msra.mxu0 0.0
  %3389 = vmatpush.msra.mxu0 0.0
  %3390 = vmatpush.msra.mxu0 0.0
  %3391 = vmatpush.msra.mxu0 0.0
  %3392 = vmatpush.msra.mxu0 0.0
  %3393 = vmatpush.msra.mxu0 0.0
  %3394 = vmatpush.msra.mxu0 0.0
  %3395 = vmatpush.msra.mxu0 0.0
  %3396 = vmatpush.msra.mxu0 0.0
  %3397 = vmatpush.msra.mxu0 0.0
  %3398 = vmatpush.msra.mxu0 %v2979
  %3399 = vmatpush.msra.mxu0 %v2971
  %3400 = vmatpush.msra.mxu0 %v2970
  %3401 = vmatmul.f32.gmra.mxu0 %v3383
  %v3402 = vpop.f32.mrf.mxu0
  %v3403 = vadd.f32 0.0, %v3402
  %3404 = vdwg.mxu0
  %s3405 = scalar_lea.vmem %s9, 448
  %v3406 = vld [vmem:[%s3405] sm:$0xff]
  %v3407 = vld [vmem:[%s3405 + $0x8] sm:$0xff]
  %v3408 = vld [vmem:[%s3405 + $0x10] sm:$0xff]
  %v3409 = vld [vmem:[%s3405 + $0x18] sm:$0xff]
  %v3410 = vld [vmem:[%s3405 + $0x20] sm:$0xff]
  %v3411 = vld [vmem:[%s3405 + $0x28] sm:$0xff]
  %v3412 = vld [vmem:[%s3405 + $0x30] sm:$0xff]
  %v3413 = vld [vmem:[%s3405 + $0x38] sm:$0xff]
  %v3415 = vsel %vm3043, %v3403, 0
  %3417 = vmatpush.msra.mxu0 0.0
  %3418 = vmatpush.msra.mxu0 0.0
  %3419 = vmatpush.msra.mxu0 0.0
  %3420 = vmatpush.msra.mxu0 0.0
  %3421 = vmatpush.msra.mxu0 0.0
  %3422 = vmatpush.msra.mxu0 0.0
  %3423 = vmatpush.msra.mxu0 0.0
  %3424 = vmatpush.msra.mxu0 0.0
  %3425 = vmatpush.msra.mxu0 %v3413
  %3426 = vmatpush.msra.mxu0 %v3412
  %3427 = vmatpush.msra.mxu0 %v3411
  %3428 = vmatpush.msra.mxu0 %v3410
  %3429 = vmatpush.msra.mxu0 %v3409
  %3430 = vmatpush.msra.mxu0 %v3408
  %3431 = vmatpush.msra.mxu0 %v3407
  %3432 = vmatpush.msra.mxu0 %v3406
  %3433 = vmatmul.f32.gmra.mxu0 %v3415
  %v3434 = vpop.f32.mrf.mxu0
  %v3435 = vadd.f32 0.0, %v3434
  %3436 = vdwg.mxu0
  %v3437 = vadd.f32 %v3379, %v3435
  %s3438 = scalar_lea.vmem %s8, 16
  %v3439 = vld [vmem:[%s3438] sm:$0x3]
  %v3441 = vsel %vm2974, %v3439, 0
  %3443 = vmatpush.msra.mxu0 0.0
  %3444 = vmatpush.msra.mxu0 0.0
  %3445 = vmatpush.msra.mxu0 0.0
  %3446 = vmatpush.msra.mxu0 0.0
  %3447 = vmatpush.msra.mxu0 0.0
  %3448 = vmatpush.msra.mxu0 0.0
  %3449 = vmatpush.msra.mxu0 0.0
  %3450 = vmatpush.msra.mxu0 0.0
  %3451 = vmatpush.msra.mxu0 0.0
  %3452 = vmatpush.msra.mxu0 0.0
  %3453 = vmatpush.msra.mxu0 0.0
  %3454 = vmatpush.msra.mxu0 0.0
  %3455 = vmatpush.msra.mxu0 0.0
  %3456 = vmatpush.msra.mxu0 %v2979
  %3457 = vmatpush.msra.mxu0 %v2971
  %3458 = vmatpush.msra.mxu0 %v2970
  %3459 = vmatmul.f32.gmra.mxu0 %v3441
  %v3460 = vpop.f32.mrf.mxu0
  %v3461 = vadd.f32 0.0, %v3460
  %3462 = vdwg.mxu0
  %s3463 = scalar_lea.vmem %s9, 512
  %v3464 = vld [vmem:[%s3463] sm:$0xff]
  %v3465 = vld [vmem:[%s3463 + $0x8] sm:$0xff]
  %v3466 = vld [vmem:[%s3463 + $0x10] sm:$0xff]
  %v3467 = vld [vmem:[%s3463 + $0x18] sm:$0xff]
  %v3468 = vld [vmem:[%s3463 + $0x20] sm:$0xff]
  %v3469 = vld [vmem:[%s3463 + $0x28] sm:$0xff]
  %v3470 = vld [vmem:[%s3463 + $0x30] sm:$0xff]
  %v3471 = vld [vmem:[%s3463 + $0x38] sm:$0xff]
  %v3473 = vsel %vm3043, %v3461, 0
  %3475 = vmatpush.msra.mxu0 0.0
  %3476 = vmatpush.msra.mxu0 0.0
  %3477 = vmatpush.msra.mxu0 0.0
  %3478 = vmatpush.msra.mxu0 0.0
  %3479 = vmatpush.msra.mxu0 0.0
  %3480 = vmatpush.msra.mxu0 0.0
  %3481 = vmatpush.msra.mxu0 0.0
  %3482 = vmatpush.msra.mxu0 0.0
  %3483 = vmatpush.msra.mxu0 %v3471
  %3484 = vmatpush.msra.mxu0 %v3470
  %3485 = vmatpush.msra.mxu0 %v3469
  %3486 = vmatpush.msra.mxu0 %v3468
  %3487 = vmatpush.msra.mxu0 %v3467
  %3488 = vmatpush.msra.mxu0 %v3466
  %3489 = vmatpush.msra.mxu0 %v3465
  %3490 = vmatpush.msra.mxu0 %v3464
  %3491 = vmatmul.f32.gmra.mxu0 %v3473
  %v3492 = vpop.f32.mrf.mxu0
  %v3493 = vadd.f32 0.0, %v3492
  %3494 = vdwg.mxu0
  %v3495 = vadd.f32 %v3437, %v3493
  %v3496 = vld [vmem:[%s10] sm:$0x1]
  %v3498 = vperm.slane %v3496, 0
  %v3500 = vadd.f32 %v3495, %v3498
  %v3501 = vld [vmem:[%s1] sm:$0x3]
  %v3502 = vld [vmem:[%s13] sm:$0xf]
  %v3503 = vld [vmem:[%s12] sm:$0xff]
  %v3504 = vld [vmem:[%s12 + $0x8] sm:$0xff]
  %v3505 = vld [vmem:[%s12 + $0x10] sm:$0xff]
  %v3506 = vld [vmem:[%s12 + $0x18] sm:$0xff]
  %v3507 = vld [vmem:[%s12 + $0x20] sm:$0xff]
  %v3508 = vld [vmem:[%s12 + $0x28] sm:$0xff]
  %v3509 = vld [vmem:[%s12 + $0x30] sm:$0xff]
  %v3510 = vld [vmem:[%s12 + $0x38] sm:$0xff]
  %v3512 = vsel %vm3043, %v3500, 0
  %3514 = vmatpush.msra.mxu0 0.0
  %3515 = vmatpush.msra.mxu0 0.0
  %3516 = vmatpush.msra.mxu0 0.0
  %3517 = vmatpush.msra.mxu0 0.0
  %3518 = vmatpush.msra.mxu0 0.0
  %3519 = vmatpush.msra.mxu0 0.0
  %3520 = vmatpush.msra.mxu0 0.0
  %3521 = vmatpush.msra.mxu0 0.0
  %3522 = vmatpush.msra.mxu0 %v3510
  %3523 = vmatpush.msra.mxu0 %v3509
  %3524 = vmatpush.msra.mxu0 %v3508
  %3525 = vmatpush.msra.mxu0 %v3507
  %3526 = vmatpush.msra.mxu0 %v3506
  %3527 = vmatpush.msra.mxu0 %v3505
  %3528 = vmatpush.msra.mxu0 %v3504
  %3529 = vmatpush.msra.mxu0 %v3503
  %3530 = vmatmul.f32.gmra.mxu0 %v3512
  %v3531 = vpop.f32.mrf.mxu0
  %v3532 = vadd.f32 0.0, %v3531
  %3533 = vdwg.mxu0
  %vm3534 = vcmask 31744
  %v3536 = vsel %vm3534, %v3501, 0
  %vm3538 = vcmask 1043456
  %v3540 = vsel %vm3538, %v3502, 0
  %3542 = vmatpush.msra.mxu0 0.0
  %3543 = vmatpush.msra.mxu0 0.0
  %3544 = vmatpush.msra.mxu0 0.0
  %3545 = vmatpush.msra.mxu0 0.0
  %3546 = vmatpush.msra.mxu0 0.0
  %3547 = vmatpush.msra.mxu0 0.0
  %3548 = vmatpush.msra.mxu0 0.0
  %3549 = vmatpush.msra.mxu0 0.0
  %3550 = vmatpush.msra.mxu0 0.0
  %3551 = vmatpush.msra.mxu0 0.0
  %3552 = vmatpush.msra.mxu0 0.0
  %3553 = vmatpush.msra.mxu0 0.0
  %3554 = vmatpush.msra.mxu0 0.0
  %3555 = vmatpush.msra.mxu0 0.0
  %3556 = vmatpush.msra.mxu0 0.0
  %3557 = vmatpush.msra.mxu0 %v3540
  %3558 = vmatmul.f32.gmra.mxu0 %v3536
  %v3559 = vpop.f32.mrf.mxu0
  %v3560 = vadd.f32 %v3532, %v3559
  %3561 = vdwg.mxu0
  %v3562 = vld [vmem:[%s14] sm:$0x1]
  %v3564 = vperm.slane %v3562, 0
  %v3566 = vadd.f32 %v3560, %v3564
  %v3567 = vmax.f32 %v3566, 0.0
  %v3568 = vld [vmem:[%s15] sm:$0xff]
  %v3569 = vld [vmem:[%s15 + $0x8] sm:$0xff]
  %v3570 = vld [vmem:[%s15 + $0x10] sm:$0xff]
  %v3571 = vld [vmem:[%s15 + $0x18] sm:$0xff]
  %v3572 = vld [vmem:[%s16] sm:$0x1]
  %v3574 = vperm.slane %v3572, 0
  %v3577 = vsel %vm1870, %v3567, 0
  %3579 = vmatpush.msra.mxu0 0.0
  %3580 = vmatpush.msra.mxu0 0.0
  %3581 = vmatpush.msra.mxu0 0.0
  %3582 = vmatpush.msra.mxu0 0.0
  %3583 = vmatpush.msra.mxu0 0.0
  %3584 = vmatpush.msra.mxu0 0.0
  %3585 = vmatpush.msra.mxu0 0.0
  %3586 = vmatpush.msra.mxu0 0.0
  %3587 = vmatpush.msra.mxu0 0.0
  %3588 = vmatpush.msra.mxu0 0.0
  %3589 = vmatpush.msra.mxu0 0.0
  %3590 = vmatpush.msra.mxu0 0.0
  %3591 = vmatpush.msra.mxu0 %v3571
  %3592 = vmatpush.msra.mxu0 %v3570
  %3593 = vmatpush.msra.mxu0 %v3569
  %3594 = vmatpush.msra.mxu0 %v3568
  %3595 = vmatmul.f32.gmra.mxu0 %v3577
  %v3596 = vpop.f32.mrf.mxu0
  %v3597 = vadd.f32 %v3574, %v3596
  %3598 = vdwg.mxu0
  %v3599 = vmax.f32 %v3597, 0.0
  %v3600 = vld [vmem:[%s17] sm:$0xff]
  %v3601 = vld [vmem:[%s17 + $0x8] sm:$0xff]
  %v3602 = vld [vmem:[%s17 + $0x10] sm:$0xff]
  %v3603 = vld [vmem:[%s17 + $0x18] sm:$0xff]
  %v3604 = vld [vmem:[#allocation2] sm:$0x1]
  %v3606 = vperm.slane %v3604, 0
  %v3609 = vsel %vm1870, %v3599, 0
  %3611 = vmatpush.msra.mxu0 0.0
  %3612 = vmatpush.msra.mxu0 0.0
  %3613 = vmatpush.msra.mxu0 0.0
  %3614 = vmatpush.msra.mxu0 0.0
  %3615 = vmatpush.msra.mxu0 0.0
  %3616 = vmatpush.msra.mxu0 0.0
  %3617 = vmatpush.msra.mxu0 0.0
  %3618 = vmatpush.msra.mxu0 0.0
  %3619 = vmatpush.msra.mxu0 0.0
  %3620 = vmatpush.msra.mxu0 0.0
  %3621 = vmatpush.msra.mxu0 0.0
  %3622 = vmatpush.msra.mxu0 0.0
  %3623 = vmatpush.msra.mxu0 %v3603
  %3624 = vmatpush.msra.mxu0 %v3602
  %3625 = vmatpush.msra.mxu0 %v3601
  %3626 = vmatpush.msra.mxu0 %v3600
  %3627 = vmatmul.f32.gmra.mxu0 %v3609
  %v3628 = vpop.f32.mrf.mxu0
  %v3629 = vadd.f32 %v3606, %v3628
  %3630 = vdwg.mxu0
  %vm3631 = vcmask 1024
  %3632 = vst.msk [vmem:[%s19] sm:$0x3] %vm3631, %v3629
  // Predicated region
  $region78: #{critic_forward.1} parent=0 // pred_check
    _
  $region79: #{critic_forward.1} parent=0 // pred_check_branch
    %3634 = sbr.rel (0) target = $region81
  $region80: #{critic_forward.1} parent=0 // pred_region
    _
  $region81: #{critic_forward.1} parent=0 // pred_fallthru
    _
  // Predicated region
  $region82: #{critic_forward.1} parent=0 // pred_check
    _
  $region83: #{critic_forward.1} parent=0 // pred_check_branch
    %3636 = sbr.rel (0) target = $region85
  $region84: #{critic_forward.1} parent=0 // pred_region
    _
  $region85: #{critic_forward.1} parent=0 // pred_fallthru
    _

</llo_original>
